<compile_context>
chip_gen: v7x
topology: tpu7x:2x2x1
jax: 0.10.0
libtpu: 0.0.40
codegen_flags: <defaults>
</compile_context>

<pallas_src>
import jax
import jax.numpy as jnp
import numpy as np
from jax.experimental import pallas as pl
from jax.experimental.pallas import tpu as pltpu


# ---------------- fused Pallas kernel ----------------

def _zero_halo_ring(pad_ref, h, w):
    """Zero only the 1-pixel border of a (h+2, w+2, c) padded slab."""
    c = pad_ref.shape[-1]
    z_row = jnp.zeros((1, w + 2, c), pad_ref.dtype)
    z_col = jnp.zeros((h + 2, 1, c), pad_ref.dtype)
    pad_ref[pl.ds(0, 1), pl.ds(0, w + 2), :] = z_row
    pad_ref[pl.ds(h + 1, 1), pl.ds(0, w + 2), :] = z_row
    pad_ref[pl.ds(0, h + 2), pl.ds(0, 1), :] = z_col
    pad_ref[pl.ds(0, h + 2), pl.ds(w + 1, 1), :] = z_col


def _im2col_3x3(pad_ref, h, w):
    """Pack the 9 shifted 3x3 taps of a zero-padded (h+2, w+2, c) slab along
    the contraction dim -> (h*w, 9*c)."""
    c = pad_ref.shape[-1]
    taps = [pad_ref[pl.ds(ky, h), pl.ds(kx, w), :]
            for ky in range(3) for kx in range(3)]
    return jnp.concatenate(taps, axis=-1).reshape(h * w, 9 * c)


def _preact_block_kernel(x_ref, w1_ref, w2_ref, s1_ref, t1_ref, t2_ref,
                         o_ref, a_pad, b_pad):
    """One batch image per grid step: bn1+relu -> conv1(+bn2 scale) -> +bias,
    relu -> conv2 -> +residual.  Everything between the single x load and the
    single y store lives in VMEM."""
    H, W, C = x_ref.shape
    P = o_ref.shape[-1]

    # Zero only the 1-pixel ring (interior fully overwritten below).  Done
    # every step so the kernel stays correct when the parallel grid axis is
    # split across TensorCores.
    _zero_halo_ring(a_pad, H, W)
    _zero_halo_ring(b_pad, H, W)

    # Pre-activation: folded bn1 + relu (f32 math), then bf16 for the MXU.
    a = jnp.maximum(x_ref[...].astype(jnp.float32) * s1_ref[...] + t1_ref[...],
                    0.0)
    a_pad[pl.ds(1, H), pl.ds(1, W), :] = a.astype(a_pad.dtype)

    # conv1 (bn2 scale already folded into w1) as ONE (HW, 9C) x (9C, P)
    # matmul, accumulated in f32.
    acc1 = jnp.dot(_im2col_3x3(a_pad, H, W), w1_ref[...],
                   preferred_element_type=jnp.float32)

    # bn2 bias + relu; intermediate stays in VMEM (never written to HBM).
    b = jnp.maximum(acc1 + t2_ref[...], 0.0)
    b_pad[pl.ds(1, H), pl.ds(1, W), :] = b.reshape(H, W, P).astype(b_pad.dtype)

    # conv2 as ONE (HW, 9P) x (9P, P) matmul + residual add (no final ReLU).
    acc2 = jnp.dot(_im2col_3x3(b_pad, H, W), w2_ref[...],
                   preferred_element_type=jnp.float32)

    residual = x_ref[...].astype(jnp.float32).reshape(H * W, C)  # VMEM re-read
    o_ref[...] = (acc2 + residual).reshape(H, W, P).astype(o_ref.dtype)


# ---------------- wrapper (layout glue + parameter folding) ----------------

def preact_basic_block_forward(x_nchw, w1, g1, b1, m1, v1, w2, g2, b2, m2, v2,
                               eps=1e-5):
    """PreActBasicBlock forward, stride=1, downsample=None (inplanes == planes)."""
    N, C, H, W = x_nchw.shape
    P = w1.shape[0]
    assert w1.shape[1] == C and C == P, "downsample=None requires inplanes == planes"
    assert H % 8 == 0 and W % 8 == 0, "TODO(synk): pad spatial dims for general H/W"

    # bf16 HBM stream for x (cast fused into the layout transpose).
    x = jnp.transpose(x_nchw, (0, 2, 3, 1)).astype(jnp.bfloat16)     # NHWC bf16

    # Fold eval-mode BN into per-channel scale/bias (f32).
    s1 = (g1 / jnp.sqrt(v1 + eps)).reshape(1, C).astype(jnp.float32)
    t1 = (b1 - m1 * g1 / jnp.sqrt(v1 + eps)).reshape(1, C).astype(jnp.float32)
    s2 = g2 / jnp.sqrt(v2 + eps)
    t2 = (b2 - m2 * s2).reshape(1, P).astype(jnp.float32)

    # Fold bn2's scale into conv1's weights (per output channel), then lay the
    # weights out as (9*Cin, Cout) im2col matrices in bf16.  Row order is
    # (ky, kx, cin) with cin fastest — matches the in-kernel tap packing.
    w1f = w1 * s2[:, None, None, None]                               # (P, C, 3, 3)
    w1m = jnp.transpose(w1f, (2, 3, 1, 0)).reshape(9 * C, P).astype(jnp.bfloat16)
    w2m = jnp.transpose(w2, (2, 3, 1, 0)).reshape(9 * P, P).astype(jnp.bfloat16)

    # Per-step VMEM footprint -> explicit scoped-VMEM limit (32 MiB floor).
    def _vmem_budget_bytes():
        bf = 2
        x_blk = H * W * C * bf
        o_blk = H * W * P * bf
        w_bytes = (9 * C * P + 9 * P * P) * bf
        slabs = (H + 2) * (W + 2) * (C + P) * bf
        im2col = H * W * 9 * (C + P) * bf
        accs = 2 * H * W * P * 4
        # x / out / weight blocks are double-buffered by the pipeline.
        return 2 * (x_blk + o_blk + w_bytes) + slabs + im2col + accs

    vmem_limit = int(min(max(1.25 * _vmem_budget_bytes() + (4 << 20), 32 << 20),
                         64 << 20))

    out = pl.pallas_call(
        _preact_block_kernel,
        out_shape=jax.ShapeDtypeStruct((N, H, W, P), jnp.bfloat16),
        grid=(N,),
        in_specs=[
            pl.BlockSpec((None, H, W, C), lambda n: (n, 0, 0, 0)),   # x (bf16, read once/step)
            pl.BlockSpec((9 * C, P), lambda n: (0, 0)),              # conv1 weights (im2col layout)
            pl.BlockSpec((9 * P, P), lambda n: (0, 0)),              # conv2 weights (im2col layout)
            pl.BlockSpec((1, C), lambda n: (0, 0)),                  # bn1 scale
            pl.BlockSpec((1, C), lambda n: (0, 0)),                  # bn1 bias
            pl.BlockSpec((1, P), lambda n: (0, 0)),                  # bn2 bias (scale folded)
        ],
        out_specs=pl.BlockSpec((None, H, W, P), lambda n: (n, 0, 0, 0)),
        scratch_shapes=[
            pltpu.VMEM((H + 2, W + 2, C), jnp.bfloat16),             # zero-padded relu(bn1(x))
            pltpu.VMEM((H + 2, W + 2, P), jnp.bfloat16),             # zero-padded relu(bn2(conv1))
        ],
        compiler_params=pltpu.CompilerParams(
            dimension_semantics=("parallel",),
            vmem_limit_bytes=vmem_limit),
    )(x, w1m, w2m, s1, t1, t2)

    # Back to the module's NCHW/f32 interface (cast fused into the transpose).
    return jnp.transpose(out, (0, 3, 1, 2)).astype(jnp.float32)


# ---------------- pure-JAX f32 reference (module-faithful) ----------------

def ref_forward(x, w1, g1, b1, m1, v1, w2, g2, b2, m2, v2, eps=1e-5):
    dn = jax.lax.conv_dimension_numbers(x.shape, w1.shape, ("NCHW", "OIHW", "NCHW"))

    def bn(o, g, b, m, v):
        return (g[None, :, None, None] * (o - m[None, :, None, None])
                / jnp.sqrt(v + eps)[None, :, None, None] + b[None, :, None, None])

    out = jnp.maximum(bn(x, g1, b1, m1, v1), 0.0)
    out = jax.lax.conv_general_dilated(out, w1, (1, 1), ((1, 1), (1, 1)),
                                       dimension_numbers=dn)
    out = jnp.maximum(bn(out, g2, b2, m2, v2), 0.0)
    out = jax.lax.conv_general_dilated(out, w2, (1, 1), ((1, 1), (1, 1)),
                                       dimension_numbers=dn)
    return out + x          # pre-activation block: residual add, no final ReLU


if __name__ == "__main__":
    N, C, H, W = 2, 4, 16, 16          # inplanes = planes = 4, stride = 1
    planes = C
    key = jax.random.PRNGKey(0)
    ks = jax.random.split(key, 11)

    x = jax.random.normal(ks[0], (N, C, H, W), jnp.float32)

    w1 = jax.random.normal(ks[1], (planes, C, 3, 3), jnp.float32) / np.sqrt(9 * C)
    w2 = jax.random.normal(ks[2], (planes, planes, 3, 3), jnp.float32) / np.sqrt(9 * planes)

    g1 = 1.0 + 0.1 * jax.random.normal(ks[3], (C,), jnp.float32)
    b1 = 0.1 * jax.random.normal(ks[4], (C,), jnp.float32)
    m1 = 0.1 * jax.random.normal(ks[5], (C,), jnp.float32)
    v1 = jnp.abs(1.0 + 0.1 * jax.random.normal(ks[6], (C,), jnp.float32))
    g2 = 1.0 + 0.1 * jax.random.normal(ks[7], (planes,), jnp.float32)
    b2 = 0.1 * jax.random.normal(ks[8], (planes,), jnp.float32)
    m2 = 0.1 * jax.random.normal(ks[9], (planes,), jnp.float32)
    v2 = jnp.abs(1.0 + 0.1 * jax.random.normal(ks[10], (planes,), jnp.float32))

    fwd = jax.jit(preact_basic_block_forward)
    out = fwd(x, w1, g1, b1, m1, v1, w2, g2, b2, m2, v2)
    out = jax.block_until_ready(out)

    ref = ref_forward(x, w1, g1, b1, m1, v1, w2, g2, b2, m2, v2)
    # Tolerance reflects bf16 activation/weight streams (f32 accumulation)
    # vs. an all-f32 reference.
    np.testing.assert_allclose(np.asarray(out), np.asarray(ref), rtol=5e-2, atol=5e-2)

    print("KERNEL_OK")
</pallas_src>

<mosaic_0001>
module attributes {stable_mosaic.version = 11 : i64} {
  func.func @_preact_block_kernel(%arg0: i32, %arg1: memref<1x16x16x4xbf16, #tpu.memory_space<vmem>>, %arg2: memref<36x4xbf16, #tpu.memory_space<vmem>>, %arg3: memref<36x4xbf16, #tpu.memory_space<vmem>>, %arg4: memref<1x4xf32, #tpu.memory_space<vmem>>, %arg5: memref<1x4xf32, #tpu.memory_space<vmem>>, %arg6: memref<1x4xf32, #tpu.memory_space<vmem>>, %arg7: memref<1x16x16x4xbf16, #tpu.memory_space<vmem>>, %arg8: memref<18x18x4xbf16, #tpu.memory_space<vmem>>, %arg9: memref<18x18x4xbf16, #tpu.memory_space<vmem>>) attributes {dimension_semantics = [#tpu.dimension_semantics<parallel>], iteration_bounds = array<i64: 2>, scalar_prefetch = 0 : i64, scratch_operands = 2 : i64, tpu.core_type = #tpu.core_type<tc>, window_params = [{transform_indices = @transform_0, window_bounds = array<i64: 1, 16, 16, 4>}, {pipeline_mode = #tpu.pipeline_mode<synchronous>, transform_indices = @transform_1, window_bounds = array<i64: 36, 4>}, {pipeline_mode = #tpu.pipeline_mode<synchronous>, transform_indices = @transform_2, window_bounds = array<i64: 36, 4>}, {pipeline_mode = #tpu.pipeline_mode<synchronous>, transform_indices = @transform_3, window_bounds = array<i64: 1, 4>}, {pipeline_mode = #tpu.pipeline_mode<synchronous>, transform_indices = @transform_4, window_bounds = array<i64: 1, 4>}, {pipeline_mode = #tpu.pipeline_mode<synchronous>, transform_indices = @transform_5, window_bounds = array<i64: 1, 4>}, {transform_indices = @transform_6, window_bounds = array<i64: 1, 16, 16, 4>}]} {
    %cst = arith.constant 0.000000e+00 : bf16
    %0 = vector.broadcast %cst : bf16 to vector<1x18x4xbf16>
    %cst_0 = arith.constant 0.000000e+00 : bf16
    %1 = vector.broadcast %cst_0 : bf16 to vector<18x1x4xbf16>
    %c0 = arith.constant 0 : index
    %c0_1 = arith.constant 0 : index
    %c0_2 = arith.constant 0 : index
    %2 = vector.load %arg8[%c0, %c0_1, %c0_2] : memref<18x18x4xbf16, #tpu.memory_space<vmem>>, vector<1x18x4xbf16>
    tpu.vector_store %arg8[%c0, %c0_1, %c0_2], %0 {strides = array<i32>} : memref<18x18x4xbf16, #tpu.memory_space<vmem>>, vector<1x18x4xbf16>,
    %c17 = arith.constant 17 : index
    %c0_3 = arith.constant 0 : index
    %c0_4 = arith.constant 0 : index
    %3 = vector.load %arg8[%c17, %c0_3, %c0_4] : memref<18x18x4xbf16, #tpu.memory_space<vmem>>, vector<1x18x4xbf16>
    tpu.vector_store %arg8[%c17, %c0_3, %c0_4], %0 {strides = array<i32>} : memref<18x18x4xbf16, #tpu.memory_space<vmem>>, vector<1x18x4xbf16>,
    %c0_5 = arith.constant 0 : index
    %c0_6 = arith.constant 0 : index
    %c0_7 = arith.constant 0 : index
    %4 = vector.load %arg8[%c0_5, %c0_6, %c0_7] : memref<18x18x4xbf16, #tpu.memory_space<vmem>>, vector<18x1x4xbf16>
    tpu.vector_store %arg8[%c0_5, %c0_6, %c0_7], %1 {strides = array<i32>} : memref<18x18x4xbf16, #tpu.memory_space<vmem>>, vector<18x1x4xbf16>,
    %c0_8 = arith.constant 0 : index
    %c17_9 = arith.constant 17 : index
    %c0_10 = arith.constant 0 : index
    %5 = vector.load %arg8[%c0_8, %c17_9, %c0_10] : memref<18x18x4xbf16, #tpu.memory_space<vmem>>, vector<18x1x4xbf16>
    tpu.vector_store %arg8[%c0_8, %c17_9, %c0_10], %1 {strides = array<i32>} : memref<18x18x4xbf16, #tpu.memory_space<vmem>>, vector<18x1x4xbf16>,
    %cst_11 = arith.constant 0.000000e+00 : bf16
    %6 = vector.broadcast %cst_11 : bf16 to vector<1x18x4xbf16>
    %cst_12 = arith.constant 0.000000e+00 : bf16
    %7 = vector.broadcast %cst_12 : bf16 to vector<18x1x4xbf16>
    %c0_13 = arith.constant 0 : index
    %c0_14 = arith.constant 0 : index
    %c0_15 = arith.constant 0 : index
    %8 = vector.load %arg9[%c0_13, %c0_14, %c0_15] : memref<18x18x4xbf16, #tpu.memory_space<vmem>>, vector<1x18x4xbf16>
    tpu.vector_store %arg9[%c0_13, %c0_14, %c0_15], %6 {strides = array<i32>} : memref<18x18x4xbf16, #tpu.memory_space<vmem>>, vector<1x18x4xbf16>,
    %c17_16 = arith.constant 17 : index
    %c0_17 = arith.constant 0 : index
    %c0_18 = arith.constant 0 : index
    %9 = vector.load %arg9[%c17_16, %c0_17, %c0_18] : memref<18x18x4xbf16, #tpu.memory_space<vmem>>, vector<1x18x4xbf16>
    tpu.vector_store %arg9[%c17_16, %c0_17, %c0_18], %6 {strides = array<i32>} : memref<18x18x4xbf16, #tpu.memory_space<vmem>>, vector<1x18x4xbf16>,
    %c0_19 = arith.constant 0 : index
    %c0_20 = arith.constant 0 : index
    %c0_21 = arith.constant 0 : index
    %10 = vector.load %arg9[%c0_19, %c0_20, %c0_21] : memref<18x18x4xbf16, #tpu.memory_space<vmem>>, vector<18x1x4xbf16>
    tpu.vector_store %arg9[%c0_19, %c0_20, %c0_21], %7 {strides = array<i32>} : memref<18x18x4xbf16, #tpu.memory_space<vmem>>, vector<18x1x4xbf16>,
    %c0_22 = arith.constant 0 : index
    %c17_23 = arith.constant 17 : index
    %c0_24 = arith.constant 0 : index
    %11 = vector.load %arg9[%c0_22, %c17_23, %c0_24] : memref<18x18x4xbf16, #tpu.memory_space<vmem>>, vector<18x1x4xbf16>
    tpu.vector_store %arg9[%c0_22, %c17_23, %c0_24], %7 {strides = array<i32>} : memref<18x18x4xbf16, #tpu.memory_space<vmem>>, vector<18x1x4xbf16>,
    %c0_25 = arith.constant 0 : index
    %c0_26 = arith.constant 0 : index
    %c0_27 = arith.constant 0 : index
    %c0_28 = arith.constant 0 : index
    %12 = vector.load %arg1[%c0_25, %c0_26, %c0_27, %c0_28] : memref<1x16x16x4xbf16, #tpu.memory_space<vmem>>, vector<1x16x16x4xbf16>
    %13 = vector.shape_cast %12 : vector<1x16x16x4xbf16> to vector<16x16x4xbf16>
    %14 = arith.extf %13 : vector<16x16x4xbf16> to vector<16x16x4xf32>
    %c0_29 = arith.constant 0 : index
    %c0_30 = arith.constant 0 : index
    %15 = vector.load %arg4[%c0_29, %c0_30] : memref<1x4xf32, #tpu.memory_space<vmem>>, vector<1x4xf32>
    %16 = vector.shape_cast %15 : vector<1x4xf32> to vector<1x1x4xf32>
    %17 = vector.broadcast %16 : vector<1x1x4xf32> to vector<16x16x4xf32>
    %18 = arith.mulf %14, %17 : vector<16x16x4xf32>
    %c0_31 = arith.constant 0 : index
    %c0_32 = arith.constant 0 : index
    %19 = vector.load %arg5[%c0_31, %c0_32] : memref<1x4xf32, #tpu.memory_space<vmem>>, vector<1x4xf32>
    %20 = vector.shape_cast %19 : vector<1x4xf32> to vector<1x1x4xf32>
    %21 = vector.broadcast %20 : vector<1x1x4xf32> to vector<16x16x4xf32>
    %22 = arith.addf %18, %21 : vector<16x16x4xf32>
    %cst_33 = arith.constant 0.000000e+00 : f32
    %23 = vector.broadcast %cst_33 : f32 to vector<16x16x4xf32>
    %24 = arith.maximumf %22, %23 : vector<16x16x4xf32>
    %25 = arith.truncf %24 : vector<16x16x4xf32> to vector<16x16x4xbf16>
    %c1 = arith.constant 1 : index
    %c1_34 = arith.constant 1 : index
    %c0_35 = arith.constant 0 : index
    %26 = vector.load %arg8[%c1, %c1_34, %c0_35] : memref<18x18x4xbf16, #tpu.memory_space<vmem>>, vector<16x16x4xbf16>
    tpu.vector_store %arg8[%c1, %c1_34, %c0_35], %25 {strides = array<i32>} : memref<18x18x4xbf16, #tpu.memory_space<vmem>>, vector<16x16x4xbf16>,
    %c0_36 = arith.constant 0 : index
    %c0_37 = arith.constant 0 : index
    %c0_38 = arith.constant 0 : index
    %27 = vector.load %arg8[%c0_36, %c0_37, %c0_38] : memref<18x18x4xbf16, #tpu.memory_space<vmem>>, vector<16x16x4xbf16>
    %c0_39 = arith.constant 0 : index
    %c1_40 = arith.constant 1 : index
    %c0_41 = arith.constant 0 : index
    %28 = vector.load %arg8[%c0_39, %c1_40, %c0_41] : memref<18x18x4xbf16, #tpu.memory_space<vmem>>, vector<16x16x4xbf16>
    %c0_42 = arith.constant 0 : index
    %c2 = arith.constant 2 : index
    %c0_43 = arith.constant 0 : index
    %29 = vector.load %arg8[%c0_42, %c2, %c0_43] : memref<18x18x4xbf16, #tpu.memory_space<vmem>>, vector<16x16x4xbf16>
    %c1_44 = arith.constant 1 : index
    %c0_45 = arith.constant 0 : index
    %c0_46 = arith.constant 0 : index
    %30 = vector.load %arg8[%c1_44, %c0_45, %c0_46] : memref<18x18x4xbf16, #tpu.memory_space<vmem>>, vector<16x16x4xbf16>
    %c1_47 = arith.constant 1 : index
    %c1_48 = arith.constant 1 : index
    %c0_49 = arith.constant 0 : index
    %31 = vector.load %arg8[%c1_47, %c1_48, %c0_49] : memref<18x18x4xbf16, #tpu.memory_space<vmem>>, vector<16x16x4xbf16>
    %c1_50 = arith.constant 1 : index
    %c2_51 = arith.constant 2 : index
    %c0_52 = arith.constant 0 : index
    %32 = vector.load %arg8[%c1_50, %c2_51, %c0_52] : memref<18x18x4xbf16, #tpu.memory_space<vmem>>, vector<16x16x4xbf16>
    %c2_53 = arith.constant 2 : index
    %c0_54 = arith.constant 0 : index
    %c0_55 = arith.constant 0 : index
    %33 = vector.load %arg8[%c2_53, %c0_54, %c0_55] : memref<18x18x4xbf16, #tpu.memory_space<vmem>>, vector<16x16x4xbf16>
    %c2_56 = arith.constant 2 : index
    %c1_57 = arith.constant 1 : index
    %c0_58 = arith.constant 0 : index
    %34 = vector.load %arg8[%c2_56, %c1_57, %c0_58] : memref<18x18x4xbf16, #tpu.memory_space<vmem>>, vector<16x16x4xbf16>
    %c2_59 = arith.constant 2 : index
    %c2_60 = arith.constant 2 : index
    %c0_61 = arith.constant 0 : index
    %35 = vector.load %arg8[%c2_59, %c2_60, %c0_61] : memref<18x18x4xbf16, #tpu.memory_space<vmem>>, vector<16x16x4xbf16>
    %36 = tpu.concatenate %27, %28, %29, %30, %31, %32, %33, %34, %35 in 2 : vector<16x16x4xbf16>, vector<16x16x4xbf16>, vector<16x16x4xbf16>, vector<16x16x4xbf16>, vector<16x16x4xbf16>, vector<16x16x4xbf16>, vector<16x16x4xbf16>, vector<16x16x4xbf16>, vector<16x16x4xbf16> -> vector<16x16x36xbf16>
    %37 = vector.shape_cast %36 : vector<16x16x36xbf16> to vector<256x36xbf16>
    %c0_62 = arith.constant 0 : index
    %c0_63 = arith.constant 0 : index
    %38 = vector.load %arg2[%c0_62, %c0_63] : memref<36x4xbf16, #tpu.memory_space<vmem>>, vector<36x4xbf16>
    %cst_64 = arith.constant dense<0.000000e+00> : vector<256x4xf32>
    %39 = tpu.matmul %37, %38, %cst_64 {dimension_numbers = #tpu.dot_dimension_numbers<[1], [0], [0], [1], [0, 0, 1, 1], [], []>} : vector<256x36xbf16>, vector<36x4xbf16>, vector<256x4xf32> -> vector<256x4xf32>
    %c0_65 = arith.constant 0 : index
    %c0_66 = arith.constant 0 : index
    %40 = vector.load %arg6[%c0_65, %c0_66] : memref<1x4xf32, #tpu.memory_space<vmem>>, vector<1x4xf32>
    %41 = vector.broadcast %40 : vector<1x4xf32> to vector<256x4xf32>
    %42 = arith.addf %39, %41 : vector<256x4xf32>
    %cst_67 = arith.constant 0.000000e+00 : f32
    %43 = vector.broadcast %cst_67 : f32 to vector<256x4xf32>
    %44 = arith.maximumf %42, %43 : vector<256x4xf32>
    %45 = vector.shape_cast %44 : vector<256x4xf32> to vector<16x16x4xf32>
    %46 = arith.truncf %45 : vector<16x16x4xf32> to vector<16x16x4xbf16>
    %c1_68 = arith.constant 1 : index
    %c1_69 = arith.constant 1 : index
    %c0_70 = arith.constant 0 : index
    %47 = vector.load %arg9[%c1_68, %c1_69, %c0_70] : memref<18x18x4xbf16, #tpu.memory_space<vmem>>, vector<16x16x4xbf16>
    tpu.vector_store %arg9[%c1_68, %c1_69, %c0_70], %46 {strides = array<i32>} : memref<18x18x4xbf16, #tpu.memory_space<vmem>>, vector<16x16x4xbf16>,
    %c0_71 = arith.constant 0 : index
    %c0_72 = arith.constant 0 : index
    %c0_73 = arith.constant 0 : index
    %48 = vector.load %arg9[%c0_71, %c0_72, %c0_73] : memref<18x18x4xbf16, #tpu.memory_space<vmem>>, vector<16x16x4xbf16>
    %c0_74 = arith.constant 0 : index
    %c1_75 = arith.constant 1 : index
    %c0_76 = arith.constant 0 : index
    %49 = vector.load %arg9[%c0_74, %c1_75, %c0_76] : memref<18x18x4xbf16, #tpu.memory_space<vmem>>, vector<16x16x4xbf16>
    %c0_77 = arith.constant 0 : index
    %c2_78 = arith.constant 2 : index
    %c0_79 = arith.constant 0 : index
    %50 = vector.load %arg9[%c0_77, %c2_78, %c0_79] : memref<18x18x4xbf16, #tpu.memory_space<vmem>>, vector<16x16x4xbf16>
    %c1_80 = arith.constant 1 : index
    %c0_81 = arith.constant 0 : index
    %c0_82 = arith.constant 0 : index
    %51 = vector.load %arg9[%c1_80, %c0_81, %c0_82] : memref<18x18x4xbf16, #tpu.memory_space<vmem>>, vector<16x16x4xbf16>
    %c1_83 = arith.constant 1 : index
    %c1_84 = arith.constant 1 : index
    %c0_85 = arith.constant 0 : index
    %52 = vector.load %arg9[%c1_83, %c1_84, %c0_85] : memref<18x18x4xbf16, #tpu.memory_space<vmem>>, vector<16x16x4xbf16>
    %c1_86 = arith.constant 1 : index
    %c2_87 = arith.constant 2 : index
    %c0_88 = arith.constant 0 : index
    %53 = vector.load %arg9[%c1_86, %c2_87, %c0_88] : memref<18x18x4xbf16, #tpu.memory_space<vmem>>, vector<16x16x4xbf16>
    %c2_89 = arith.constant 2 : index
    %c0_90 = arith.constant 0 : index
    %c0_91 = arith.constant 0 : index
    %54 = vector.load %arg9[%c2_89, %c0_90, %c0_91] : memref<18x18x4xbf16, #tpu.memory_space<vmem>>, vector<16x16x4xbf16>
    %c2_92 = arith.constant 2 : index
    %c1_93 = arith.constant 1 : index
    %c0_94 = arith.constant 0 : index
    %55 = vector.load %arg9[%c2_92, %c1_93, %c0_94] : memref<18x18x4xbf16, #tpu.memory_space<vmem>>, vector<16x16x4xbf16>
    %c2_95 = arith.constant 2 : index
    %c2_96 = arith.constant 2 : index
    %c0_97 = arith.constant 0 : index
    %56 = vector.load %arg9[%c2_95, %c2_96, %c0_97] : memref<18x18x4xbf16, #tpu.memory_space<vmem>>, vector<16x16x4xbf16>
    %57 = tpu.concatenate %48, %49, %50, %51, %52, %53, %54, %55, %56 in 2 : vector<16x16x4xbf16>, vector<16x16x4xbf16>, vector<16x16x4xbf16>, vector<16x16x4xbf16>, vector<16x16x4xbf16>, vector<16x16x4xbf16>, vector<16x16x4xbf16>, vector<16x16x4xbf16>, vector<16x16x4xbf16> -> vector<16x16x36xbf16>
    %58 = vector.shape_cast %57 : vector<16x16x36xbf16> to vector<256x36xbf16>
    %c0_98 = arith.constant 0 : index
    %c0_99 = arith.constant 0 : index
    %59 = vector.load %arg3[%c0_98, %c0_99] : memref<36x4xbf16, #tpu.memory_space<vmem>>, vector<36x4xbf16>
    %cst_100 = arith.constant dense<0.000000e+00> : vector<256x4xf32>
    %60 = tpu.matmul %58, %59, %cst_100 {dimension_numbers = #tpu.dot_dimension_numbers<[1], [0], [0], [1], [0, 0, 1, 1], [], []>} : vector<256x36xbf16>, vector<36x4xbf16>, vector<256x4xf32> -> vector<256x4xf32>
    %c0_101 = arith.constant 0 : index
    %c0_102 = arith.constant 0 : index
    %c0_103 = arith.constant 0 : index
    %c0_104 = arith.constant 0 : index
    %61 = vector.load %arg1[%c0_101, %c0_102, %c0_103, %c0_104] : memref<1x16x16x4xbf16, #tpu.memory_space<vmem>>, vector<1x16x16x4xbf16>
    %62 = vector.shape_cast %61 : vector<1x16x16x4xbf16> to vector<16x16x4xbf16>
    %63 = arith.extf %62 : vector<16x16x4xbf16> to vector<16x16x4xf32>
    %64 = vector.shape_cast %63 : vector<16x16x4xf32> to vector<256x4xf32>
    %65 = arith.addf %60, %64 : vector<256x4xf32>
    %66 = vector.shape_cast %65 : vector<256x4xf32> to vector<16x16x4xf32>
    %67 = arith.truncf %66 : vector<16x16x4xf32> to vector<16x16x4xbf16>
    %c0_105 = arith.constant 0 : index
    %c0_106 = arith.constant 0 : index
    %c0_107 = arith.constant 0 : index
    %c0_108 = arith.constant 0 : index
    %68 = vector.load %arg7[%c0_105, %c0_106, %c0_107, %c0_108] : memref<1x16x16x4xbf16, #tpu.memory_space<vmem>>, vector<1x16x16x4xbf16>
    %69 = vector.shape_cast %68 : vector<1x16x16x4xbf16> to vector<16x16x4xbf16>
    %70 = vector.shape_cast %67 : vector<16x16x4xbf16> to vector<1x16x16x4xbf16>
    tpu.vector_store %arg7[%c0_105, %c0_106, %c0_107, %c0_108], %70 {strides = array<i32>} : memref<1x16x16x4xbf16, #tpu.memory_space<vmem>>, vector<1x16x16x4xbf16>,
    return
  }
  func.func @transform_0(%arg0: i32) -> (i32, i32, i32, i32) {
    %c0_i32 = arith.constant 0 : i32
    %c0_i32_0 = arith.constant 0 : i32
    %c0_i32_1 = arith.constant 0 : i32
    %c0_i32_2 = arith.constant 0 : i32
    return %arg0, %c0_i32, %c0_i32_0, %c0_i32_1 : i32, i32, i32, i32
  }
  func.func @transform_1(%arg0: i32) -> (i32, i32) {
    %c0_i32 = arith.constant 0 : i32
    %c0_i32_0 = arith.constant 0 : i32
    %c0_i32_1 = arith.constant 0 : i32
    return %c0_i32, %c0_i32_0 : i32, i32
  }
  func.func @transform_2(%arg0: i32) -> (i32, i32) {
    %c0_i32 = arith.constant 0 : i32
    %c0_i32_0 = arith.constant 0 : i32
    %c0_i32_1 = arith.constant 0 : i32
    return %c0_i32, %c0_i32_0 : i32, i32
  }
  func.func @transform_3(%arg0: i32) -> (i32, i32) {
    %c0_i32 = arith.constant 0 : i32
    %c0_i32_0 = arith.constant 0 : i32
    %c0_i32_1 = arith.constant 0 : i32
    return %c0_i32, %c0_i32_0 : i32, i32
  }
  func.func @transform_4(%arg0: i32) -> (i32, i32) {
    %c0_i32 = arith.constant 0 : i32
    %c0_i32_0 = arith.constant 0 : i32
    %c0_i32_1 = arith.constant 0 : i32
    return %c0_i32, %c0_i32_0 : i32, i32
  }
  func.func @transform_5(%arg0: i32) -> (i32, i32) {
    %c0_i32 = arith.constant 0 : i32
    %c0_i32_0 = arith.constant 0 : i32
    %c0_i32_1 = arith.constant 0 : i32
    return %c0_i32, %c0_i32_0 : i32, i32
  }
  func.func @transform_6(%arg0: i32) -> (i32, i32, i32, i32) {
    %c0_i32 = arith.constant 0 : i32
    %c0_i32_0 = arith.constant 0 : i32
    %c0_i32_1 = arith.constant 0 : i32
    %c0_i32_2 = arith.constant 0 : i32
    return %arg0, %c0_i32, %c0_i32_0, %c0_i32_1 : i32, i32, i32, i32
  }
}

</mosaic_0001>

<llo_original>
// kernel: preact_basic_block_forward.1
$region0: #{preact_basic_block_forward.1}
  #allocation0 [shape = 'u32[]', space=smem, size = 0x4, offset = 0x4, fixed_abs, tag = 'smem constant byte address 0x4 - core index']
  #allocation1 [shape = 'u32[144,128]{1,0:T(1,128)}', space=vmem, size = 0x12000, scoped, tag = 'internal scratch']
  #allocation2 [shape = 'bf16[18,18,4]{2,1,0:T(8,128)(2,1)}', space=vmem, size = 0x1b000, scoped, tag = 'scratch operand']
  #allocation3 [shape = 'bf16[18,18,4]{2,1,0:T(8,128)(2,1)}', space=vmem, size = 0x1b000, scoped, tag = 'scratch operand']
  %s0 = inlined_call_operand.vmem [shape: bf16[2,16,16,4], index: 0, kind: input, shape index: {}]
  %s1 = inlined_call_operand.vmem [shape: bf16[36,4], index: 1, kind: input, shape index: {}]
  %s2 = inlined_call_operand.vmem [shape: bf16[36,4], index: 2, kind: input, shape index: {}]
  %s3 = inlined_call_operand.vmem [shape: f32[1,4], index: 3, kind: input, shape index: {}]
  %s4 = inlined_call_operand.vmem [shape: f32[1,4], index: 4, kind: input, shape index: {}]
  %s5 = inlined_call_operand.vmem [shape: f32[1,4], index: 5, kind: input, shape index: {}]
  %s6 = inlined_call_operand.vmem [shape: bf16[2,16,16,4], index: 6, kind: output, shape index: {}]
  %s7 = sld [smem:[#allocation0]]
  $region57: #{preact_basic_block_forward.1} parent=0
    _
  %s9 = ssub.s32 1, %s7
  %s10 = scalar_select 0, %s9, %s7
  loop: start=0, step=1, limit=4
  $region2: #{preact_basic_block_forward.1} parent=0 // loop_pre_header
    _
  $region3: #{preact_basic_block_forward.1} parent=0 // loop_header
    %s12 = sphi 0, %s16
    %p13 = scmp.ge.s32.totalorder %s12, 4
    %s22 = sphi 0, %s24
    %s25 = sphi 0, %s22
    %s26 = sphi 0, %s25
    %s42 = sphi 0, %s26
    %s46 = sphi 0, %s46
    %s48 = sphi 0, %s46
    %s49 = sphi 0, %s48
    %s63 = sphi 0, %s49
    %s67 = sphi 0, %s67
    %s69 = sphi 0, %s67
    %s70 = sphi 0, %s69
    %s84 = sphi 0, %s70
    %s88 = sphi 0, %s88
    %s90 = sphi 0, %s88
    %s91 = sphi 0, %s90
    %s105 = sphi 0, %s91
    %s109 = sphi 0, %s109
    %s111 = sphi 0, %s109
    %s112 = sphi 0, %s111
    %s126 = sphi 0, %s112
    %s130 = sphi 0, %s130
    %s132 = sphi 0, %s130
    %s133 = sphi 0, %s132
    %s147 = sphi 0, %s133
    %s153 = sphi 0, %s155
    %s156 = sphi 0, %s153
    %s157 = sphi 0, %s156
    %s173 = sphi 0, %s157
  $region4: #{preact_basic_block_forward.1} parent=0 // loop_header_branch
    %15 = sbr.rel (%p13) target = $region8
  $region5: #{preact_basic_block_forward.1} parent=0 // loop_body
    %s17 = ssub.s32 %s12, 1
    %s18 = ssub.s32 %s12, 2
    %s19 = sadd.s32 %s12, 1
    %s20 = ssub.s32 %s12, %s19
    %p21 = scmp.eq.s32.totalorder %s20, 0
    %s23 = sadd.s32 %s22, 1
    %s24 = scalar_select %p21, %s22, %s23
    %p27 = pneg %p21
    %p28 = scmp.eq.s32.totalorder %s12, 1
    %p29 = por %p27, %p28
    %p30 = scmp.ne.s32.totalorder %s22, %s25
    %p31 = scmp.eq.s32.totalorder %s12, 0
    %p32 = por %p30, %p31
    %p33 = scmp.ne.s32.totalorder %s22, %s25
    %p34 = scmp.eq.s32.totalorder %s17, 1
    %p35 = por %p33, %p34
    %p36 = scmp.ne.s32.totalorder %s25, %s26
    %p37 = scmp.eq.s32.totalorder %s17, 0
    %p38 = por %p36, %p37
    %p39 = scmp.ne.s32.totalorder %s25, %s26
    %p40 = scmp.eq.s32.totalorder %s18, 1
    %p41 = por %p39, %p40
    %p43 = scmp.ne.s32.totalorder %s26, %s42
    %p44 = scmp.eq.s32.totalorder %s18, 0
    %p45 = por %p43, %p44
    %s47 = sadd.s32 %s46, 1
    %p50 = scmp.eq.s32.totalorder %s12, 1
    %p51 = scmp.ne.s32.totalorder %s46, %s48
    %p52 = scmp.eq.s32.totalorder %s12, 0
    %p53 = por %p51, %p52
    %p54 = scmp.ne.s32.totalorder %s46, %s48
    %p55 = scmp.eq.s32.totalorder %s17, 1
    %p56 = por %p54, %p55
    %p57 = scmp.ne.s32.totalorder %s48, %s49
    %p58 = scmp.eq.s32.totalorder %s17, 0
    %p59 = por %p57, %p58
    %p60 = scmp.ne.s32.totalorder %s48, %s49
    %p61 = scmp.eq.s32.totalorder %s18, 1
    %p62 = por %p60, %p61
    %p64 = scmp.ne.s32.totalorder %s49, %s63
    %p65 = scmp.eq.s32.totalorder %s18, 0
    %p66 = por %p64, %p65
    %s68 = sadd.s32 %s67, 1
    %p71 = scmp.eq.s32.totalorder %s12, 1
    %p72 = scmp.ne.s32.totalorder %s67, %s69
    %p73 = scmp.eq.s32.totalorder %s12, 0
    %p74 = por %p72, %p73
    %p75 = scmp.ne.s32.totalorder %s67, %s69
    %p76 = scmp.eq.s32.totalorder %s17, 1
    %p77 = por %p75, %p76
    %p78 = scmp.ne.s32.totalorder %s69, %s70
    %p79 = scmp.eq.s32.totalorder %s17, 0
    %p80 = por %p78, %p79
    %p81 = scmp.ne.s32.totalorder %s69, %s70
    %p82 = scmp.eq.s32.totalorder %s18, 1
    %p83 = por %p81, %p82
    %p85 = scmp.ne.s32.totalorder %s70, %s84
    %p86 = scmp.eq.s32.totalorder %s18, 0
    %p87 = por %p85, %p86
    %s89 = sadd.s32 %s88, 1
    %p92 = scmp.eq.s32.totalorder %s12, 1
    %p93 = scmp.ne.s32.totalorder %s88, %s90
    %p94 = scmp.eq.s32.totalorder %s12, 0
    %p95 = por %p93, %p94
    %p96 = scmp.ne.s32.totalorder %s88, %s90
    %p97 = scmp.eq.s32.totalorder %s17, 1
    %p98 = por %p96, %p97
    %p99 = scmp.ne.s32.totalorder %s90, %s91
    %p100 = scmp.eq.s32.totalorder %s17, 0
    %p101 = por %p99, %p100
    %p102 = scmp.ne.s32.totalorder %s90, %s91
    %p103 = scmp.eq.s32.totalorder %s18, 1
    %p104 = por %p102, %p103
    %p106 = scmp.ne.s32.totalorder %s91, %s105
    %p107 = scmp.eq.s32.totalorder %s18, 0
    %p108 = por %p106, %p107
    %s110 = sadd.s32 %s109, 1
    %p113 = scmp.eq.s32.totalorder %s12, 1
    %p114 = scmp.ne.s32.totalorder %s109, %s111
    %p115 = scmp.eq.s32.totalorder %s12, 0
    %p116 = por %p114, %p115
    %p117 = scmp.ne.s32.totalorder %s109, %s111
    %p118 = scmp.eq.s32.totalorder %s17, 1
    %p119 = por %p117, %p118
    %p120 = scmp.ne.s32.totalorder %s111, %s112
    %p121 = scmp.eq.s32.totalorder %s17, 0
    %p122 = por %p120, %p121
    %p123 = scmp.ne.s32.totalorder %s111, %s112
    %p124 = scmp.eq.s32.totalorder %s18, 1
    %p125 = por %p123, %p124
    %p127 = scmp.ne.s32.totalorder %s112, %s126
    %p128 = scmp.eq.s32.totalorder %s18, 0
    %p129 = por %p127, %p128
    %s131 = sadd.s32 %s130, 1
    %p134 = scmp.eq.s32.totalorder %s12, 1
    %p135 = scmp.ne.s32.totalorder %s130, %s132
    %p136 = scmp.eq.s32.totalorder %s12, 0
    %p137 = por %p135, %p136
    %p138 = scmp.ne.s32.totalorder %s130, %s132
    %p139 = scmp.eq.s32.totalorder %s17, 1
    %p140 = por %p138, %p139
    %p141 = scmp.ne.s32.totalorder %s132, %s133
    %p142 = scmp.eq.s32.totalorder %s17, 0
    %p143 = por %p141, %p142
    %p144 = scmp.ne.s32.totalorder %s132, %s133
    %p145 = scmp.eq.s32.totalorder %s18, 1
    %p146 = por %p144, %p145
    %p148 = scmp.ne.s32.totalorder %s133, %s147
    %p149 = scmp.eq.s32.totalorder %s18, 0
    %p150 = por %p148, %p149
    %s151 = ssub.s32 %s12, %s19
    %p152 = scmp.eq.s32.totalorder %s151, 0
    %s154 = sadd.s32 %s153, 1
    %s155 = scalar_select %p152, %s153, %s154
    %p158 = pneg %p152
    %p159 = scmp.eq.s32.totalorder %s12, 1
    %p160 = por %p158, %p159
    %p161 = scmp.ne.s32.totalorder %s153, %s156
    %p162 = scmp.eq.s32.totalorder %s12, 0
    %p163 = por %p161, %p162
    %p164 = scmp.ne.s32.totalorder %s153, %s156
    %p165 = scmp.eq.s32.totalorder %s17, 1
    %p166 = por %p164, %p165
    %p167 = scmp.ne.s32.totalorder %s156, %s157
    %p168 = scmp.eq.s32.totalorder %s17, 0
    %p169 = por %p167, %p168
    %p170 = scmp.ne.s32.totalorder %s156, %s157
    %p171 = scmp.eq.s32.totalorder %s18, 1
    %p172 = por %p170, %p171
    %p174 = scmp.ne.s32.totalorder %s157, %s173
    %p175 = scmp.eq.s32.totalorder %s18, 0
    %p176 = por %p174, %p175
    %p177 = scmp.le.s32.totalorder 1, %s12
    %p178 = scmp.lt.s32.totalorder %s12, 3
    %p179 = pnand %p177, %p178
    %p180 = pneg %p179
    // Predicated region
    $region9: #{preact_basic_block_forward.1} parent=5 // pred_check
      _
    $region10: #{preact_basic_block_forward.1} parent=5 // pred_check_branch
      %182 = sbr.rel (%p179) target = $region12
    $region11: #{preact_basic_block_forward.1} parent=5 // pred_region
      %s183 = ssub.s32 %s12, 1
      // Predicated region
      $region13: #{preact_basic_block_forward.1} parent=11 // pred_check
        %p184 = pneg %p59
      $region14: #{preact_basic_block_forward.1} parent=11 // pred_check_branch
        %186 = sbr.rel (%p184) target = $region16
      $region15: #{preact_basic_block_forward.1} parent=11 // pred_region
        _
      $region16: #{preact_basic_block_forward.1} parent=11 // pred_fallthru
        _
      // Predicated region
      $region17: #{preact_basic_block_forward.1} parent=11 // pred_check
        %p187 = pneg %p80
      $region18: #{preact_basic_block_forward.1} parent=11 // pred_check_branch
        %189 = sbr.rel (%p187) target = $region20
      $region19: #{preact_basic_block_forward.1} parent=11 // pred_region
        _
      $region20: #{preact_basic_block_forward.1} parent=11 // pred_fallthru
        _
      // Predicated region
      $region21: #{preact_basic_block_forward.1} parent=11 // pred_check
        %p190 = pneg %p101
      $region22: #{preact_basic_block_forward.1} parent=11 // pred_check_branch
        %192 = sbr.rel (%p190) target = $region24
      $region23: #{preact_basic_block_forward.1} parent=11 // pred_region
        _
      $region24: #{preact_basic_block_forward.1} parent=11 // pred_fallthru
        _
      // Predicated region
      $region25: #{preact_basic_block_forward.1} parent=11 // pred_check
        %p193 = pneg %p122
      $region26: #{preact_basic_block_forward.1} parent=11 // pred_check_branch
        %195 = sbr.rel (%p193) target = $region28
      $region27: #{preact_basic_block_forward.1} parent=11 // pred_region
        _
      $region28: #{preact_basic_block_forward.1} parent=11 // pred_fallthru
        _
      // Predicated region
      $region29: #{preact_basic_block_forward.1} parent=11 // pred_check
        %p196 = pneg %p143
      $region30: #{preact_basic_block_forward.1} parent=11 // pred_check_branch
        %198 = sbr.rel (%p196) target = $region32
      $region31: #{preact_basic_block_forward.1} parent=11 // pred_region
        _
      $region32: #{preact_basic_block_forward.1} parent=11 // pred_fallthru
        _
    $region12: #{preact_basic_block_forward.1} parent=5 // pred_fallthru
      _
    %p199 = scmp.lt.s32.totalorder %s12, 2
    // Predicated region
    $region33: #{preact_basic_block_forward.1} parent=5 // pred_check
      %p200 = pneg %p199
    $region34: #{preact_basic_block_forward.1} parent=5 // pred_check_branch
      %202 = sbr.rel (%p200) target = $region36
    $region35: #{preact_basic_block_forward.1} parent=5 // pred_region
      // Predicated region
      $region37: #{preact_basic_block_forward.1} parent=35 // pred_check
        %p203 = pneg %p32
      $region38: #{preact_basic_block_forward.1} parent=35 // pred_check_branch
        %205 = sbr.rel (%p203) target = $region40
      $region39: #{preact_basic_block_forward.1} parent=35 // pred_region
        %p206 = scmp.lt.s32.totalorder %s12, 1
        %s207 = scalar_select %p206, %s12, 1
        %s208 = smul.addr %s207, 32
        %s209 = smul.addr %s208, 4
        %s210 = scalar_lea.vmem %s0, %s209
      $region40: #{preact_basic_block_forward.1} parent=35 // pred_fallthru
        _
    $region36: #{preact_basic_block_forward.1} parent=5 // pred_fallthru
      _
    %p211 = scmp.le.s32.totalorder 1, %s12
    %p212 = scmp.lt.s32.totalorder %s12, 3
    %p213 = pnand %p211, %p212
    %p214 = pneg %p213
    // Predicated region
    $region41: #{preact_basic_block_forward.1} parent=5 // pred_check
      _
    $region42: #{preact_basic_block_forward.1} parent=5 // pred_check_branch
      %216 = sbr.rel (%p213) target = $region44
    $region43: #{preact_basic_block_forward.1} parent=5 // pred_region
      %s217 = ssub.s32 %s12, 1
      %p218 = scmp.lt.s32.totalorder %s17, 1
      %s219 = scalar_select %p218, %s17, 1
      %s220 = smul.addr %s219, 32
      %s221 = smul.addr %s220, 4
      %s222 = scalar_lea.vmem %s0, %s221
      %p223 = pneg %p38
      %p224 = pneg %p35
      %p225 = pneg %p59
      %p226 = pneg %p56
      %p227 = pneg %p80
      %p228 = pneg %p77
      %p229 = pneg %p101
      %p230 = pneg %p98
      %p231 = pneg %p122
      %p232 = pneg %p119
      %p233 = pneg %p143
      %p234 = pneg %p140
      %p235 = pneg %p169
      %p236 = pneg %p166
      %p237 = scmp.lt.s32.totalorder %s17, 1
      %s238 = scalar_select %p237, %s17, 1
      %s239 = smul.addr %s238, 32
      %s240 = smul.addr %s239, 4
      %s241 = scalar_lea.vmem %s6, %s240
      %p242 = scmp.lt.s32.totalorder %s17, 1
      %s243 = scalar_select %p242, %s17, 1
      %s244 = smul.addr %s243, 32
      %s245 = smul.addr %s244, 4
      %s246 = scalar_lea.vmem %s0, %s245
      %p247 = scmp.lt.s32.totalorder %s17, 1
      %s248 = scalar_select %p247, %s17, 1
      %s249 = smul.addr %s248, 32
      %s250 = smul.addr %s249, 4
      %s251 = scalar_lea.vmem %s6, %s250
      %vm253 = vcmask 27648
      %254 = vst.msk [vmem:[#allocation2] sm:$0xf] %vm253, 0
      %255 = vst.msk [vmem:[#allocation2 + $0x4] sm:$0xf] %vm253, 0
      %vm256 = vcmask 24576
      %257 = vst.msk [vmem:[#allocation2 + $0x8] sm:$0x1] %vm256, 0
      %s258 = scalar_lea.vmem [#allocation2], 204
      %259 = vst.msk [vmem:[%s258] sm:$0xf] %vm253, 0
      %260 = vst.msk [vmem:[%s258 + $0x4] sm:$0xf] %vm253, 0
      %261 = vst.msk [vmem:[%s258 + $0x8] sm:$0x1] %vm256, 0
      %vm262 = vcmask 24576
      %vm263 = vsmask.f32 256
      %vm264 = vmand %vm262, %vm263
      %v265 = vld [vmem:[#allocation2] sm:$0x1]
      %v266 = vsel %vm264, 0, %v265
      %267 = vst [vmem:[#allocation2] sm:$0x1] %v266
      %v268 = vld [vmem:[#allocation2 + $0xc] sm:$0x1]
      %v269 = vsel %vm264, 0, %v268
      %270 = vst [vmem:[#allocation2 + $0xc] sm:$0x1] %v269
      %v271 = vld [vmem:[#allocation2 + $0x18] sm:$0x1]
      %v272 = vsel %vm264, 0, %v271
      %273 = vst [vmem:[#allocation2 + $0x18] sm:$0x1] %v272
      %v274 = vld [vmem:[#allocation2 + $0x24] sm:$0x1]
      %v275 = vsel %vm264, 0, %v274
      %276 = vst [vmem:[#allocation2 + $0x24] sm:$0x1] %v275
      %v277 = vld [vmem:[#allocation2 + $0x30] sm:$0x1]
      %v278 = vsel %vm264, 0, %v277
      %279 = vst [vmem:[#allocation2 + $0x30] sm:$0x1] %v278
      %v280 = vld [vmem:[#allocation2 + $0x3c] sm:$0x1]
      %v281 = vsel %vm264, 0, %v280
      %282 = vst [vmem:[#allocation2 + $0x3c] sm:$0x1] %v281
      %v283 = vld [vmem:[#allocation2 + $0x48] sm:$0x1]
      %v284 = vsel %vm264, 0, %v283
      %285 = vst [vmem:[#allocation2 + $0x48] sm:$0x1] %v284
      %v286 = vld [vmem:[#allocation2 + $0x54] sm:$0x1]
      %v287 = vsel %vm264, 0, %v286
      %288 = vst [vmem:[#allocation2 + $0x54] sm:$0x1] %v287
      %v289 = vld [vmem:[#allocation2 + $0x60] sm:$0x1]
      %v290 = vsel %vm264, 0, %v289
      %291 = vst [vmem:[#allocation2 + $0x60] sm:$0x1] %v290
      %v292 = vld [vmem:[#allocation2 + $0x6c] sm:$0x1]
      %v293 = vsel %vm264, 0, %v292
      %294 = vst [vmem:[#allocation2 + $0x6c] sm:$0x1] %v293
      %v295 = vld [vmem:[#allocation2 + $0x78] sm:$0x1]
      %v296 = vsel %vm264, 0, %v295
      %297 = vst [vmem:[#allocation2 + $0x78] sm:$0x1] %v296
      %v298 = vld [vmem:[#allocation2 + $0x84] sm:$0x1]
      %v299 = vsel %vm264, 0, %v298
      %300 = vst [vmem:[#allocation2 + $0x84] sm:$0x1] %v299
      %v301 = vld [vmem:[#allocation2 + $0x90] sm:$0x1]
      %v302 = vsel %vm264, 0, %v301
      %303 = vst [vmem:[#allocation2 + $0x90] sm:$0x1] %v302
      %v304 = vld [vmem:[#allocation2 + $0x9c] sm:$0x1]
      %v305 = vsel %vm264, 0, %v304
      %306 = vst [vmem:[#allocation2 + $0x9c] sm:$0x1] %v305
      %v307 = vld [vmem:[#allocation2 + $0xa8] sm:$0x1]
      %v308 = vsel %vm264, 0, %v307
      %309 = vst [vmem:[#allocation2 + $0xa8] sm:$0x1] %v308
      %v310 = vld [vmem:[#allocation2 + $0xb4] sm:$0x1]
      %v311 = vsel %vm264, 0, %v310
      %312 = vst [vmem:[#allocation2 + $0xb4] sm:$0x1] %v311
      %v313 = vld [vmem:[#allocation2 + $0xc0] sm:$0x1]
      %v314 = vsel %vm264, 0, %v313
      %315 = vst [vmem:[#allocation2 + $0xc0] sm:$0x1] %v314
      %v316 = vld [vmem:[#allocation2 + $0xcc] sm:$0x1]
      %v317 = vsel %vm264, 0, %v316
      %318 = vst [vmem:[#allocation2 + $0xcc] sm:$0x1] %v317
      %vm319 = vsmask.f32 7938
      %vm320 = vmand %vm262, %vm319
      %v321 = vld [vmem:[#allocation2 + $0x8] sm:$0x1]
      %v322 = vsel %vm320, 0, %v321
      %323 = vst [vmem:[#allocation2 + $0x8] sm:$0x1] %v322
      %v324 = vld [vmem:[#allocation2 + $0x14] sm:$0x1]
      %v325 = vsel %vm320, 0, %v324
      %326 = vst [vmem:[#allocation2 + $0x14] sm:$0x1] %v325
      %v327 = vld [vmem:[#allocation2 + $0x20] sm:$0x1]
      %v328 = vsel %vm320, 0, %v327
      %329 = vst [vmem:[#allocation2 + $0x20] sm:$0x1] %v328
      %v330 = vld [vmem:[#allocation2 + $0x2c] sm:$0x1]
      %v331 = vsel %vm320, 0, %v330
      %332 = vst [vmem:[#allocation2 + $0x2c] sm:$0x1] %v331
      %v333 = vld [vmem:[#allocation2 + $0x38] sm:$0x1]
      %v334 = vsel %vm320, 0, %v333
      %335 = vst [vmem:[#allocation2 + $0x38] sm:$0x1] %v334
      %v336 = vld [vmem:[#allocation2 + $0x44] sm:$0x1]
      %v337 = vsel %vm320, 0, %v336
      %338 = vst [vmem:[#allocation2 + $0x44] sm:$0x1] %v337
      %v339 = vld [vmem:[#allocation2 + $0x50] sm:$0x1]
      %v340 = vsel %vm320, 0, %v339
      %341 = vst [vmem:[#allocation2 + $0x50] sm:$0x1] %v340
      %v342 = vld [vmem:[#allocation2 + $0x5c] sm:$0x1]
      %v343 = vsel %vm320, 0, %v342
      %344 = vst [vmem:[#allocation2 + $0x5c] sm:$0x1] %v343
      %v345 = vld [vmem:[#allocation2 + $0x68] sm:$0x1]
      %v346 = vsel %vm320, 0, %v345
      %347 = vst [vmem:[#allocation2 + $0x68] sm:$0x1] %v346
      %v348 = vld [vmem:[#allocation2 + $0x74] sm:$0x1]
      %v349 = vsel %vm320, 0, %v348
      %350 = vst [vmem:[#allocation2 + $0x74] sm:$0x1] %v349
      %v351 = vld [vmem:[#allocation2 + $0x80] sm:$0x1]
      %v352 = vsel %vm320, 0, %v351
      %353 = vst [vmem:[#allocation2 + $0x80] sm:$0x1] %v352
      %v354 = vld [vmem:[#allocation2 + $0x8c] sm:$0x1]
      %v355 = vsel %vm320, 0, %v354
      %356 = vst [vmem:[#allocation2 + $0x8c] sm:$0x1] %v355
      %v357 = vld [vmem:[#allocation2 + $0x98] sm:$0x1]
      %v358 = vsel %vm320, 0, %v357
      %359 = vst [vmem:[#allocation2 + $0x98] sm:$0x1] %v358
      %v360 = vld [vmem:[#allocation2 + $0xa4] sm:$0x1]
      %v361 = vsel %vm320, 0, %v360
      %362 = vst [vmem:[#allocation2 + $0xa4] sm:$0x1] %v361
      %v363 = vld [vmem:[#allocation2 + $0xb0] sm:$0x1]
      %v364 = vsel %vm320, 0, %v363
      %365 = vst [vmem:[#allocation2 + $0xb0] sm:$0x1] %v364
      %v366 = vld [vmem:[#allocation2 + $0xbc] sm:$0x1]
      %v367 = vsel %vm320, 0, %v366
      %368 = vst [vmem:[#allocation2 + $0xbc] sm:$0x1] %v367
      %v369 = vld [vmem:[#allocation2 + $0xc8] sm:$0x1]
      %v370 = vsel %vm320, 0, %v369
      %371 = vst [vmem:[#allocation2 + $0xc8] sm:$0x1] %v370
      %v372 = vld [vmem:[#allocation2 + $0xd4] sm:$0x1]
      %v373 = vsel %vm320, 0, %v372
      %374 = vst [vmem:[#allocation2 + $0xd4] sm:$0x1] %v373
      %375 = vst.msk [vmem:[#allocation3] sm:$0xf] %vm253, 0
      %376 = vst.msk [vmem:[#allocation3 + $0x4] sm:$0xf] %vm253, 0
      %377 = vst.msk [vmem:[#allocation3 + $0x8] sm:$0x1] %vm256, 0
      %s378 = scalar_lea.vmem [#allocation3], 204
      %379 = vst.msk [vmem:[%s378] sm:$0xf] %vm253, 0
      %380 = vst.msk [vmem:[%s378 + $0x4] sm:$0xf] %vm253, 0
      %381 = vst.msk [vmem:[%s378 + $0x8] sm:$0x1] %vm256, 0
      %v382 = vld [vmem:[#allocation3] sm:$0x1]
      %v383 = vsel %vm264, 0, %v382
      %384 = vst [vmem:[#allocation3] sm:$0x1] %v383
      %v385 = vld [vmem:[#allocation3 + $0xc] sm:$0x1]
      %v386 = vsel %vm264, 0, %v385
      %387 = vst [vmem:[#allocation3 + $0xc] sm:$0x1] %v386
      %v388 = vld [vmem:[#allocation3 + $0x18] sm:$0x1]
      %v389 = vsel %vm264, 0, %v388
      %390 = vst [vmem:[#allocation3 + $0x18] sm:$0x1] %v389
      %v391 = vld [vmem:[#allocation3 + $0x24] sm:$0x1]
      %v392 = vsel %vm264, 0, %v391
      %393 = vst [vmem:[#allocation3 + $0x24] sm:$0x1] %v392
      %v394 = vld [vmem:[#allocation3 + $0x30] sm:$0x1]
      %v395 = vsel %vm264, 0, %v394
      %396 = vst [vmem:[#allocation3 + $0x30] sm:$0x1] %v395
      %v397 = vld [vmem:[#allocation3 + $0x3c] sm:$0x1]
      %v398 = vsel %vm264, 0, %v397
      %399 = vst [vmem:[#allocation3 + $0x3c] sm:$0x1] %v398
      %v400 = vld [vmem:[#allocation3 + $0x48] sm:$0x1]
      %v401 = vsel %vm264, 0, %v400
      %402 = vst [vmem:[#allocation3 + $0x48] sm:$0x1] %v401
      %v403 = vld [vmem:[#allocation3 + $0x54] sm:$0x1]
      %v404 = vsel %vm264, 0, %v403
      %405 = vst [vmem:[#allocation3 + $0x54] sm:$0x1] %v404
      %v406 = vld [vmem:[#allocation3 + $0x60] sm:$0x1]
      %v407 = vsel %vm264, 0, %v406
      %408 = vst [vmem:[#allocation3 + $0x60] sm:$0x1] %v407
      %v409 = vld [vmem:[#allocation3 + $0x6c] sm:$0x1]
      %v410 = vsel %vm264, 0, %v409
      %411 = vst [vmem:[#allocation3 + $0x6c] sm:$0x1] %v410
      %v412 = vld [vmem:[#allocation3 + $0x78] sm:$0x1]
      %v413 = vsel %vm264, 0, %v412
      %414 = vst [vmem:[#allocation3 + $0x78] sm:$0x1] %v413
      %v415 = vld [vmem:[#allocation3 + $0x84] sm:$0x1]
      %v416 = vsel %vm264, 0, %v415
      %417 = vst [vmem:[#allocation3 + $0x84] sm:$0x1] %v416
      %v418 = vld [vmem:[#allocation3 + $0x90] sm:$0x1]
      %v419 = vsel %vm264, 0, %v418
      %420 = vst [vmem:[#allocation3 + $0x90] sm:$0x1] %v419
      %v421 = vld [vmem:[#allocation3 + $0x9c] sm:$0x1]
      %v422 = vsel %vm264, 0, %v421
      %423 = vst [vmem:[#allocation3 + $0x9c] sm:$0x1] %v422
      %v424 = vld [vmem:[#allocation3 + $0xa8] sm:$0x1]
      %v425 = vsel %vm264, 0, %v424
      %426 = vst [vmem:[#allocation3 + $0xa8] sm:$0x1] %v425
      %v427 = vld [vmem:[#allocation3 + $0xb4] sm:$0x1]
      %v428 = vsel %vm264, 0, %v427
      %429 = vst [vmem:[#allocation3 + $0xb4] sm:$0x1] %v428
      %v430 = vld [vmem:[#allocation3 + $0xc0] sm:$0x1]
      %v431 = vsel %vm264, 0, %v430
      %432 = vst [vmem:[#allocation3 + $0xc0] sm:$0x1] %v431
      %v433 = vld [vmem:[#allocation3 + $0xcc] sm:$0x1]
      %v434 = vsel %vm264, 0, %v433
      %435 = vst [vmem:[#allocation3 + $0xcc] sm:$0x1] %v434
      %v436 = vld [vmem:[#allocation3 + $0x8] sm:$0x1]
      %v437 = vsel %vm320, 0, %v436
      %438 = vst [vmem:[#allocation3 + $0x8] sm:$0x1] %v437
      %v439 = vld [vmem:[#allocation3 + $0x14] sm:$0x1]
      %v440 = vsel %vm320, 0, %v439
      %441 = vst [vmem:[#allocation3 + $0x14] sm:$0x1] %v440
      %v442 = vld [vmem:[#allocation3 + $0x20] sm:$0x1]
      %v443 = vsel %vm320, 0, %v442
      %444 = vst [vmem:[#allocation3 + $0x20] sm:$0x1] %v443
      %v445 = vld [vmem:[#allocation3 + $0x2c] sm:$0x1]
      %v446 = vsel %vm320, 0, %v445
      %447 = vst [vmem:[#allocation3 + $0x2c] sm:$0x1] %v446
      %v448 = vld [vmem:[#allocation3 + $0x38] sm:$0x1]
      %v449 = vsel %vm320, 0, %v448
      %450 = vst [vmem:[#allocation3 + $0x38] sm:$0x1] %v449
      %v451 = vld [vmem:[#allocation3 + $0x44] sm:$0x1]
      %v452 = vsel %vm320, 0, %v451
      %453 = vst [vmem:[#allocation3 + $0x44] sm:$0x1] %v452
      %v454 = vld [vmem:[#allocation3 + $0x50] sm:$0x1]
      %v455 = vsel %vm320, 0, %v454
      %456 = vst [vmem:[#allocation3 + $0x50] sm:$0x1] %v455
      %v457 = vld [vmem:[#allocation3 + $0x5c] sm:$0x1]
      %v458 = vsel %vm320, 0, %v457
      %459 = vst [vmem:[#allocation3 + $0x5c] sm:$0x1] %v458
      %v460 = vld [vmem:[#allocation3 + $0x68] sm:$0x1]
      %v461 = vsel %vm320, 0, %v460
      %462 = vst [vmem:[#allocation3 + $0x68] sm:$0x1] %v461
      %v463 = vld [vmem:[#allocation3 + $0x74] sm:$0x1]
      %v464 = vsel %vm320, 0, %v463
      %465 = vst [vmem:[#allocation3 + $0x74] sm:$0x1] %v464
      %v466 = vld [vmem:[#allocation3 + $0x80] sm:$0x1]
      %v467 = vsel %vm320, 0, %v466
      %468 = vst [vmem:[#allocation3 + $0x80] sm:$0x1] %v467
      %v469 = vld [vmem:[#allocation3 + $0x8c] sm:$0x1]
      %v470 = vsel %vm320, 0, %v469
      %471 = vst [vmem:[#allocation3 + $0x8c] sm:$0x1] %v470
      %v472 = vld [vmem:[#allocation3 + $0x98] sm:$0x1]
      %v473 = vsel %vm320, 0, %v472
      %474 = vst [vmem:[#allocation3 + $0x98] sm:$0x1] %v473
      %v475 = vld [vmem:[#allocation3 + $0xa4] sm:$0x1]
      %v476 = vsel %vm320, 0, %v475
      %477 = vst [vmem:[#allocation3 + $0xa4] sm:$0x1] %v476
      %v478 = vld [vmem:[#allocation3 + $0xb0] sm:$0x1]
      %v479 = vsel %vm320, 0, %v478
      %480 = vst [vmem:[#allocation3 + $0xb0] sm:$0x1] %v479
      %v481 = vld [vmem:[#allocation3 + $0xbc] sm:$0x1]
      %v482 = vsel %vm320, 0, %v481
      %483 = vst [vmem:[#allocation3 + $0xbc] sm:$0x1] %v482
      %v484 = vld [vmem:[#allocation3 + $0xc8] sm:$0x1]
      %v485 = vsel %vm320, 0, %v484
      %486 = vst [vmem:[#allocation3 + $0xc8] sm:$0x1] %v485
      %v487 = vld [vmem:[#allocation3 + $0xd4] sm:$0x1]
      %v488 = vsel %vm320, 0, %v487
      %489 = vst [vmem:[#allocation3 + $0xd4] sm:$0x1] %v488
      %v490 = vld [vmem:[%s246] sm:$0xf]
      %v491 = vld [vmem:[%s246 + $0x4] sm:$0xf]
      %v492 = vld [vmem:[%s246 + $0x8] sm:$0xf]
      %v493 = vld [vmem:[%s246 + $0xc] sm:$0xf]
      %v494 = vld [vmem:[%s246 + $0x10] sm:$0xf]
      %v495 = vld [vmem:[%s246 + $0x14] sm:$0xf]
      %v496 = vld [vmem:[%s246 + $0x18] sm:$0xf]
      %v497 = vld [vmem:[%s246 + $0x1c] sm:$0xf]
      %v498 = vld [vmem:[%s246 + $0x20] sm:$0xf]
      %v499 = vld [vmem:[%s246 + $0x24] sm:$0xf]
      %v500 = vld [vmem:[%s246 + $0x28] sm:$0xf]
      %v501 = vld [vmem:[%s246 + $0x2c] sm:$0xf]
      %v502 = vld [vmem:[%s246 + $0x30] sm:$0xf]
      %v503 = vld [vmem:[%s246 + $0x34] sm:$0xf]
      %v504 = vld [vmem:[%s246 + $0x38] sm:$0xf]
      %v505 = vld [vmem:[%s246 + $0x3c] sm:$0xf]
      %v506 = vld [vmem:[%s246 + $0x40] sm:$0xf]
      %v507 = vld [vmem:[%s246 + $0x44] sm:$0xf]
      %v508 = vld [vmem:[%s246 + $0x48] sm:$0xf]
      %v509 = vld [vmem:[%s246 + $0x4c] sm:$0xf]
      %v510 = vld [vmem:[%s246 + $0x50] sm:$0xf]
      %v511 = vld [vmem:[%s246 + $0x54] sm:$0xf]
      %v512 = vld [vmem:[%s246 + $0x58] sm:$0xf]
      %v513 = vld [vmem:[%s246 + $0x5c] sm:$0xf]
      %v514 = vld [vmem:[%s246 + $0x60] sm:$0xf]
      %v515 = vld [vmem:[%s246 + $0x64] sm:$0xf]
      %v516 = vld [vmem:[%s246 + $0x68] sm:$0xf]
      %v517 = vld [vmem:[%s246 + $0x6c] sm:$0xf]
      %v518 = vld [vmem:[%s246 + $0x70] sm:$0xf]
      %v519 = vld [vmem:[%s246 + $0x74] sm:$0xf]
      %v520 = vld [vmem:[%s246 + $0x78] sm:$0xf]
      %v521 = vld [vmem:[%s246 + $0x7c] sm:$0xf]
      %v522 = vunpack.c.l.bf16 %v490
      %v523 = vunpack.c.l.bf16 %v491
      %v524 = vunpack.c.l.bf16 %v492
      %v525 = vunpack.c.l.bf16 %v493
      %v526 = vunpack.c.l.bf16 %v494
      %v527 = vunpack.c.l.bf16 %v495
      %v528 = vunpack.c.l.bf16 %v496
      %v529 = vunpack.c.l.bf16 %v497
      %v530 = vunpack.c.l.bf16 %v498
      %v531 = vunpack.c.l.bf16 %v499
      %v532 = vunpack.c.l.bf16 %v500
      %v533 = vunpack.c.l.bf16 %v501
      %v534 = vunpack.c.l.bf16 %v502
      %v535 = vunpack.c.l.bf16 %v503
      %v536 = vunpack.c.l.bf16 %v504
      %v537 = vunpack.c.l.bf16 %v505
      %v538 = vunpack.c.l.bf16 %v506
      %v539 = vunpack.c.l.bf16 %v507
      %v540 = vunpack.c.l.bf16 %v508
      %v541 = vunpack.c.l.bf16 %v509
      %v542 = vunpack.c.l.bf16 %v510
      %v543 = vunpack.c.l.bf16 %v511
      %v544 = vunpack.c.l.bf16 %v512
      %v545 = vunpack.c.l.bf16 %v513
      %v546 = vunpack.c.l.bf16 %v514
      %v547 = vunpack.c.l.bf16 %v515
      %v548 = vunpack.c.l.bf16 %v516
      %v549 = vunpack.c.l.bf16 %v517
      %v550 = vunpack.c.l.bf16 %v518
      %v551 = vunpack.c.l.bf16 %v519
      %v552 = vunpack.c.l.bf16 %v520
      %v553 = vunpack.c.l.bf16 %v521
      %v554 = vld [vmem:[%s3] sm:$0x1]
      %v556 = vlaneseq
      %v557 = vshrl.u32 %v556, 7
      %v558 = vsub.s32 0, %v557
      %v559 = vrot.slane %v554, %v558
      %v561 = vmul.f32 %v522, %v559
      %v562 = vmul.f32 %v523, %v559
      %v563 = vmul.f32 %v524, %v559
      %v564 = vmul.f32 %v525, %v559
      %v565 = vmul.f32 %v526, %v559
      %v566 = vmul.f32 %v527, %v559
      %v567 = vmul.f32 %v528, %v559
      %v568 = vmul.f32 %v529, %v559
      %v569 = vmul.f32 %v530, %v559
      %v570 = vmul.f32 %v531, %v559
      %v571 = vmul.f32 %v532, %v559
      %v572 = vmul.f32 %v533, %v559
      %v573 = vmul.f32 %v534, %v559
      %v574 = vmul.f32 %v535, %v559
      %v575 = vmul.f32 %v536, %v559
      %v576 = vmul.f32 %v537, %v559
      %v577 = vmul.f32 %v538, %v559
      %v578 = vmul.f32 %v539, %v559
      %v579 = vmul.f32 %v540, %v559
      %v580 = vmul.f32 %v541, %v559
      %v581 = vmul.f32 %v542, %v559
      %v582 = vmul.f32 %v543, %v559
      %v583 = vmul.f32 %v544, %v559
      %v584 = vmul.f32 %v545, %v559
      %v585 = vmul.f32 %v546, %v559
      %v586 = vmul.f32 %v547, %v559
      %v587 = vmul.f32 %v548, %v559
      %v588 = vmul.f32 %v549, %v559
      %v589 = vmul.f32 %v550, %v559
      %v590 = vmul.f32 %v551, %v559
      %v591 = vmul.f32 %v552, %v559
      %v592 = vmul.f32 %v553, %v559
      %v593 = vld [vmem:[%s4] sm:$0x1]
      %v595 = vlaneseq
      %v596 = vshrl.u32 %v595, 7
      %v597 = vsub.s32 0, %v596
      %v598 = vrot.slane %v593, %v597
      %v600 = vadd.f32 %v561, %v598
      %v601 = vadd.f32 %v562, %v598
      %v602 = vadd.f32 %v563, %v598
      %v603 = vadd.f32 %v564, %v598
      %v604 = vadd.f32 %v565, %v598
      %v605 = vadd.f32 %v566, %v598
      %v606 = vadd.f32 %v567, %v598
      %v607 = vadd.f32 %v568, %v598
      %v608 = vadd.f32 %v569, %v598
      %v609 = vadd.f32 %v570, %v598
      %v610 = vadd.f32 %v571, %v598
      %v611 = vadd.f32 %v572, %v598
      %v612 = vadd.f32 %v573, %v598
      %v613 = vadd.f32 %v574, %v598
      %v614 = vadd.f32 %v575, %v598
      %v615 = vadd.f32 %v576, %v598
      %v616 = vadd.f32 %v577, %v598
      %v617 = vadd.f32 %v578, %v598
      %v618 = vadd.f32 %v579, %v598
      %v619 = vadd.f32 %v580, %v598
      %v620 = vadd.f32 %v581, %v598
      %v621 = vadd.f32 %v582, %v598
      %v622 = vadd.f32 %v583, %v598
      %v623 = vadd.f32 %v584, %v598
      %v624 = vadd.f32 %v585, %v598
      %v625 = vadd.f32 %v586, %v598
      %v626 = vadd.f32 %v587, %v598
      %v627 = vadd.f32 %v588, %v598
      %v628 = vadd.f32 %v589, %v598
      %v629 = vadd.f32 %v590, %v598
      %v630 = vadd.f32 %v591, %v598
      %v631 = vadd.f32 %v592, %v598
      %v632 = vmax.f32 %v600, 0.0
      %v633 = vmax.f32 %v601, 0.0
      %v634 = vmax.f32 %v602, 0.0
      %v635 = vmax.f32 %v603, 0.0
      %v636 = vmax.f32 %v604, 0.0
      %v637 = vmax.f32 %v605, 0.0
      %v638 = vmax.f32 %v606, 0.0
      %v639 = vmax.f32 %v607, 0.0
      %v640 = vmax.f32 %v608, 0.0
      %v641 = vmax.f32 %v609, 0.0
      %v642 = vmax.f32 %v610, 0.0
      %v643 = vmax.f32 %v611, 0.0
      %v644 = vmax.f32 %v612, 0.0
      %v645 = vmax.f32 %v613, 0.0
      %v646 = vmax.f32 %v614, 0.0
      %v647 = vmax.f32 %v615, 0.0
      %v648 = vmax.f32 %v616, 0.0
      %v649 = vmax.f32 %v617, 0.0
      %v650 = vmax.f32 %v618, 0.0
      %v651 = vmax.f32 %v619, 0.0
      %v652 = vmax.f32 %v620, 0.0
      %v653 = vmax.f32 %v621, 0.0
      %v654 = vmax.f32 %v622, 0.0
      %v655 = vmax.f32 %v623, 0.0
      %v656 = vmax.f32 %v624, 0.0
      %v657 = vmax.f32 %v625, 0.0
      %v658 = vmax.f32 %v626, 0.0
      %v659 = vmax.f32 %v627, 0.0
      %v660 = vmax.f32 %v628, 0.0
      %v661 = vmax.f32 %v629, 0.0
      %v662 = vmax.f32 %v630, 0.0
      %v663 = vmax.f32 %v631, 0.0
      %v664 = vpack.c.bf16 %v633, %v632
      %v665 = vpack.c.bf16 %v635, %v634
      %v666 = vpack.c.bf16 %v637, %v636
      %v667 = vpack.c.bf16 %v639, %v638
      %v668 = vpack.c.bf16 %v641, %v640
      %v669 = vpack.c.bf16 %v643, %v642
      %v670 = vpack.c.bf16 %v645, %v644
      %v671 = vpack.c.bf16 %v647, %v646
      %v672 = vpack.c.bf16 %v649, %v648
      %v673 = vpack.c.bf16 %v651, %v650
      %v674 = vpack.c.bf16 %v653, %v652
      %v675 = vpack.c.bf16 %v655, %v654
      %v676 = vpack.c.bf16 %v657, %v656
      %v677 = vpack.c.bf16 %v659, %v658
      %v678 = vpack.c.bf16 %v661, %v660
      %v679 = vpack.c.bf16 %v663, %v662
      %v696 = vunpack.c.l.b16 %v664
      %v697 = vunpack.c.h.b16 %v664
      %v698 = vunpack.c.l.b16 %v665
      %v699 = vunpack.c.h.b16 %v665
      %v700 = vunpack.c.l.b16 %v666
      %v701 = vunpack.c.h.b16 %v666
      %v702 = vunpack.c.l.b16 %v667
      %v703 = vunpack.c.h.b16 %v667
      %v704 = vunpack.c.l.b16 %v668
      %v705 = vunpack.c.h.b16 %v668
      %v706 = vunpack.c.l.b16 %v669
      %v707 = vunpack.c.h.b16 %v669
      %v708 = vunpack.c.l.b16 %v670
      %v709 = vunpack.c.h.b16 %v670
      %v710 = vunpack.c.l.b16 %v671
      %v711 = vunpack.c.h.b16 %v671
      %v712 = vunpack.c.l.b16 %v672
      %v713 = vunpack.c.h.b16 %v672
      %v714 = vunpack.c.l.b16 %v673
      %v715 = vunpack.c.h.b16 %v673
      %v716 = vunpack.c.l.b16 %v674
      %v717 = vunpack.c.h.b16 %v674
      %v718 = vunpack.c.l.b16 %v675
      %v719 = vunpack.c.h.b16 %v675
      %v720 = vunpack.c.l.b16 %v676
      %v721 = vunpack.c.h.b16 %v676
      %v722 = vunpack.c.l.b16 %v677
      %v723 = vunpack.c.h.b16 %v677
      %v724 = vunpack.c.l.b16 %v678
      %v725 = vunpack.c.h.b16 %v678
      %v726 = vunpack.c.l.b16 %v679
      %v727 = vunpack.c.h.b16 %v679
      %v728 = vpack.c.b16 %v696, %v696
      %v729 = vpack.c.b16 %v697, %v697
      %v730 = vpack.c.b16 %v698, %v698
      %v731 = vpack.c.b16 %v699, %v699
      %v732 = vpack.c.b16 %v700, %v700
      %v733 = vpack.c.b16 %v701, %v701
      %v734 = vpack.c.b16 %v702, %v702
      %v735 = vpack.c.b16 %v703, %v703
      %v736 = vpack.c.b16 %v704, %v704
      %v737 = vpack.c.b16 %v705, %v705
      %v738 = vpack.c.b16 %v706, %v706
      %v739 = vpack.c.b16 %v707, %v707
      %v740 = vpack.c.b16 %v708, %v708
      %v741 = vpack.c.b16 %v709, %v709
      %v742 = vpack.c.b16 %v710, %v710
      %v743 = vpack.c.b16 %v711, %v711
      %v744 = vpack.c.b16 %v712, %v712
      %v745 = vpack.c.b16 %v713, %v713
      %v746 = vpack.c.b16 %v714, %v714
      %v747 = vpack.c.b16 %v715, %v715
      %v748 = vpack.c.b16 %v716, %v716
      %v749 = vpack.c.b16 %v717, %v717
      %v750 = vpack.c.b16 %v718, %v718
      %v751 = vpack.c.b16 %v719, %v719
      %v752 = vpack.c.b16 %v720, %v720
      %v753 = vpack.c.b16 %v721, %v721
      %v754 = vpack.c.b16 %v722, %v722
      %v755 = vpack.c.b16 %v723, %v723
      %v756 = vpack.c.b16 %v724, %v724
      %v757 = vpack.c.b16 %v725, %v725
      %v758 = vpack.c.b16 %v726, %v726
      %v759 = vpack.c.b16 %v727, %v727
      %vm760 = vsmask.f32 4368
      %vm761 = vmor %vm263, %vm760
      %v763 = vshrl.u32 %v728, 16
      %v765 = vrot.slane %v763, 7
      %v766 = vshll.u32 %v728, 16
      %v768 = vor.u32 %v765, %v766
      %v769 = vrot.slane %v765, 4
      %v771 = vshrl.u32 %v729, 16
      %v773 = vrot.slane %v771, 7
      %v774 = vshll.u32 %v729, 16
      %v776 = vor.u32 %v773, %v774
      %v777 = vsel %vm761, %v769, %v776
      %v778 = vrot.slane %v773, 4
      %v780 = vshrl.u32 %v730, 16
      %v782 = vrot.slane %v780, 7
      %v783 = vshll.u32 %v730, 16
      %v785 = vor.u32 %v782, %v783
      %v786 = vrot.slane %v782, 4
      %v788 = vshrl.u32 %v731, 16
      %v790 = vrot.slane %v788, 7
      %v791 = vshll.u32 %v731, 16
      %v793 = vor.u32 %v790, %v791
      %v794 = vsel %vm761, %v786, %v793
      %v795 = vrot.slane %v790, 4
      %v797 = vshrl.u32 %v732, 16
      %v799 = vrot.slane %v797, 7
      %v800 = vshll.u32 %v732, 16
      %v802 = vor.u32 %v799, %v800
      %v803 = vrot.slane %v799, 4
      %v805 = vshrl.u32 %v733, 16
      %v807 = vrot.slane %v805, 7
      %v808 = vshll.u32 %v733, 16
      %v810 = vor.u32 %v807, %v808
      %v811 = vsel %vm761, %v803, %v810
      %v812 = vrot.slane %v807, 4
      %v814 = vshrl.u32 %v734, 16
      %v816 = vrot.slane %v814, 7
      %v817 = vshll.u32 %v734, 16
      %v819 = vor.u32 %v816, %v817
      %v820 = vrot.slane %v816, 4
      %v822 = vshrl.u32 %v735, 16
      %v824 = vrot.slane %v822, 7
      %v825 = vshll.u32 %v735, 16
      %v827 = vor.u32 %v824, %v825
      %v828 = vsel %vm761, %v820, %v827
      %v829 = vrot.slane %v824, 4
      %v831 = vshrl.u32 %v736, 16
      %v833 = vrot.slane %v831, 7
      %v834 = vshll.u32 %v736, 16
      %v836 = vor.u32 %v833, %v834
      %v837 = vrot.slane %v833, 4
      %v839 = vshrl.u32 %v737, 16
      %v841 = vrot.slane %v839, 7
      %v842 = vshll.u32 %v737, 16
      %v844 = vor.u32 %v841, %v842
      %v845 = vsel %vm761, %v837, %v844
      %v846 = vrot.slane %v841, 4
      %v848 = vshrl.u32 %v738, 16
      %v850 = vrot.slane %v848, 7
      %v851 = vshll.u32 %v738, 16
      %v853 = vor.u32 %v850, %v851
      %v854 = vrot.slane %v850, 4
      %v856 = vshrl.u32 %v739, 16
      %v858 = vrot.slane %v856, 7
      %v859 = vshll.u32 %v739, 16
      %v861 = vor.u32 %v858, %v859
      %v862 = vsel %vm761, %v854, %v861
      %v863 = vrot.slane %v858, 4
      %v865 = vshrl.u32 %v740, 16
      %v867 = vrot.slane %v865, 7
      %v868 = vshll.u32 %v740, 16
      %v870 = vor.u32 %v867, %v868
      %v871 = vrot.slane %v867, 4
      %v873 = vshrl.u32 %v741, 16
      %v875 = vrot.slane %v873, 7
      %v876 = vshll.u32 %v741, 16
      %v878 = vor.u32 %v875, %v876
      %v879 = vsel %vm761, %v871, %v878
      %v880 = vrot.slane %v875, 4
      %v882 = vshrl.u32 %v742, 16
      %v884 = vrot.slane %v882, 7
      %v885 = vshll.u32 %v742, 16
      %v887 = vor.u32 %v884, %v885
      %v888 = vrot.slane %v884, 4
      %v890 = vshrl.u32 %v743, 16
      %v892 = vrot.slane %v890, 7
      %v893 = vshll.u32 %v743, 16
      %v895 = vor.u32 %v892, %v893
      %v896 = vsel %vm761, %v888, %v895
      %v897 = vrot.slane %v892, 4
      %v899 = vshrl.u32 %v744, 16
      %v901 = vrot.slane %v899, 7
      %v902 = vshll.u32 %v744, 16
      %v904 = vor.u32 %v901, %v902
      %v905 = vrot.slane %v901, 4
      %v907 = vshrl.u32 %v745, 16
      %v909 = vrot.slane %v907, 7
      %v910 = vshll.u32 %v745, 16
      %v912 = vor.u32 %v909, %v910
      %v913 = vsel %vm761, %v905, %v912
      %v914 = vrot.slane %v909, 4
      %v916 = vshrl.u32 %v746, 16
      %v918 = vrot.slane %v916, 7
      %v919 = vshll.u32 %v746, 16
      %v921 = vor.u32 %v918, %v919
      %v922 = vrot.slane %v918, 4
      %v924 = vshrl.u32 %v747, 16
      %v926 = vrot.slane %v924, 7
      %v927 = vshll.u32 %v747, 16
      %v929 = vor.u32 %v926, %v927
      %v930 = vsel %vm761, %v922, %v929
      %v931 = vrot.slane %v926, 4
      %v933 = vshrl.u32 %v748, 16
      %v935 = vrot.slane %v933, 7
      %v936 = vshll.u32 %v748, 16
      %v938 = vor.u32 %v935, %v936
      %v939 = vrot.slane %v935, 4
      %v941 = vshrl.u32 %v749, 16
      %v943 = vrot.slane %v941, 7
      %v944 = vshll.u32 %v749, 16
      %v946 = vor.u32 %v943, %v944
      %v947 = vsel %vm761, %v939, %v946
      %v948 = vrot.slane %v943, 4
      %v950 = vshrl.u32 %v750, 16
      %v952 = vrot.slane %v950, 7
      %v953 = vshll.u32 %v750, 16
      %v955 = vor.u32 %v952, %v953
      %v956 = vrot.slane %v952, 4
      %v958 = vshrl.u32 %v751, 16
      %v960 = vrot.slane %v958, 7
      %v961 = vshll.u32 %v751, 16
      %v963 = vor.u32 %v960, %v961
      %v964 = vsel %vm761, %v956, %v963
      %v965 = vrot.slane %v960, 4
      %v967 = vshrl.u32 %v752, 16
      %v969 = vrot.slane %v967, 7
      %v970 = vshll.u32 %v752, 16
      %v972 = vor.u32 %v969, %v970
      %v973 = vrot.slane %v969, 4
      %v975 = vshrl.u32 %v753, 16
      %v977 = vrot.slane %v975, 7
      %v978 = vshll.u32 %v753, 16
      %v980 = vor.u32 %v977, %v978
      %v981 = vsel %vm761, %v973, %v980
      %v982 = vrot.slane %v977, 4
      %v984 = vshrl.u32 %v754, 16
      %v986 = vrot.slane %v984, 7
      %v987 = vshll.u32 %v754, 16
      %v989 = vor.u32 %v986, %v987
      %v990 = vrot.slane %v986, 4
      %v992 = vshrl.u32 %v755, 16
      %v994 = vrot.slane %v992, 7
      %v995 = vshll.u32 %v755, 16
      %v997 = vor.u32 %v994, %v995
      %v998 = vsel %vm761, %v990, %v997
      %v999 = vrot.slane %v994, 4
      %v1001 = vshrl.u32 %v756, 16
      %v1003 = vrot.slane %v1001, 7
      %v1004 = vshll.u32 %v756, 16
      %v1006 = vor.u32 %v1003, %v1004
      %v1007 = vrot.slane %v1003, 4
      %v1009 = vshrl.u32 %v757, 16
      %v1011 = vrot.slane %v1009, 7
      %v1012 = vshll.u32 %v757, 16
      %v1014 = vor.u32 %v1011, %v1012
      %v1015 = vsel %vm761, %v1007, %v1014
      %v1016 = vrot.slane %v1011, 4
      %v1018 = vshrl.u32 %v758, 16
      %v1020 = vrot.slane %v1018, 7
      %v1021 = vshll.u32 %v758, 16
      %v1023 = vor.u32 %v1020, %v1021
      %v1024 = vrot.slane %v1020, 4
      %v1026 = vshrl.u32 %v759, 16
      %v1028 = vrot.slane %v1026, 7
      %v1029 = vshll.u32 %v759, 16
      %v1031 = vor.u32 %v1028, %v1029
      %v1032 = vsel %vm761, %v1024, %v1031
      %v1033 = vrot.slane %v1028, 4
      %s1082 = scalar_lea.vmem [#allocation2], 12
      %vm1083 = vcmask 27648
      %vm1084 = vmand %vm1083, %vm319
      %v1085 = vld [vmem:[%s1082] sm:$0xf]
      %v1086 = vsel %vm1084, %v768, %v1085
      %1087 = vst [vmem:[%s1082] sm:$0xf] %v1086
      %1088 = vst.msk [vmem:[%s1082 + $0x4] sm:$0xf] %vm253, %v777
      %v1089 = vld [vmem:[%s1082 + $0x8] sm:$0x1]
      %v1090 = vsel %vm264, %v778, %v1089
      %1091 = vst [vmem:[%s1082 + $0x8] sm:$0x1] %v1090
      %v1092 = vld [vmem:[%s1082 + $0xc] sm:$0xf]
      %v1093 = vsel %vm1084, %v785, %v1092
      %1094 = vst [vmem:[%s1082 + $0xc] sm:$0xf] %v1093
      %1095 = vst.msk [vmem:[%s1082 + $0x10] sm:$0xf] %vm253, %v794
      %v1096 = vld [vmem:[%s1082 + $0x14] sm:$0x1]
      %v1097 = vsel %vm264, %v795, %v1096
      %1098 = vst [vmem:[%s1082 + $0x14] sm:$0x1] %v1097
      %v1099 = vld [vmem:[%s1082 + $0x18] sm:$0xf]
      %v1100 = vsel %vm1084, %v802, %v1099
      %1101 = vst [vmem:[%s1082 + $0x18] sm:$0xf] %v1100
      %1102 = vst.msk [vmem:[%s1082 + $0x1c] sm:$0xf] %vm253, %v811
      %v1103 = vld [vmem:[%s1082 + $0x20] sm:$0x1]
      %v1104 = vsel %vm264, %v812, %v1103
      %1105 = vst [vmem:[%s1082 + $0x20] sm:$0x1] %v1104
      %v1106 = vld [vmem:[%s1082 + $0x24] sm:$0xf]
      %v1107 = vsel %vm1084, %v819, %v1106
      %1108 = vst [vmem:[%s1082 + $0x24] sm:$0xf] %v1107
      %1109 = vst.msk [vmem:[%s1082 + $0x28] sm:$0xf] %vm253, %v828
      %v1110 = vld [vmem:[%s1082 + $0x2c] sm:$0x1]
      %v1111 = vsel %vm264, %v829, %v1110
      %1112 = vst [vmem:[%s1082 + $0x2c] sm:$0x1] %v1111
      %v1113 = vld [vmem:[%s1082 + $0x30] sm:$0xf]
      %v1114 = vsel %vm1084, %v836, %v1113
      %1115 = vst [vmem:[%s1082 + $0x30] sm:$0xf] %v1114
      %1116 = vst.msk [vmem:[%s1082 + $0x34] sm:$0xf] %vm253, %v845
      %v1117 = vld [vmem:[%s1082 + $0x38] sm:$0x1]
      %v1118 = vsel %vm264, %v846, %v1117
      %1119 = vst [vmem:[%s1082 + $0x38] sm:$0x1] %v1118
      %v1120 = vld [vmem:[%s1082 + $0x3c] sm:$0xf]
      %v1121 = vsel %vm1084, %v853, %v1120
      %1122 = vst [vmem:[%s1082 + $0x3c] sm:$0xf] %v1121
      %1123 = vst.msk [vmem:[%s1082 + $0x40] sm:$0xf] %vm253, %v862
      %v1124 = vld [vmem:[%s1082 + $0x44] sm:$0x1]
      %v1125 = vsel %vm264, %v863, %v1124
      %1126 = vst [vmem:[%s1082 + $0x44] sm:$0x1] %v1125
      %v1127 = vld [vmem:[%s1082 + $0x48] sm:$0xf]
      %v1128 = vsel %vm1084, %v870, %v1127
      %1129 = vst [vmem:[%s1082 + $0x48] sm:$0xf] %v1128
      %1130 = vst.msk [vmem:[%s1082 + $0x4c] sm:$0xf] %vm253, %v879
      %v1131 = vld [vmem:[%s1082 + $0x50] sm:$0x1]
      %v1132 = vsel %vm264, %v880, %v1131
      %1133 = vst [vmem:[%s1082 + $0x50] sm:$0x1] %v1132
      %v1134 = vld [vmem:[%s1082 + $0x54] sm:$0xf]
      %v1135 = vsel %vm1084, %v887, %v1134
      %1136 = vst [vmem:[%s1082 + $0x54] sm:$0xf] %v1135
      %1137 = vst.msk [vmem:[%s1082 + $0x58] sm:$0xf] %vm253, %v896
      %v1138 = vld [vmem:[%s1082 + $0x5c] sm:$0x1]
      %v1139 = vsel %vm264, %v897, %v1138
      %1140 = vst [vmem:[%s1082 + $0x5c] sm:$0x1] %v1139
      %v1141 = vld [vmem:[%s1082 + $0x60] sm:$0xf]
      %v1142 = vsel %vm1084, %v904, %v1141
      %1143 = vst [vmem:[%s1082 + $0x60] sm:$0xf] %v1142
      %1144 = vst.msk [vmem:[%s1082 + $0x64] sm:$0xf] %vm253, %v913
      %v1145 = vld [vmem:[%s1082 + $0x68] sm:$0x1]
      %v1146 = vsel %vm264, %v914, %v1145
      %1147 = vst [vmem:[%s1082 + $0x68] sm:$0x1] %v1146
      %v1148 = vld [vmem:[%s1082 + $0x6c] sm:$0xf]
      %v1149 = vsel %vm1084, %v921, %v1148
      %1150 = vst [vmem:[%s1082 + $0x6c] sm:$0xf] %v1149
      %1151 = vst.msk [vmem:[%s1082 + $0x70] sm:$0xf] %vm253, %v930
      %v1152 = vld [vmem:[%s1082 + $0x74] sm:$0x1]
      %v1153 = vsel %vm264, %v931, %v1152
      %1154 = vst [vmem:[%s1082 + $0x74] sm:$0x1] %v1153
      %v1155 = vld [vmem:[%s1082 + $0x78] sm:$0xf]
      %v1156 = vsel %vm1084, %v938, %v1155
      %1157 = vst [vmem:[%s1082 + $0x78] sm:$0xf] %v1156
      %1158 = vst.msk [vmem:[%s1082 + $0x7c] sm:$0xf] %vm253, %v947
      %v1159 = vld [vmem:[%s1082 + $0x80] sm:$0x1]
      %v1160 = vsel %vm264, %v948, %v1159
      %1161 = vst [vmem:[%s1082 + $0x80] sm:$0x1] %v1160
      %v1162 = vld [vmem:[%s1082 + $0x84] sm:$0xf]
      %v1163 = vsel %vm1084, %v955, %v1162
      %1164 = vst [vmem:[%s1082 + $0x84] sm:$0xf] %v1163
      %1165 = vst.msk [vmem:[%s1082 + $0x88] sm:$0xf] %vm253, %v964
      %v1166 = vld [vmem:[%s1082 + $0x8c] sm:$0x1]
      %v1167 = vsel %vm264, %v965, %v1166
      %1168 = vst [vmem:[%s1082 + $0x8c] sm:$0x1] %v1167
      %v1169 = vld [vmem:[%s1082 + $0x90] sm:$0xf]
      %v1170 = vsel %vm1084, %v972, %v1169
      %1171 = vst [vmem:[%s1082 + $0x90] sm:$0xf] %v1170
      %1172 = vst.msk [vmem:[%s1082 + $0x94] sm:$0xf] %vm253, %v981
      %v1173 = vld [vmem:[%s1082 + $0x98] sm:$0x1]
      %v1174 = vsel %vm264, %v982, %v1173
      %1175 = vst [vmem:[%s1082 + $0x98] sm:$0x1] %v1174
      %v1176 = vld [vmem:[%s1082 + $0x9c] sm:$0xf]
      %v1177 = vsel %vm1084, %v989, %v1176
      %1178 = vst [vmem:[%s1082 + $0x9c] sm:$0xf] %v1177
      %1179 = vst.msk [vmem:[%s1082 + $0xa0] sm:$0xf] %vm253, %v998
      %v1180 = vld [vmem:[%s1082 + $0xa4] sm:$0x1]
      %v1181 = vsel %vm264, %v999, %v1180
      %1182 = vst [vmem:[%s1082 + $0xa4] sm:$0x1] %v1181
      %v1183 = vld [vmem:[%s1082 + $0xa8] sm:$0xf]
      %v1184 = vsel %vm1084, %v1006, %v1183
      %1185 = vst [vmem:[%s1082 + $0xa8] sm:$0xf] %v1184
      %1186 = vst.msk [vmem:[%s1082 + $0xac] sm:$0xf] %vm253, %v1015
      %v1187 = vld [vmem:[%s1082 + $0xb0] sm:$0x1]
      %v1188 = vsel %vm264, %v1016, %v1187
      %1189 = vst [vmem:[%s1082 + $0xb0] sm:$0x1] %v1188
      %v1190 = vld [vmem:[%s1082 + $0xb4] sm:$0xf]
      %v1191 = vsel %vm1084, %v1023, %v1190
      %1192 = vst [vmem:[%s1082 + $0xb4] sm:$0xf] %v1191
      %1193 = vst.msk [vmem:[%s1082 + $0xb8] sm:$0xf] %vm253, %v1032
      %v1194 = vld [vmem:[%s1082 + $0xbc] sm:$0x1]
      %v1195 = vsel %vm264, %v1033, %v1194
      %1196 = vst [vmem:[%s1082 + $0xbc] sm:$0x1] %v1195
      %v1197 = vld [vmem:[#allocation2] sm:$0xf]
      %v1198 = vld [vmem:[#allocation2 + $0x4] sm:$0xf]
      %v1199 = vld [vmem:[#allocation2 + $0xc] sm:$0xf]
      %v1200 = vld [vmem:[#allocation2 + $0x10] sm:$0xf]
      %v1201 = vld [vmem:[#allocation2 + $0x18] sm:$0xf]
      %v1202 = vld [vmem:[#allocation2 + $0x1c] sm:$0xf]
      %v1203 = vld [vmem:[#allocation2 + $0x24] sm:$0xf]
      %v1204 = vld [vmem:[#allocation2 + $0x28] sm:$0xf]
      %v1205 = vld [vmem:[#allocation2 + $0x30] sm:$0xf]
      %v1206 = vld [vmem:[#allocation2 + $0x34] sm:$0xf]
      %v1207 = vld [vmem:[#allocation2 + $0x3c] sm:$0xf]
      %v1208 = vld [vmem:[#allocation2 + $0x40] sm:$0xf]
      %v1209 = vld [vmem:[#allocation2 + $0x48] sm:$0xf]
      %v1210 = vld [vmem:[#allocation2 + $0x4c] sm:$0xf]
      %v1211 = vld [vmem:[#allocation2 + $0x54] sm:$0xf]
      %v1212 = vld [vmem:[#allocation2 + $0x58] sm:$0xf]
      %v1213 = vld [vmem:[#allocation2 + $0x60] sm:$0xf]
      %v1214 = vld [vmem:[#allocation2 + $0x64] sm:$0xf]
      %v1215 = vld [vmem:[#allocation2 + $0x6c] sm:$0xf]
      %v1216 = vld [vmem:[#allocation2 + $0x70] sm:$0xf]
      %v1217 = vld [vmem:[#allocation2 + $0x78] sm:$0xf]
      %v1218 = vld [vmem:[#allocation2 + $0x7c] sm:$0xf]
      %v1219 = vld [vmem:[#allocation2 + $0x84] sm:$0xf]
      %v1220 = vld [vmem:[#allocation2 + $0x88] sm:$0xf]
      %v1221 = vld [vmem:[#allocation2 + $0x90] sm:$0xf]
      %v1222 = vld [vmem:[#allocation2 + $0x94] sm:$0xf]
      %v1223 = vld [vmem:[#allocation2 + $0x9c] sm:$0xf]
      %v1224 = vld [vmem:[#allocation2 + $0xa0] sm:$0xf]
      %v1225 = vld [vmem:[#allocation2 + $0xa8] sm:$0xf]
      %v1226 = vld [vmem:[#allocation2 + $0xac] sm:$0xf]
      %v1227 = vld [vmem:[#allocation2 + $0xb4] sm:$0xf]
      %v1228 = vld [vmem:[#allocation2 + $0xb8] sm:$0xf]
      %v1229 = vld [vmem:[#allocation2 + $0x8] sm:$0x1]
      %v1230 = vld [vmem:[#allocation2 + $0x14] sm:$0x1]
      %v1231 = vld [vmem:[#allocation2 + $0x20] sm:$0x1]
      %v1232 = vld [vmem:[#allocation2 + $0x2c] sm:$0x1]
      %v1233 = vld [vmem:[#allocation2 + $0x38] sm:$0x1]
      %v1234 = vld [vmem:[#allocation2 + $0x44] sm:$0x1]
      %v1235 = vld [vmem:[#allocation2 + $0x50] sm:$0x1]
      %v1236 = vld [vmem:[#allocation2 + $0x5c] sm:$0x1]
      %v1237 = vld [vmem:[#allocation2 + $0x68] sm:$0x1]
      %v1238 = vld [vmem:[#allocation2 + $0x74] sm:$0x1]
      %v1239 = vld [vmem:[#allocation2 + $0x80] sm:$0x1]
      %v1240 = vld [vmem:[#allocation2 + $0x8c] sm:$0x1]
      %v1241 = vld [vmem:[#allocation2 + $0x98] sm:$0x1]
      %v1242 = vld [vmem:[#allocation2 + $0xa4] sm:$0x1]
      %v1243 = vld [vmem:[#allocation2 + $0xb0] sm:$0x1]
      %v1244 = vld [vmem:[#allocation2 + $0xbc] sm:$0x1]
      %v1245 = vld [vmem:[#allocation2] sm:$0xe]
      %v1246 = vld [vmem:[#allocation2 + $0xc] sm:$0xe]
      %v1247 = vld [vmem:[#allocation2 + $0x18] sm:$0xe]
      %v1248 = vld [vmem:[#allocation2 + $0x24] sm:$0xe]
      %v1249 = vld [vmem:[#allocation2 + $0x30] sm:$0xe]
      %v1250 = vld [vmem:[#allocation2 + $0x3c] sm:$0xe]
      %v1251 = vld [vmem:[#allocation2 + $0x48] sm:$0xe]
      %v1252 = vld [vmem:[#allocation2 + $0x54] sm:$0xe]
      %v1253 = vld [vmem:[#allocation2 + $0x60] sm:$0xe]
      %v1254 = vld [vmem:[#allocation2 + $0x6c] sm:$0xe]
      %v1255 = vld [vmem:[#allocation2 + $0x78] sm:$0xe]
      %v1256 = vld [vmem:[#allocation2 + $0x84] sm:$0xe]
      %v1257 = vld [vmem:[#allocation2 + $0x90] sm:$0xe]
      %v1258 = vld [vmem:[#allocation2 + $0x9c] sm:$0xe]
      %v1259 = vld [vmem:[#allocation2 + $0xa8] sm:$0xe]
      %v1260 = vld [vmem:[#allocation2 + $0xb4] sm:$0xe]
      %v1261 = vld [vmem:[%s1082] sm:$0xf]
      %v1262 = vld [vmem:[%s1082 + $0x4] sm:$0xf]
      %v1263 = vld [vmem:[%s1082 + $0xc] sm:$0xf]
      %v1264 = vld [vmem:[%s1082 + $0x10] sm:$0xf]
      %v1265 = vld [vmem:[%s1082 + $0x18] sm:$0xf]
      %v1266 = vld [vmem:[%s1082 + $0x1c] sm:$0xf]
      %v1267 = vld [vmem:[%s1082 + $0x24] sm:$0xf]
      %v1268 = vld [vmem:[%s1082 + $0x28] sm:$0xf]
      %v1269 = vld [vmem:[%s1082 + $0x30] sm:$0xf]
      %v1270 = vld [vmem:[%s1082 + $0x34] sm:$0xf]
      %v1271 = vld [vmem:[%s1082 + $0x3c] sm:$0xf]
      %v1272 = vld [vmem:[%s1082 + $0x40] sm:$0xf]
      %v1273 = vld [vmem:[%s1082 + $0x48] sm:$0xf]
      %v1274 = vld [vmem:[%s1082 + $0x4c] sm:$0xf]
      %v1275 = vld [vmem:[%s1082 + $0x54] sm:$0xf]
      %v1276 = vld [vmem:[%s1082 + $0x58] sm:$0xf]
      %v1277 = vld [vmem:[%s1082 + $0x60] sm:$0xf]
      %v1278 = vld [vmem:[%s1082 + $0x64] sm:$0xf]
      %v1279 = vld [vmem:[%s1082 + $0x6c] sm:$0xf]
      %v1280 = vld [vmem:[%s1082 + $0x70] sm:$0xf]
      %v1281 = vld [vmem:[%s1082 + $0x78] sm:$0xf]
      %v1282 = vld [vmem:[%s1082 + $0x7c] sm:$0xf]
      %v1283 = vld [vmem:[%s1082 + $0x84] sm:$0xf]
      %v1284 = vld [vmem:[%s1082 + $0x88] sm:$0xf]
      %v1285 = vld [vmem:[%s1082 + $0x90] sm:$0xf]
      %v1286 = vld [vmem:[%s1082 + $0x94] sm:$0xf]
      %v1287 = vld [vmem:[%s1082 + $0x9c] sm:$0xf]
      %v1288 = vld [vmem:[%s1082 + $0xa0] sm:$0xf]
      %v1289 = vld [vmem:[%s1082 + $0xa8] sm:$0xf]
      %v1290 = vld [vmem:[%s1082 + $0xac] sm:$0xf]
      %v1291 = vld [vmem:[%s1082 + $0xb4] sm:$0xf]
      %v1292 = vld [vmem:[%s1082 + $0xb8] sm:$0xf]
      %v1293 = vld [vmem:[%s1082 + $0x8] sm:$0x1]
      %v1294 = vld [vmem:[%s1082 + $0x14] sm:$0x1]
      %v1295 = vld [vmem:[%s1082 + $0x20] sm:$0x1]
      %v1296 = vld [vmem:[%s1082 + $0x2c] sm:$0x1]
      %v1297 = vld [vmem:[%s1082 + $0x38] sm:$0x1]
      %v1298 = vld [vmem:[%s1082 + $0x44] sm:$0x1]
      %v1299 = vld [vmem:[%s1082 + $0x50] sm:$0x1]
      %v1300 = vld [vmem:[%s1082 + $0x5c] sm:$0x1]
      %v1301 = vld [vmem:[%s1082 + $0x68] sm:$0x1]
      %v1302 = vld [vmem:[%s1082 + $0x74] sm:$0x1]
      %v1303 = vld [vmem:[%s1082 + $0x80] sm:$0x1]
      %v1304 = vld [vmem:[%s1082 + $0x8c] sm:$0x1]
      %v1305 = vld [vmem:[%s1082 + $0x98] sm:$0x1]
      %v1306 = vld [vmem:[%s1082 + $0xa4] sm:$0x1]
      %v1307 = vld [vmem:[%s1082 + $0xb0] sm:$0x1]
      %v1308 = vld [vmem:[%s1082 + $0xbc] sm:$0x1]
      %v1309 = vld [vmem:[%s1082] sm:$0xe]
      %v1310 = vld [vmem:[%s1082 + $0xc] sm:$0xe]
      %v1311 = vld [vmem:[%s1082 + $0x18] sm:$0xe]
      %v1312 = vld [vmem:[%s1082 + $0x24] sm:$0xe]
      %v1313 = vld [vmem:[%s1082 + $0x30] sm:$0xe]
      %v1314 = vld [vmem:[%s1082 + $0x3c] sm:$0xe]
      %v1315 = vld [vmem:[%s1082 + $0x48] sm:$0xe]
      %v1316 = vld [vmem:[%s1082 + $0x54] sm:$0xe]
      %v1317 = vld [vmem:[%s1082 + $0x60] sm:$0xe]
      %v1318 = vld [vmem:[%s1082 + $0x6c] sm:$0xe]
      %v1319 = vld [vmem:[%s1082 + $0x78] sm:$0xe]
      %v1320 = vld [vmem:[%s1082 + $0x84] sm:$0xe]
      %v1321 = vld [vmem:[%s1082 + $0x90] sm:$0xe]
      %v1322 = vld [vmem:[%s1082 + $0x9c] sm:$0xe]
      %v1323 = vld [vmem:[%s1082 + $0xa8] sm:$0xe]
      %v1324 = vld [vmem:[%s1082 + $0xb4] sm:$0xe]
      %s1325 = scalar_lea.vmem [#allocation2], 24
      %v1326 = vld [vmem:[%s1325] sm:$0xf]
      %v1327 = vld [vmem:[%s1325 + $0x4] sm:$0xf]
      %v1328 = vld [vmem:[%s1325 + $0xc] sm:$0xf]
      %v1329 = vld [vmem:[%s1325 + $0x10] sm:$0xf]
      %v1330 = vld [vmem:[%s1325 + $0x18] sm:$0xf]
      %v1331 = vld [vmem:[%s1325 + $0x1c] sm:$0xf]
      %v1332 = vld [vmem:[%s1325 + $0x24] sm:$0xf]
      %v1333 = vld [vmem:[%s1325 + $0x28] sm:$0xf]
      %v1334 = vld [vmem:[%s1325 + $0x30] sm:$0xf]
      %v1335 = vld [vmem:[%s1325 + $0x34] sm:$0xf]
      %v1336 = vld [vmem:[%s1325 + $0x3c] sm:$0xf]
      %v1337 = vld [vmem:[%s1325 + $0x40] sm:$0xf]
      %v1338 = vld [vmem:[%s1325 + $0x48] sm:$0xf]
      %v1339 = vld [vmem:[%s1325 + $0x4c] sm:$0xf]
      %v1340 = vld [vmem:[%s1325 + $0x54] sm:$0xf]
      %v1341 = vld [vmem:[%s1325 + $0x58] sm:$0xf]
      %v1342 = vld [vmem:[%s1325 + $0x60] sm:$0xf]
      %v1343 = vld [vmem:[%s1325 + $0x64] sm:$0xf]
      %v1344 = vld [vmem:[%s1325 + $0x6c] sm:$0xf]
      %v1345 = vld [vmem:[%s1325 + $0x70] sm:$0xf]
      %v1346 = vld [vmem:[%s1325 + $0x78] sm:$0xf]
      %v1347 = vld [vmem:[%s1325 + $0x7c] sm:$0xf]
      %v1348 = vld [vmem:[%s1325 + $0x84] sm:$0xf]
      %v1349 = vld [vmem:[%s1325 + $0x88] sm:$0xf]
      %v1350 = vld [vmem:[%s1325 + $0x90] sm:$0xf]
      %v1351 = vld [vmem:[%s1325 + $0x94] sm:$0xf]
      %v1352 = vld [vmem:[%s1325 + $0x9c] sm:$0xf]
      %v1353 = vld [vmem:[%s1325 + $0xa0] sm:$0xf]
      %v1354 = vld [vmem:[%s1325 + $0xa8] sm:$0xf]
      %v1355 = vld [vmem:[%s1325 + $0xac] sm:$0xf]
      %v1356 = vld [vmem:[%s1325 + $0xb4] sm:$0xf]
      %v1357 = vld [vmem:[%s1325 + $0xb8] sm:$0xf]
      %v1358 = vld [vmem:[%s1325 + $0x8] sm:$0x1]
      %v1359 = vld [vmem:[%s1325 + $0x14] sm:$0x1]
      %v1360 = vld [vmem:[%s1325 + $0x20] sm:$0x1]
      %v1361 = vld [vmem:[%s1325 + $0x2c] sm:$0x1]
      %v1362 = vld [vmem:[%s1325 + $0x38] sm:$0x1]
      %v1363 = vld [vmem:[%s1325 + $0x44] sm:$0x1]
      %v1364 = vld [vmem:[%s1325 + $0x50] sm:$0x1]
      %v1365 = vld [vmem:[%s1325 + $0x5c] sm:$0x1]
      %v1366 = vld [vmem:[%s1325 + $0x68] sm:$0x1]
      %v1367 = vld [vmem:[%s1325 + $0x74] sm:$0x1]
      %v1368 = vld [vmem:[%s1325 + $0x80] sm:$0x1]
      %v1369 = vld [vmem:[%s1325 + $0x8c] sm:$0x1]
      %v1370 = vld [vmem:[%s1325 + $0x98] sm:$0x1]
      %v1371 = vld [vmem:[%s1325 + $0xa4] sm:$0x1]
      %v1372 = vld [vmem:[%s1325 + $0xb0] sm:$0x1]
      %v1373 = vld [vmem:[%s1325 + $0xbc] sm:$0x1]
      %v1374 = vld [vmem:[%s1325] sm:$0xe]
      %v1375 = vld [vmem:[%s1325 + $0xc] sm:$0xe]
      %v1376 = vld [vmem:[%s1325 + $0x18] sm:$0xe]
      %v1377 = vld [vmem:[%s1325 + $0x24] sm:$0xe]
      %v1378 = vld [vmem:[%s1325 + $0x30] sm:$0xe]
      %v1379 = vld [vmem:[%s1325 + $0x3c] sm:$0xe]
      %v1380 = vld [vmem:[%s1325 + $0x48] sm:$0xe]
      %v1381 = vld [vmem:[%s1325 + $0x54] sm:$0xe]
      %v1382 = vld [vmem:[%s1325 + $0x60] sm:$0xe]
      %v1383 = vld [vmem:[%s1325 + $0x6c] sm:$0xe]
      %v1384 = vld [vmem:[%s1325 + $0x78] sm:$0xe]
      %v1385 = vld [vmem:[%s1325 + $0x84] sm:$0xe]
      %v1386 = vld [vmem:[%s1325 + $0x90] sm:$0xe]
      %v1387 = vld [vmem:[%s1325 + $0x9c] sm:$0xe]
      %v1388 = vld [vmem:[%s1325 + $0xa8] sm:$0xe]
      %v1389 = vld [vmem:[%s1325 + $0xb4] sm:$0xe]
      %v1422 = vunpack.c.l.b16 %v1197
      %v1423 = vunpack.c.l.b16 %v1198
      %v1424 = vunpack.c.l.b16 %v1199
      %v1425 = vunpack.c.l.b16 %v1200
      %v1426 = vunpack.c.l.b16 %v1201
      %v1427 = vunpack.c.l.b16 %v1202
      %v1428 = vunpack.c.l.b16 %v1203
      %v1429 = vunpack.c.l.b16 %v1204
      %v1430 = vunpack.c.l.b16 %v1205
      %v1431 = vunpack.c.l.b16 %v1206
      %v1432 = vunpack.c.l.b16 %v1207
      %v1433 = vunpack.c.l.b16 %v1208
      %v1434 = vunpack.c.l.b16 %v1209
      %v1435 = vunpack.c.l.b16 %v1210
      %v1436 = vunpack.c.l.b16 %v1211
      %v1437 = vunpack.c.l.b16 %v1212
      %v1438 = vunpack.c.l.b16 %v1213
      %v1439 = vunpack.c.l.b16 %v1214
      %v1440 = vunpack.c.l.b16 %v1215
      %v1441 = vunpack.c.l.b16 %v1216
      %v1442 = vunpack.c.l.b16 %v1217
      %v1443 = vunpack.c.l.b16 %v1218
      %v1444 = vunpack.c.l.b16 %v1219
      %v1445 = vunpack.c.l.b16 %v1220
      %v1446 = vunpack.c.l.b16 %v1221
      %v1447 = vunpack.c.l.b16 %v1222
      %v1448 = vunpack.c.l.b16 %v1223
      %v1449 = vunpack.c.l.b16 %v1224
      %v1450 = vunpack.c.l.b16 %v1225
      %v1451 = vunpack.c.l.b16 %v1226
      %v1452 = vunpack.c.l.b16 %v1227
      %v1453 = vunpack.c.l.b16 %v1228
      %v1454 = vpack.c.b16 %v1423, %v1422
      %v1455 = vpack.c.b16 %v1425, %v1424
      %v1456 = vpack.c.b16 %v1427, %v1426
      %v1457 = vpack.c.b16 %v1429, %v1428
      %v1458 = vpack.c.b16 %v1431, %v1430
      %v1459 = vpack.c.b16 %v1433, %v1432
      %v1460 = vpack.c.b16 %v1435, %v1434
      %v1461 = vpack.c.b16 %v1437, %v1436
      %v1462 = vpack.c.b16 %v1439, %v1438
      %v1463 = vpack.c.b16 %v1441, %v1440
      %v1464 = vpack.c.b16 %v1443, %v1442
      %v1465 = vpack.c.b16 %v1445, %v1444
      %v1466 = vpack.c.b16 %v1447, %v1446
      %v1467 = vpack.c.b16 %v1449, %v1448
      %v1468 = vpack.c.b16 %v1451, %v1450
      %v1469 = vpack.c.b16 %v1453, %v1452
      %v1486 = vunpack.c.l.b16 %v1229
      %v1487 = vunpack.c.l.b16 %v1230
      %v1488 = vunpack.c.l.b16 %v1231
      %v1489 = vunpack.c.l.b16 %v1232
      %v1490 = vunpack.c.l.b16 %v1233
      %v1491 = vunpack.c.l.b16 %v1234
      %v1492 = vunpack.c.l.b16 %v1235
      %v1493 = vunpack.c.l.b16 %v1236
      %v1494 = vunpack.c.l.b16 %v1237
      %v1495 = vunpack.c.l.b16 %v1238
      %v1496 = vunpack.c.l.b16 %v1239
      %v1497 = vunpack.c.l.b16 %v1240
      %v1498 = vunpack.c.l.b16 %v1241
      %v1499 = vunpack.c.l.b16 %v1242
      %v1500 = vunpack.c.l.b16 %v1243
      %v1501 = vunpack.c.l.b16 %v1244
      %v1502 = vpack.c.b16 %v1486, %v1486
      %v1503 = vpack.c.b16 %v1487, %v1487
      %v1504 = vpack.c.b16 %v1488, %v1488
      %v1505 = vpack.c.b16 %v1489, %v1489
      %v1506 = vpack.c.b16 %v1490, %v1490
      %v1507 = vpack.c.b16 %v1491, %v1491
      %v1508 = vpack.c.b16 %v1492, %v1492
      %v1509 = vpack.c.b16 %v1493, %v1493
      %v1510 = vpack.c.b16 %v1494, %v1494
      %v1511 = vpack.c.b16 %v1495, %v1495
      %v1512 = vpack.c.b16 %v1496, %v1496
      %v1513 = vpack.c.b16 %v1497, %v1497
      %v1514 = vpack.c.b16 %v1498, %v1498
      %v1515 = vpack.c.b16 %v1499, %v1499
      %v1516 = vpack.c.b16 %v1500, %v1500
      %v1517 = vpack.c.b16 %v1501, %v1501
      %vm1518 = vsmask.f32 7424
      %v1520 = vshrl.u32 %v1454, 16
      %v1522 = vshll.u32 %v1454, 16
      %v1524 = vrot.slane %v1522, 1
      %v1525 = vor.u32 %v1520, %v1524
      %v1527 = vshll.u32 %v1502, 16
      %v1529 = vrot.slane %v1527, 1
      %v1530 = vsel %vm1518, %v1525, %v1529
      %v1532 = vshrl.u32 %v1455, 16
      %v1534 = vshll.u32 %v1455, 16
      %v1536 = vrot.slane %v1534, 1
      %v1537 = vor.u32 %v1532, %v1536
      %v1539 = vshll.u32 %v1503, 16
      %v1541 = vrot.slane %v1539, 1
      %v1542 = vsel %vm1518, %v1537, %v1541
      %v1544 = vshrl.u32 %v1456, 16
      %v1546 = vshll.u32 %v1456, 16
      %v1548 = vrot.slane %v1546, 1
      %v1549 = vor.u32 %v1544, %v1548
      %v1551 = vshll.u32 %v1504, 16
      %v1553 = vrot.slane %v1551, 1
      %v1554 = vsel %vm1518, %v1549, %v1553
      %v1556 = vshrl.u32 %v1457, 16
      %v1558 = vshll.u32 %v1457, 16
      %v1560 = vrot.slane %v1558, 1
      %v1561 = vor.u32 %v1556, %v1560
      %v1563 = vshll.u32 %v1505, 16
      %v1565 = vrot.slane %v1563, 1
      %v1566 = vsel %vm1518, %v1561, %v1565
      %v1568 = vshrl.u32 %v1458, 16
      %v1570 = vshll.u32 %v1458, 16
      %v1572 = vrot.slane %v1570, 1
      %v1573 = vor.u32 %v1568, %v1572
      %v1575 = vshll.u32 %v1506, 16
      %v1577 = vrot.slane %v1575, 1
      %v1578 = vsel %vm1518, %v1573, %v1577
      %v1580 = vshrl.u32 %v1459, 16
      %v1582 = vshll.u32 %v1459, 16
      %v1584 = vrot.slane %v1582, 1
      %v1585 = vor.u32 %v1580, %v1584
      %v1587 = vshll.u32 %v1507, 16
      %v1589 = vrot.slane %v1587, 1
      %v1590 = vsel %vm1518, %v1585, %v1589
      %v1592 = vshrl.u32 %v1460, 16
      %v1594 = vshll.u32 %v1460, 16
      %v1596 = vrot.slane %v1594, 1
      %v1597 = vor.u32 %v1592, %v1596
      %v1599 = vshll.u32 %v1508, 16
      %v1601 = vrot.slane %v1599, 1
      %v1602 = vsel %vm1518, %v1597, %v1601
      %v1604 = vshrl.u32 %v1461, 16
      %v1606 = vshll.u32 %v1461, 16
      %v1608 = vrot.slane %v1606, 1
      %v1609 = vor.u32 %v1604, %v1608
      %v1611 = vshll.u32 %v1509, 16
      %v1613 = vrot.slane %v1611, 1
      %v1614 = vsel %vm1518, %v1609, %v1613
      %v1616 = vshrl.u32 %v1462, 16
      %v1618 = vshll.u32 %v1462, 16
      %v1620 = vrot.slane %v1618, 1
      %v1621 = vor.u32 %v1616, %v1620
      %v1623 = vshll.u32 %v1510, 16
      %v1625 = vrot.slane %v1623, 1
      %v1626 = vsel %vm1518, %v1621, %v1625
      %v1628 = vshrl.u32 %v1463, 16
      %v1630 = vshll.u32 %v1463, 16
      %v1632 = vrot.slane %v1630, 1
      %v1633 = vor.u32 %v1628, %v1632
      %v1635 = vshll.u32 %v1511, 16
      %v1637 = vrot.slane %v1635, 1
      %v1638 = vsel %vm1518, %v1633, %v1637
      %v1640 = vshrl.u32 %v1464, 16
      %v1642 = vshll.u32 %v1464, 16
      %v1644 = vrot.slane %v1642, 1
      %v1645 = vor.u32 %v1640, %v1644
      %v1647 = vshll.u32 %v1512, 16
      %v1649 = vrot.slane %v1647, 1
      %v1650 = vsel %vm1518, %v1645, %v1649
      %v1652 = vshrl.u32 %v1465, 16
      %v1654 = vshll.u32 %v1465, 16
      %v1656 = vrot.slane %v1654, 1
      %v1657 = vor.u32 %v1652, %v1656
      %v1659 = vshll.u32 %v1513, 16
      %v1661 = vrot.slane %v1659, 1
      %v1662 = vsel %vm1518, %v1657, %v1661
      %v1664 = vshrl.u32 %v1466, 16
      %v1666 = vshll.u32 %v1466, 16
      %v1668 = vrot.slane %v1666, 1
      %v1669 = vor.u32 %v1664, %v1668
      %v1671 = vshll.u32 %v1514, 16
      %v1673 = vrot.slane %v1671, 1
      %v1674 = vsel %vm1518, %v1669, %v1673
      %v1676 = vshrl.u32 %v1467, 16
      %v1678 = vshll.u32 %v1467, 16
      %v1680 = vrot.slane %v1678, 1
      %v1681 = vor.u32 %v1676, %v1680
      %v1683 = vshll.u32 %v1515, 16
      %v1685 = vrot.slane %v1683, 1
      %v1686 = vsel %vm1518, %v1681, %v1685
      %v1688 = vshrl.u32 %v1468, 16
      %v1690 = vshll.u32 %v1468, 16
      %v1692 = vrot.slane %v1690, 1
      %v1693 = vor.u32 %v1688, %v1692
      %v1695 = vshll.u32 %v1516, 16
      %v1697 = vrot.slane %v1695, 1
      %v1698 = vsel %vm1518, %v1693, %v1697
      %v1700 = vshrl.u32 %v1469, 16
      %v1702 = vshll.u32 %v1469, 16
      %v1704 = vrot.slane %v1702, 1
      %v1705 = vor.u32 %v1700, %v1704
      %v1707 = vshll.u32 %v1517, 16
      %v1709 = vrot.slane %v1707, 1
      %v1710 = vsel %vm1518, %v1705, %v1709
      %1711 = vrot.lane.b32.xlu0 %v1530, 4
      %v1712 = vpop.permute.xlu0 %1711
      %1713 = vrot.lane.b32.xlu0 %v1542, 4
      %v1714 = vpop.permute.xlu0 %1713
      %1715 = vrot.lane.b32.xlu0 %v1554, 4
      %v1716 = vpop.permute.xlu0 %1715
      %1717 = vrot.lane.b32.xlu0 %v1566, 4
      %v1718 = vpop.permute.xlu0 %1717
      %1719 = vrot.lane.b32.xlu0 %v1578, 4
      %v1720 = vpop.permute.xlu0 %1719
      %1721 = vrot.lane.b32.xlu0 %v1590, 4
      %v1722 = vpop.permute.xlu0 %1721
      %1723 = vrot.lane.b32.xlu0 %v1602, 4
      %v1724 = vpop.permute.xlu0 %1723
      %1725 = vrot.lane.b32.xlu0 %v1614, 4
      %v1726 = vpop.permute.xlu0 %1725
      %1727 = vrot.lane.b32.xlu0 %v1626, 4
      %v1728 = vpop.permute.xlu0 %1727
      %1729 = vrot.lane.b32.xlu0 %v1638, 4
      %v1730 = vpop.permute.xlu0 %1729
      %1731 = vrot.lane.b32.xlu0 %v1650, 4
      %v1732 = vpop.permute.xlu0 %1731
      %1733 = vrot.lane.b32.xlu0 %v1662, 4
      %v1734 = vpop.permute.xlu0 %1733
      %1735 = vrot.lane.b32.xlu0 %v1674, 4
      %v1736 = vpop.permute.xlu0 %1735
      %1737 = vrot.lane.b32.xlu0 %v1686, 4
      %v1738 = vpop.permute.xlu0 %1737
      %1739 = vrot.lane.b32.xlu0 %v1698, 4
      %v1740 = vpop.permute.xlu0 %1739
      %1741 = vrot.lane.b32.xlu0 %v1710, 4
      %v1742 = vpop.permute.xlu0 %1741
      %v1759 = vunpack.c.l.b16 %v1245
      %v1760 = vunpack.c.l.b16 %v1246
      %v1761 = vunpack.c.l.b16 %v1247
      %v1762 = vunpack.c.l.b16 %v1248
      %v1763 = vunpack.c.l.b16 %v1249
      %v1764 = vunpack.c.l.b16 %v1250
      %v1765 = vunpack.c.l.b16 %v1251
      %v1766 = vunpack.c.l.b16 %v1252
      %v1767 = vunpack.c.l.b16 %v1253
      %v1768 = vunpack.c.l.b16 %v1254
      %v1769 = vunpack.c.l.b16 %v1255
      %v1770 = vunpack.c.l.b16 %v1256
      %v1771 = vunpack.c.l.b16 %v1257
      %v1772 = vunpack.c.l.b16 %v1258
      %v1773 = vunpack.c.l.b16 %v1259
      %v1774 = vunpack.c.l.b16 %v1260
      %v1775 = vpack.c.b16 %v1423, %v1759
      %v1776 = vpack.c.b16 %v1425, %v1760
      %v1777 = vpack.c.b16 %v1427, %v1761
      %v1778 = vpack.c.b16 %v1429, %v1762
      %v1779 = vpack.c.b16 %v1431, %v1763
      %v1780 = vpack.c.b16 %v1433, %v1764
      %v1781 = vpack.c.b16 %v1435, %v1765
      %v1782 = vpack.c.b16 %v1437, %v1766
      %v1783 = vpack.c.b16 %v1439, %v1767
      %v1784 = vpack.c.b16 %v1441, %v1768
      %v1785 = vpack.c.b16 %v1443, %v1769
      %v1786 = vpack.c.b16 %v1445, %v1770
      %v1787 = vpack.c.b16 %v1447, %v1771
      %v1788 = vpack.c.b16 %v1449, %v1772
      %v1789 = vpack.c.b16 %v1451, %v1773
      %v1790 = vpack.c.b16 %v1453, %v1774
      %vm1791 = vcmask 1046528
      %v1792 = vrot.slane %v1775, 1
      %v1793 = vrot.slane %v1502, 1
      %v1794 = vsel %vm1791, %v1792, %v1793
      %v1795 = vrot.slane %v1776, 1
      %v1796 = vrot.slane %v1503, 1
      %v1797 = vsel %vm1791, %v1795, %v1796
      %v1798 = vrot.slane %v1777, 1
      %v1799 = vrot.slane %v1504, 1
      %v1800 = vsel %vm1791, %v1798, %v1799
      %v1801 = vrot.slane %v1778, 1
      %v1802 = vrot.slane %v1505, 1
      %v1803 = vsel %vm1791, %v1801, %v1802
      %v1804 = vrot.slane %v1779, 1
      %v1805 = vrot.slane %v1506, 1
      %v1806 = vsel %vm1791, %v1804, %v1805
      %v1807 = vrot.slane %v1780, 1
      %v1808 = vrot.slane %v1507, 1
      %v1809 = vsel %vm1791, %v1807, %v1808
      %v1810 = vrot.slane %v1781, 1
      %v1811 = vrot.slane %v1508, 1
      %v1812 = vsel %vm1791, %v1810, %v1811
      %v1813 = vrot.slane %v1782, 1
      %v1814 = vrot.slane %v1509, 1
      %v1815 = vsel %vm1791, %v1813, %v1814
      %v1816 = vrot.slane %v1783, 1
      %v1817 = vrot.slane %v1510, 1
      %v1818 = vsel %vm1791, %v1816, %v1817
      %v1819 = vrot.slane %v1784, 1
      %v1820 = vrot.slane %v1511, 1
      %v1821 = vsel %vm1791, %v1819, %v1820
      %v1822 = vrot.slane %v1785, 1
      %v1823 = vrot.slane %v1512, 1
      %v1824 = vsel %vm1791, %v1822, %v1823
      %v1825 = vrot.slane %v1786, 1
      %v1826 = vrot.slane %v1513, 1
      %v1827 = vsel %vm1791, %v1825, %v1826
      %v1828 = vrot.slane %v1787, 1
      %v1829 = vrot.slane %v1514, 1
      %v1830 = vsel %vm1791, %v1828, %v1829
      %v1831 = vrot.slane %v1788, 1
      %v1832 = vrot.slane %v1515, 1
      %v1833 = vsel %vm1791, %v1831, %v1832
      %v1834 = vrot.slane %v1789, 1
      %v1835 = vrot.slane %v1516, 1
      %v1836 = vsel %vm1791, %v1834, %v1835
      %v1837 = vrot.slane %v1790, 1
      %v1838 = vrot.slane %v1517, 1
      %v1839 = vsel %vm1791, %v1837, %v1838
      %1840 = vrot.lane.b32.xlu0 %v1794, 8
      %v1841 = vpop.permute.xlu0 %1840
      %1842 = vrot.lane.b32.xlu0 %v1797, 8
      %v1843 = vpop.permute.xlu0 %1842
      %1844 = vrot.lane.b32.xlu0 %v1800, 8
      %v1845 = vpop.permute.xlu0 %1844
      %1846 = vrot.lane.b32.xlu0 %v1803, 8
      %v1847 = vpop.permute.xlu0 %1846
      %1848 = vrot.lane.b32.xlu0 %v1806, 8
      %v1849 = vpop.permute.xlu0 %1848
      %1850 = vrot.lane.b32.xlu0 %v1809, 8
      %v1851 = vpop.permute.xlu0 %1850
      %1852 = vrot.lane.b32.xlu0 %v1812, 8
      %v1853 = vpop.permute.xlu0 %1852
      %1854 = vrot.lane.b32.xlu0 %v1815, 8
      %v1855 = vpop.permute.xlu0 %1854
      %1856 = vrot.lane.b32.xlu0 %v1818, 8
      %v1857 = vpop.permute.xlu0 %1856
      %1858 = vrot.lane.b32.xlu0 %v1821, 8
      %v1859 = vpop.permute.xlu0 %1858
      %1860 = vrot.lane.b32.xlu0 %v1824, 8
      %v1861 = vpop.permute.xlu0 %1860
      %1862 = vrot.lane.b32.xlu0 %v1827, 8
      %v1863 = vpop.permute.xlu0 %1862
      %1864 = vrot.lane.b32.xlu0 %v1830, 8
      %v1865 = vpop.permute.xlu0 %1864
      %1866 = vrot.lane.b32.xlu0 %v1833, 8
      %v1867 = vpop.permute.xlu0 %1866
      %1868 = vrot.lane.b32.xlu0 %v1836, 8
      %v1869 = vpop.permute.xlu0 %1868
      %1870 = vrot.lane.b32.xlu0 %v1839, 8
      %v1871 = vpop.permute.xlu0 %1870
      %v1904 = vunpack.c.l.b16 %v1261
      %v1905 = vunpack.c.l.b16 %v1262
      %v1906 = vunpack.c.l.b16 %v1263
      %v1907 = vunpack.c.l.b16 %v1264
      %v1908 = vunpack.c.l.b16 %v1265
      %v1909 = vunpack.c.l.b16 %v1266
      %v1910 = vunpack.c.l.b16 %v1267
      %v1911 = vunpack.c.l.b16 %v1268
      %v1912 = vunpack.c.l.b16 %v1269
      %v1913 = vunpack.c.l.b16 %v1270
      %v1914 = vunpack.c.l.b16 %v1271
      %v1915 = vunpack.c.l.b16 %v1272
      %v1916 = vunpack.c.l.b16 %v1273
      %v1917 = vunpack.c.l.b16 %v1274
      %v1918 = vunpack.c.l.b16 %v1275
      %v1919 = vunpack.c.l.b16 %v1276
      %v1920 = vunpack.c.l.b16 %v1277
      %v1921 = vunpack.c.l.b16 %v1278
      %v1922 = vunpack.c.l.b16 %v1279
      %v1923 = vunpack.c.l.b16 %v1280
      %v1924 = vunpack.c.l.b16 %v1281
      %v1925 = vunpack.c.l.b16 %v1282
      %v1926 = vunpack.c.l.b16 %v1283
      %v1927 = vunpack.c.l.b16 %v1284
      %v1928 = vunpack.c.l.b16 %v1285
      %v1929 = vunpack.c.l.b16 %v1286
      %v1930 = vunpack.c.l.b16 %v1287
      %v1931 = vunpack.c.l.b16 %v1288
      %v1932 = vunpack.c.l.b16 %v1289
      %v1933 = vunpack.c.l.b16 %v1290
      %v1934 = vunpack.c.l.b16 %v1291
      %v1935 = vunpack.c.l.b16 %v1292
      %v1936 = vpack.c.b16 %v1905, %v1904
      %v1937 = vpack.c.b16 %v1907, %v1906
      %v1938 = vpack.c.b16 %v1909, %v1908
      %v1939 = vpack.c.b16 %v1911, %v1910
      %v1940 = vpack.c.b16 %v1913, %v1912
      %v1941 = vpack.c.b16 %v1915, %v1914
      %v1942 = vpack.c.b16 %v1917, %v1916
      %v1943 = vpack.c.b16 %v1919, %v1918
      %v1944 = vpack.c.b16 %v1921, %v1920
      %v1945 = vpack.c.b16 %v1923, %v1922
      %v1946 = vpack.c.b16 %v1925, %v1924
      %v1947 = vpack.c.b16 %v1927, %v1926
      %v1948 = vpack.c.b16 %v1929, %v1928
      %v1949 = vpack.c.b16 %v1931, %v1930
      %v1950 = vpack.c.b16 %v1933, %v1932
      %v1951 = vpack.c.b16 %v1935, %v1934
      %1952 = vrot.lane.b32.xlu0 %v1936, 12
      %v1953 = vpop.permute.xlu0 %1952
      %1954 = vrot.lane.b32.xlu0 %v1937, 12
      %v1955 = vpop.permute.xlu0 %1954
      %1956 = vrot.lane.b32.xlu0 %v1938, 12
      %v1957 = vpop.permute.xlu0 %1956
      %1958 = vrot.lane.b32.xlu0 %v1939, 12
      %v1959 = vpop.permute.xlu0 %1958
      %1960 = vrot.lane.b32.xlu0 %v1940, 12
      %v1961 = vpop.permute.xlu0 %1960
      %1962 = vrot.lane.b32.xlu0 %v1941, 12
      %v1963 = vpop.permute.xlu0 %1962
      %1964 = vrot.lane.b32.xlu0 %v1942, 12
      %v1965 = vpop.permute.xlu0 %1964
      %1966 = vrot.lane.b32.xlu0 %v1943, 12
      %v1967 = vpop.permute.xlu0 %1966
      %1968 = vrot.lane.b32.xlu0 %v1944, 12
      %v1969 = vpop.permute.xlu0 %1968
      %1970 = vrot.lane.b32.xlu0 %v1945, 12
      %v1971 = vpop.permute.xlu0 %1970
      %1972 = vrot.lane.b32.xlu0 %v1946, 12
      %v1973 = vpop.permute.xlu0 %1972
      %1974 = vrot.lane.b32.xlu0 %v1947, 12
      %v1975 = vpop.permute.xlu0 %1974
      %1976 = vrot.lane.b32.xlu0 %v1948, 12
      %v1977 = vpop.permute.xlu0 %1976
      %1978 = vrot.lane.b32.xlu0 %v1949, 12
      %v1979 = vpop.permute.xlu0 %1978
      %1980 = vrot.lane.b32.xlu0 %v1950, 12
      %v1981 = vpop.permute.xlu0 %1980
      %1982 = vrot.lane.b32.xlu0 %v1951, 12
      %v1983 = vpop.permute.xlu0 %1982
      %v2000 = vunpack.c.l.b16 %v1293
      %v2001 = vunpack.c.l.b16 %v1294
      %v2002 = vunpack.c.l.b16 %v1295
      %v2003 = vunpack.c.l.b16 %v1296
      %v2004 = vunpack.c.l.b16 %v1297
      %v2005 = vunpack.c.l.b16 %v1298
      %v2006 = vunpack.c.l.b16 %v1299
      %v2007 = vunpack.c.l.b16 %v1300
      %v2008 = vunpack.c.l.b16 %v1301
      %v2009 = vunpack.c.l.b16 %v1302
      %v2010 = vunpack.c.l.b16 %v1303
      %v2011 = vunpack.c.l.b16 %v1304
      %v2012 = vunpack.c.l.b16 %v1305
      %v2013 = vunpack.c.l.b16 %v1306
      %v2014 = vunpack.c.l.b16 %v1307
      %v2015 = vunpack.c.l.b16 %v1308
      %v2016 = vpack.c.b16 %v2000, %v2000
      %v2017 = vpack.c.b16 %v2001, %v2001
      %v2018 = vpack.c.b16 %v2002, %v2002
      %v2019 = vpack.c.b16 %v2003, %v2003
      %v2020 = vpack.c.b16 %v2004, %v2004
      %v2021 = vpack.c.b16 %v2005, %v2005
      %v2022 = vpack.c.b16 %v2006, %v2006
      %v2023 = vpack.c.b16 %v2007, %v2007
      %v2024 = vpack.c.b16 %v2008, %v2008
      %v2025 = vpack.c.b16 %v2009, %v2009
      %v2026 = vpack.c.b16 %v2010, %v2010
      %v2027 = vpack.c.b16 %v2011, %v2011
      %v2028 = vpack.c.b16 %v2012, %v2012
      %v2029 = vpack.c.b16 %v2013, %v2013
      %v2030 = vpack.c.b16 %v2014, %v2014
      %v2031 = vpack.c.b16 %v2015, %v2015
      %v2033 = vshrl.u32 %v1936, 16
      %v2035 = vshll.u32 %v1936, 16
      %v2037 = vrot.slane %v2035, 1
      %v2038 = vor.u32 %v2033, %v2037
      %v2040 = vshll.u32 %v2016, 16
      %v2042 = vrot.slane %v2040, 1
      %v2043 = vsel %vm1518, %v2038, %v2042
      %v2045 = vshrl.u32 %v1937, 16
      %v2047 = vshll.u32 %v1937, 16
      %v2049 = vrot.slane %v2047, 1
      %v2050 = vor.u32 %v2045, %v2049
      %v2052 = vshll.u32 %v2017, 16
      %v2054 = vrot.slane %v2052, 1
      %v2055 = vsel %vm1518, %v2050, %v2054
      %v2057 = vshrl.u32 %v1938, 16
      %v2059 = vshll.u32 %v1938, 16
      %v2061 = vrot.slane %v2059, 1
      %v2062 = vor.u32 %v2057, %v2061
      %v2064 = vshll.u32 %v2018, 16
      %v2066 = vrot.slane %v2064, 1
      %v2067 = vsel %vm1518, %v2062, %v2066
      %v2069 = vshrl.u32 %v1939, 16
      %v2071 = vshll.u32 %v1939, 16
      %v2073 = vrot.slane %v2071, 1
      %v2074 = vor.u32 %v2069, %v2073
      %v2076 = vshll.u32 %v2019, 16
      %v2078 = vrot.slane %v2076, 1
      %v2079 = vsel %vm1518, %v2074, %v2078
      %v2081 = vshrl.u32 %v1940, 16
      %v2083 = vshll.u32 %v1940, 16
      %v2085 = vrot.slane %v2083, 1
      %v2086 = vor.u32 %v2081, %v2085
      %v2088 = vshll.u32 %v2020, 16
      %v2090 = vrot.slane %v2088, 1
      %v2091 = vsel %vm1518, %v2086, %v2090
      %v2093 = vshrl.u32 %v1941, 16
      %v2095 = vshll.u32 %v1941, 16
      %v2097 = vrot.slane %v2095, 1
      %v2098 = vor.u32 %v2093, %v2097
      %v2100 = vshll.u32 %v2021, 16
      %v2102 = vrot.slane %v2100, 1
      %v2103 = vsel %vm1518, %v2098, %v2102
      %v2105 = vshrl.u32 %v1942, 16
      %v2107 = vshll.u32 %v1942, 16
      %v2109 = vrot.slane %v2107, 1
      %v2110 = vor.u32 %v2105, %v2109
      %v2112 = vshll.u32 %v2022, 16
      %v2114 = vrot.slane %v2112, 1
      %v2115 = vsel %vm1518, %v2110, %v2114
      %v2117 = vshrl.u32 %v1943, 16
      %v2119 = vshll.u32 %v1943, 16
      %v2121 = vrot.slane %v2119, 1
      %v2122 = vor.u32 %v2117, %v2121
      %v2124 = vshll.u32 %v2023, 16
      %v2126 = vrot.slane %v2124, 1
      %v2127 = vsel %vm1518, %v2122, %v2126
      %v2129 = vshrl.u32 %v1944, 16
      %v2131 = vshll.u32 %v1944, 16
      %v2133 = vrot.slane %v2131, 1
      %v2134 = vor.u32 %v2129, %v2133
      %v2136 = vshll.u32 %v2024, 16
      %v2138 = vrot.slane %v2136, 1
      %v2139 = vsel %vm1518, %v2134, %v2138
      %v2141 = vshrl.u32 %v1945, 16
      %v2143 = vshll.u32 %v1945, 16
      %v2145 = vrot.slane %v2143, 1
      %v2146 = vor.u32 %v2141, %v2145
      %v2148 = vshll.u32 %v2025, 16
      %v2150 = vrot.slane %v2148, 1
      %v2151 = vsel %vm1518, %v2146, %v2150
      %v2153 = vshrl.u32 %v1946, 16
      %v2155 = vshll.u32 %v1946, 16
      %v2157 = vrot.slane %v2155, 1
      %v2158 = vor.u32 %v2153, %v2157
      %v2160 = vshll.u32 %v2026, 16
      %v2162 = vrot.slane %v2160, 1
      %v2163 = vsel %vm1518, %v2158, %v2162
      %v2165 = vshrl.u32 %v1947, 16
      %v2167 = vshll.u32 %v1947, 16
      %v2169 = vrot.slane %v2167, 1
      %v2170 = vor.u32 %v2165, %v2169
      %v2172 = vshll.u32 %v2027, 16
      %v2174 = vrot.slane %v2172, 1
      %v2175 = vsel %vm1518, %v2170, %v2174
      %v2177 = vshrl.u32 %v1948, 16
      %v2179 = vshll.u32 %v1948, 16
      %v2181 = vrot.slane %v2179, 1
      %v2182 = vor.u32 %v2177, %v2181
      %v2184 = vshll.u32 %v2028, 16
      %v2186 = vrot.slane %v2184, 1
      %v2187 = vsel %vm1518, %v2182, %v2186
      %v2189 = vshrl.u32 %v1949, 16
      %v2191 = vshll.u32 %v1949, 16
      %v2193 = vrot.slane %v2191, 1
      %v2194 = vor.u32 %v2189, %v2193
      %v2196 = vshll.u32 %v2029, 16
      %v2198 = vrot.slane %v2196, 1
      %v2199 = vsel %vm1518, %v2194, %v2198
      %v2201 = vshrl.u32 %v1950, 16
      %v2203 = vshll.u32 %v1950, 16
      %v2205 = vrot.slane %v2203, 1
      %v2206 = vor.u32 %v2201, %v2205
      %v2208 = vshll.u32 %v2030, 16
      %v2210 = vrot.slane %v2208, 1
      %v2211 = vsel %vm1518, %v2206, %v2210
      %v2213 = vshrl.u32 %v1951, 16
      %v2215 = vshll.u32 %v1951, 16
      %v2217 = vrot.slane %v2215, 1
      %v2218 = vor.u32 %v2213, %v2217
      %v2220 = vshll.u32 %v2031, 16
      %v2222 = vrot.slane %v2220, 1
      %v2223 = vsel %vm1518, %v2218, %v2222
      %2224 = vrot.lane.b32.xlu0 %v2043, 16
      %v2225 = vpop.permute.xlu0 %2224
      %2226 = vrot.lane.b32.xlu0 %v2055, 16
      %v2227 = vpop.permute.xlu0 %2226
      %2228 = vrot.lane.b32.xlu0 %v2067, 16
      %v2229 = vpop.permute.xlu0 %2228
      %2230 = vrot.lane.b32.xlu0 %v2079, 16
      %v2231 = vpop.permute.xlu0 %2230
      %2232 = vrot.lane.b32.xlu0 %v2091, 16
      %v2233 = vpop.permute.xlu0 %2232
      %2234 = vrot.lane.b32.xlu0 %v2103, 16
      %v2235 = vpop.permute.xlu0 %2234
      %2236 = vrot.lane.b32.xlu0 %v2115, 16
      %v2237 = vpop.permute.xlu0 %2236
      %2238 = vrot.lane.b32.xlu0 %v2127, 16
      %v2239 = vpop.permute.xlu0 %2238
      %2240 = vrot.lane.b32.xlu0 %v2139, 16
      %v2241 = vpop.permute.xlu0 %2240
      %2242 = vrot.lane.b32.xlu0 %v2151, 16
      %v2243 = vpop.permute.xlu0 %2242
      %2244 = vrot.lane.b32.xlu0 %v2163, 16
      %v2245 = vpop.permute.xlu0 %2244
      %2246 = vrot.lane.b32.xlu0 %v2175, 16
      %v2247 = vpop.permute.xlu0 %2246
      %2248 = vrot.lane.b32.xlu0 %v2187, 16
      %v2249 = vpop.permute.xlu0 %2248
      %2250 = vrot.lane.b32.xlu0 %v2199, 16
      %v2251 = vpop.permute.xlu0 %2250
      %2252 = vrot.lane.b32.xlu0 %v2211, 16
      %v2253 = vpop.permute.xlu0 %2252
      %2254 = vrot.lane.b32.xlu0 %v2223, 16
      %v2255 = vpop.permute.xlu0 %2254
      %v2272 = vunpack.c.l.b16 %v1309
      %v2273 = vunpack.c.l.b16 %v1310
      %v2274 = vunpack.c.l.b16 %v1311
      %v2275 = vunpack.c.l.b16 %v1312
      %v2276 = vunpack.c.l.b16 %v1313
      %v2277 = vunpack.c.l.b16 %v1314
      %v2278 = vunpack.c.l.b16 %v1315
      %v2279 = vunpack.c.l.b16 %v1316
      %v2280 = vunpack.c.l.b16 %v1317
      %v2281 = vunpack.c.l.b16 %v1318
      %v2282 = vunpack.c.l.b16 %v1319
      %v2283 = vunpack.c.l.b16 %v1320
      %v2284 = vunpack.c.l.b16 %v1321
      %v2285 = vunpack.c.l.b16 %v1322
      %v2286 = vunpack.c.l.b16 %v1323
      %v2287 = vunpack.c.l.b16 %v1324
      %v2288 = vpack.c.b16 %v1905, %v2272
      %v2289 = vpack.c.b16 %v1907, %v2273
      %v2290 = vpack.c.b16 %v1909, %v2274
      %v2291 = vpack.c.b16 %v1911, %v2275
      %v2292 = vpack.c.b16 %v1913, %v2276
      %v2293 = vpack.c.b16 %v1915, %v2277
      %v2294 = vpack.c.b16 %v1917, %v2278
      %v2295 = vpack.c.b16 %v1919, %v2279
      %v2296 = vpack.c.b16 %v1921, %v2280
      %v2297 = vpack.c.b16 %v1923, %v2281
      %v2298 = vpack.c.b16 %v1925, %v2282
      %v2299 = vpack.c.b16 %v1927, %v2283
      %v2300 = vpack.c.b16 %v1929, %v2284
      %v2301 = vpack.c.b16 %v1931, %v2285
      %v2302 = vpack.c.b16 %v1933, %v2286
      %v2303 = vpack.c.b16 %v1935, %v2287
      %v2304 = vrot.slane %v2288, 1
      %v2305 = vrot.slane %v2016, 1
      %v2306 = vsel %vm1791, %v2304, %v2305
      %v2307 = vrot.slane %v2289, 1
      %v2308 = vrot.slane %v2017, 1
      %v2309 = vsel %vm1791, %v2307, %v2308
      %v2310 = vrot.slane %v2290, 1
      %v2311 = vrot.slane %v2018, 1
      %v2312 = vsel %vm1791, %v2310, %v2311
      %v2313 = vrot.slane %v2291, 1
      %v2314 = vrot.slane %v2019, 1
      %v2315 = vsel %vm1791, %v2313, %v2314
      %v2316 = vrot.slane %v2292, 1
      %v2317 = vrot.slane %v2020, 1
      %v2318 = vsel %vm1791, %v2316, %v2317
      %v2319 = vrot.slane %v2293, 1
      %v2320 = vrot.slane %v2021, 1
      %v2321 = vsel %vm1791, %v2319, %v2320
      %v2322 = vrot.slane %v2294, 1
      %v2323 = vrot.slane %v2022, 1
      %v2324 = vsel %vm1791, %v2322, %v2323
      %v2325 = vrot.slane %v2295, 1
      %v2326 = vrot.slane %v2023, 1
      %v2327 = vsel %vm1791, %v2325, %v2326
      %v2328 = vrot.slane %v2296, 1
      %v2329 = vrot.slane %v2024, 1
      %v2330 = vsel %vm1791, %v2328, %v2329
      %v2331 = vrot.slane %v2297, 1
      %v2332 = vrot.slane %v2025, 1
      %v2333 = vsel %vm1791, %v2331, %v2332
      %v2334 = vrot.slane %v2298, 1
      %v2335 = vrot.slane %v2026, 1
      %v2336 = vsel %vm1791, %v2334, %v2335
      %v2337 = vrot.slane %v2299, 1
      %v2338 = vrot.slane %v2027, 1
      %v2339 = vsel %vm1791, %v2337, %v2338
      %v2340 = vrot.slane %v2300, 1
      %v2341 = vrot.slane %v2028, 1
      %v2342 = vsel %vm1791, %v2340, %v2341
      %v2343 = vrot.slane %v2301, 1
      %v2344 = vrot.slane %v2029, 1
      %v2345 = vsel %vm1791, %v2343, %v2344
      %v2346 = vrot.slane %v2302, 1
      %v2347 = vrot.slane %v2030, 1
      %v2348 = vsel %vm1791, %v2346, %v2347
      %v2349 = vrot.slane %v2303, 1
      %v2350 = vrot.slane %v2031, 1
      %v2351 = vsel %vm1791, %v2349, %v2350
      %2352 = vrot.lane.b32.xlu0 %v2306, 20
      %v2353 = vpop.permute.xlu0 %2352
      %2354 = vrot.lane.b32.xlu0 %v2309, 20
      %v2355 = vpop.permute.xlu0 %2354
      %2356 = vrot.lane.b32.xlu0 %v2312, 20
      %v2357 = vpop.permute.xlu0 %2356
      %2358 = vrot.lane.b32.xlu0 %v2315, 20
      %v2359 = vpop.permute.xlu0 %2358
      %2360 = vrot.lane.b32.xlu0 %v2318, 20
      %v2361 = vpop.permute.xlu0 %2360
      %2362 = vrot.lane.b32.xlu0 %v2321, 20
      %v2363 = vpop.permute.xlu0 %2362
      %2364 = vrot.lane.b32.xlu0 %v2324, 20
      %v2365 = vpop.permute.xlu0 %2364
      %2366 = vrot.lane.b32.xlu0 %v2327, 20
      %v2367 = vpop.permute.xlu0 %2366
      %2368 = vrot.lane.b32.xlu0 %v2330, 20
      %v2369 = vpop.permute.xlu0 %2368
      %2370 = vrot.lane.b32.xlu0 %v2333, 20
      %v2371 = vpop.permute.xlu0 %2370
      %2372 = vrot.lane.b32.xlu0 %v2336, 20
      %v2373 = vpop.permute.xlu0 %2372
      %2374 = vrot.lane.b32.xlu0 %v2339, 20
      %v2375 = vpop.permute.xlu0 %2374
      %2376 = vrot.lane.b32.xlu0 %v2342, 20
      %v2377 = vpop.permute.xlu0 %2376
      %2378 = vrot.lane.b32.xlu0 %v2345, 20
      %v2379 = vpop.permute.xlu0 %2378
      %2380 = vrot.lane.b32.xlu0 %v2348, 20
      %v2381 = vpop.permute.xlu0 %2380
      %2382 = vrot.lane.b32.xlu0 %v2351, 20
      %v2383 = vpop.permute.xlu0 %2382
      %v2416 = vunpack.c.l.b16 %v1326
      %v2417 = vunpack.c.l.b16 %v1327
      %v2418 = vunpack.c.l.b16 %v1328
      %v2419 = vunpack.c.l.b16 %v1329
      %v2420 = vunpack.c.l.b16 %v1330
      %v2421 = vunpack.c.l.b16 %v1331
      %v2422 = vunpack.c.l.b16 %v1332
      %v2423 = vunpack.c.l.b16 %v1333
      %v2424 = vunpack.c.l.b16 %v1334
      %v2425 = vunpack.c.l.b16 %v1335
      %v2426 = vunpack.c.l.b16 %v1336
      %v2427 = vunpack.c.l.b16 %v1337
      %v2428 = vunpack.c.l.b16 %v1338
      %v2429 = vunpack.c.l.b16 %v1339
      %v2430 = vunpack.c.l.b16 %v1340
      %v2431 = vunpack.c.l.b16 %v1341
      %v2432 = vunpack.c.l.b16 %v1342
      %v2433 = vunpack.c.l.b16 %v1343
      %v2434 = vunpack.c.l.b16 %v1344
      %v2435 = vunpack.c.l.b16 %v1345
      %v2436 = vunpack.c.l.b16 %v1346
      %v2437 = vunpack.c.l.b16 %v1347
      %v2438 = vunpack.c.l.b16 %v1348
      %v2439 = vunpack.c.l.b16 %v1349
      %v2440 = vunpack.c.l.b16 %v1350
      %v2441 = vunpack.c.l.b16 %v1351
      %v2442 = vunpack.c.l.b16 %v1352
      %v2443 = vunpack.c.l.b16 %v1353
      %v2444 = vunpack.c.l.b16 %v1354
      %v2445 = vunpack.c.l.b16 %v1355
      %v2446 = vunpack.c.l.b16 %v1356
      %v2447 = vunpack.c.l.b16 %v1357
      %v2448 = vpack.c.b16 %v2417, %v2416
      %v2449 = vpack.c.b16 %v2419, %v2418
      %v2450 = vpack.c.b16 %v2421, %v2420
      %v2451 = vpack.c.b16 %v2423, %v2422
      %v2452 = vpack.c.b16 %v2425, %v2424
      %v2453 = vpack.c.b16 %v2427, %v2426
      %v2454 = vpack.c.b16 %v2429, %v2428
      %v2455 = vpack.c.b16 %v2431, %v2430
      %v2456 = vpack.c.b16 %v2433, %v2432
      %v2457 = vpack.c.b16 %v2435, %v2434
      %v2458 = vpack.c.b16 %v2437, %v2436
      %v2459 = vpack.c.b16 %v2439, %v2438
      %v2460 = vpack.c.b16 %v2441, %v2440
      %v2461 = vpack.c.b16 %v2443, %v2442
      %v2462 = vpack.c.b16 %v2445, %v2444
      %v2463 = vpack.c.b16 %v2447, %v2446
      %2464 = vrot.lane.b32.xlu0 %v2448, 24
      %v2465 = vpop.permute.xlu0 %2464
      %2466 = vrot.lane.b32.xlu0 %v2449, 24
      %v2467 = vpop.permute.xlu0 %2466
      %2468 = vrot.lane.b32.xlu0 %v2450, 24
      %v2469 = vpop.permute.xlu0 %2468
      %2470 = vrot.lane.b32.xlu0 %v2451, 24
      %v2471 = vpop.permute.xlu0 %2470
      %2472 = vrot.lane.b32.xlu0 %v2452, 24
      %v2473 = vpop.permute.xlu0 %2472
      %2474 = vrot.lane.b32.xlu0 %v2453, 24
      %v2475 = vpop.permute.xlu0 %2474
      %2476 = vrot.lane.b32.xlu0 %v2454, 24
      %v2477 = vpop.permute.xlu0 %2476
      %2478 = vrot.lane.b32.xlu0 %v2455, 24
      %v2479 = vpop.permute.xlu0 %2478
      %2480 = vrot.lane.b32.xlu0 %v2456, 24
      %v2481 = vpop.permute.xlu0 %2480
      %2482 = vrot.lane.b32.xlu0 %v2457, 24
      %v2483 = vpop.permute.xlu0 %2482
      %2484 = vrot.lane.b32.xlu0 %v2458, 24
      %v2485 = vpop.permute.xlu0 %2484
      %2486 = vrot.lane.b32.xlu0 %v2459, 24
      %v2487 = vpop.permute.xlu0 %2486
      %2488 = vrot.lane.b32.xlu0 %v2460, 24
      %v2489 = vpop.permute.xlu0 %2488
      %2490 = vrot.lane.b32.xlu0 %v2461, 24
      %v2491 = vpop.permute.xlu0 %2490
      %2492 = vrot.lane.b32.xlu0 %v2462, 24
      %v2493 = vpop.permute.xlu0 %2492
      %2494 = vrot.lane.b32.xlu0 %v2463, 24
      %v2495 = vpop.permute.xlu0 %2494
      %v2512 = vunpack.c.l.b16 %v1358
      %v2513 = vunpack.c.l.b16 %v1359
      %v2514 = vunpack.c.l.b16 %v1360
      %v2515 = vunpack.c.l.b16 %v1361
      %v2516 = vunpack.c.l.b16 %v1362
      %v2517 = vunpack.c.l.b16 %v1363
      %v2518 = vunpack.c.l.b16 %v1364
      %v2519 = vunpack.c.l.b16 %v1365
      %v2520 = vunpack.c.l.b16 %v1366
      %v2521 = vunpack.c.l.b16 %v1367
      %v2522 = vunpack.c.l.b16 %v1368
      %v2523 = vunpack.c.l.b16 %v1369
      %v2524 = vunpack.c.l.b16 %v1370
      %v2525 = vunpack.c.l.b16 %v1371
      %v2526 = vunpack.c.l.b16 %v1372
      %v2527 = vunpack.c.l.b16 %v1373
      %v2528 = vpack.c.b16 %v2512, %v2512
      %v2529 = vpack.c.b16 %v2513, %v2513
      %v2530 = vpack.c.b16 %v2514, %v2514
      %v2531 = vpack.c.b16 %v2515, %v2515
      %v2532 = vpack.c.b16 %v2516, %v2516
      %v2533 = vpack.c.b16 %v2517, %v2517
      %v2534 = vpack.c.b16 %v2518, %v2518
      %v2535 = vpack.c.b16 %v2519, %v2519
      %v2536 = vpack.c.b16 %v2520, %v2520
      %v2537 = vpack.c.b16 %v2521, %v2521
      %v2538 = vpack.c.b16 %v2522, %v2522
      %v2539 = vpack.c.b16 %v2523, %v2523
      %v2540 = vpack.c.b16 %v2524, %v2524
      %v2541 = vpack.c.b16 %v2525, %v2525
      %v2542 = vpack.c.b16 %v2526, %v2526
      %v2543 = vpack.c.b16 %v2527, %v2527
      %v2545 = vshrl.u32 %v2448, 16
      %v2547 = vshll.u32 %v2448, 16
      %v2549 = vrot.slane %v2547, 1
      %v2550 = vor.u32 %v2545, %v2549
      %v2552 = vshll.u32 %v2528, 16
      %v2554 = vrot.slane %v2552, 1
      %v2555 = vsel %vm1518, %v2550, %v2554
      %v2557 = vshrl.u32 %v2449, 16
      %v2559 = vshll.u32 %v2449, 16
      %v2561 = vrot.slane %v2559, 1
      %v2562 = vor.u32 %v2557, %v2561
      %v2564 = vshll.u32 %v2529, 16
      %v2566 = vrot.slane %v2564, 1
      %v2567 = vsel %vm1518, %v2562, %v2566
      %v2569 = vshrl.u32 %v2450, 16
      %v2571 = vshll.u32 %v2450, 16
      %v2573 = vrot.slane %v2571, 1
      %v2574 = vor.u32 %v2569, %v2573
      %v2576 = vshll.u32 %v2530, 16
      %v2578 = vrot.slane %v2576, 1
      %v2579 = vsel %vm1518, %v2574, %v2578
      %v2581 = vshrl.u32 %v2451, 16
      %v2583 = vshll.u32 %v2451, 16
      %v2585 = vrot.slane %v2583, 1
      %v2586 = vor.u32 %v2581, %v2585
      %v2588 = vshll.u32 %v2531, 16
      %v2590 = vrot.slane %v2588, 1
      %v2591 = vsel %vm1518, %v2586, %v2590
      %v2593 = vshrl.u32 %v2452, 16
      %v2595 = vshll.u32 %v2452, 16
      %v2597 = vrot.slane %v2595, 1
      %v2598 = vor.u32 %v2593, %v2597
      %v2600 = vshll.u32 %v2532, 16
      %v2602 = vrot.slane %v2600, 1
      %v2603 = vsel %vm1518, %v2598, %v2602
      %v2605 = vshrl.u32 %v2453, 16
      %v2607 = vshll.u32 %v2453, 16
      %v2609 = vrot.slane %v2607, 1
      %v2610 = vor.u32 %v2605, %v2609
      %v2612 = vshll.u32 %v2533, 16
      %v2614 = vrot.slane %v2612, 1
      %v2615 = vsel %vm1518, %v2610, %v2614
      %v2617 = vshrl.u32 %v2454, 16
      %v2619 = vshll.u32 %v2454, 16
      %v2621 = vrot.slane %v2619, 1
      %v2622 = vor.u32 %v2617, %v2621
      %v2624 = vshll.u32 %v2534, 16
      %v2626 = vrot.slane %v2624, 1
      %v2627 = vsel %vm1518, %v2622, %v2626
      %v2629 = vshrl.u32 %v2455, 16
      %v2631 = vshll.u32 %v2455, 16
      %v2633 = vrot.slane %v2631, 1
      %v2634 = vor.u32 %v2629, %v2633
      %v2636 = vshll.u32 %v2535, 16
      %v2638 = vrot.slane %v2636, 1
      %v2639 = vsel %vm1518, %v2634, %v2638
      %v2641 = vshrl.u32 %v2456, 16
      %v2643 = vshll.u32 %v2456, 16
      %v2645 = vrot.slane %v2643, 1
      %v2646 = vor.u32 %v2641, %v2645
      %v2648 = vshll.u32 %v2536, 16
      %v2650 = vrot.slane %v2648, 1
      %v2651 = vsel %vm1518, %v2646, %v2650
      %v2653 = vshrl.u32 %v2457, 16
      %v2655 = vshll.u32 %v2457, 16
      %v2657 = vrot.slane %v2655, 1
      %v2658 = vor.u32 %v2653, %v2657
      %v2660 = vshll.u32 %v2537, 16
      %v2662 = vrot.slane %v2660, 1
      %v2663 = vsel %vm1518, %v2658, %v2662
      %v2665 = vshrl.u32 %v2458, 16
      %v2667 = vshll.u32 %v2458, 16
      %v2669 = vrot.slane %v2667, 1
      %v2670 = vor.u32 %v2665, %v2669
      %v2672 = vshll.u32 %v2538, 16
      %v2674 = vrot.slane %v2672, 1
      %v2675 = vsel %vm1518, %v2670, %v2674
      %v2677 = vshrl.u32 %v2459, 16
      %v2679 = vshll.u32 %v2459, 16
      %v2681 = vrot.slane %v2679, 1
      %v2682 = vor.u32 %v2677, %v2681
      %v2684 = vshll.u32 %v2539, 16
      %v2686 = vrot.slane %v2684, 1
      %v2687 = vsel %vm1518, %v2682, %v2686
      %v2689 = vshrl.u32 %v2460, 16
      %v2691 = vshll.u32 %v2460, 16
      %v2693 = vrot.slane %v2691, 1
      %v2694 = vor.u32 %v2689, %v2693
      %v2696 = vshll.u32 %v2540, 16
      %v2698 = vrot.slane %v2696, 1
      %v2699 = vsel %vm1518, %v2694, %v2698
      %v2701 = vshrl.u32 %v2461, 16
      %v2703 = vshll.u32 %v2461, 16
      %v2705 = vrot.slane %v2703, 1
      %v2706 = vor.u32 %v2701, %v2705
      %v2708 = vshll.u32 %v2541, 16
      %v2710 = vrot.slane %v2708, 1
      %v2711 = vsel %vm1518, %v2706, %v2710
      %v2713 = vshrl.u32 %v2462, 16
      %v2715 = vshll.u32 %v2462, 16
      %v2717 = vrot.slane %v2715, 1
      %v2718 = vor.u32 %v2713, %v2717
      %v2720 = vshll.u32 %v2542, 16
      %v2722 = vrot.slane %v2720, 1
      %v2723 = vsel %vm1518, %v2718, %v2722
      %v2725 = vshrl.u32 %v2463, 16
      %v2727 = vshll.u32 %v2463, 16
      %v2729 = vrot.slane %v2727, 1
      %v2730 = vor.u32 %v2725, %v2729
      %v2732 = vshll.u32 %v2543, 16
      %v2734 = vrot.slane %v2732, 1
      %v2735 = vsel %vm1518, %v2730, %v2734
      %2736 = vrot.lane.b32.xlu0 %v2555, 28
      %v2737 = vpop.permute.xlu0 %2736
      %2738 = vrot.lane.b32.xlu0 %v2567, 28
      %v2739 = vpop.permute.xlu0 %2738
      %2740 = vrot.lane.b32.xlu0 %v2579, 28
      %v2741 = vpop.permute.xlu0 %2740
      %2742 = vrot.lane.b32.xlu0 %v2591, 28
      %v2743 = vpop.permute.xlu0 %2742
      %2744 = vrot.lane.b32.xlu0 %v2603, 28
      %v2745 = vpop.permute.xlu0 %2744
      %2746 = vrot.lane.b32.xlu0 %v2615, 28
      %v2747 = vpop.permute.xlu0 %2746
      %2748 = vrot.lane.b32.xlu0 %v2627, 28
      %v2749 = vpop.permute.xlu0 %2748
      %2750 = vrot.lane.b32.xlu0 %v2639, 28
      %v2751 = vpop.permute.xlu0 %2750
      %2752 = vrot.lane.b32.xlu0 %v2651, 28
      %v2753 = vpop.permute.xlu0 %2752
      %2754 = vrot.lane.b32.xlu0 %v2663, 28
      %v2755 = vpop.permute.xlu0 %2754
      %2756 = vrot.lane.b32.xlu0 %v2675, 28
      %v2757 = vpop.permute.xlu0 %2756
      %2758 = vrot.lane.b32.xlu0 %v2687, 28
      %v2759 = vpop.permute.xlu0 %2758
      %2760 = vrot.lane.b32.xlu0 %v2699, 28
      %v2761 = vpop.permute.xlu0 %2760
      %2762 = vrot.lane.b32.xlu0 %v2711, 28
      %v2763 = vpop.permute.xlu0 %2762
      %2764 = vrot.lane.b32.xlu0 %v2723, 28
      %v2765 = vpop.permute.xlu0 %2764
      %2766 = vrot.lane.b32.xlu0 %v2735, 28
      %v2767 = vpop.permute.xlu0 %2766
      %v2784 = vunpack.c.l.b16 %v1374
      %v2785 = vunpack.c.l.b16 %v1375
      %v2786 = vunpack.c.l.b16 %v1376
      %v2787 = vunpack.c.l.b16 %v1377
      %v2788 = vunpack.c.l.b16 %v1378
      %v2789 = vunpack.c.l.b16 %v1379
      %v2790 = vunpack.c.l.b16 %v1380
      %v2791 = vunpack.c.l.b16 %v1381
      %v2792 = vunpack.c.l.b16 %v1382
      %v2793 = vunpack.c.l.b16 %v1383
      %v2794 = vunpack.c.l.b16 %v1384
      %v2795 = vunpack.c.l.b16 %v1385
      %v2796 = vunpack.c.l.b16 %v1386
      %v2797 = vunpack.c.l.b16 %v1387
      %v2798 = vunpack.c.l.b16 %v1388
      %v2799 = vunpack.c.l.b16 %v1389
      %v2800 = vpack.c.b16 %v2417, %v2784
      %v2801 = vpack.c.b16 %v2419, %v2785
      %v2802 = vpack.c.b16 %v2421, %v2786
      %v2803 = vpack.c.b16 %v2423, %v2787
      %v2804 = vpack.c.b16 %v2425, %v2788
      %v2805 = vpack.c.b16 %v2427, %v2789
      %v2806 = vpack.c.b16 %v2429, %v2790
      %v2807 = vpack.c.b16 %v2431, %v2791
      %v2808 = vpack.c.b16 %v2433, %v2792
      %v2809 = vpack.c.b16 %v2435, %v2793
      %v2810 = vpack.c.b16 %v2437, %v2794
      %v2811 = vpack.c.b16 %v2439, %v2795
      %v2812 = vpack.c.b16 %v2441, %v2796
      %v2813 = vpack.c.b16 %v2443, %v2797
      %v2814 = vpack.c.b16 %v2445, %v2798
      %v2815 = vpack.c.b16 %v2447, %v2799
      %v2816 = vrot.slane %v2800, 1
      %v2817 = vrot.slane %v2528, 1
      %v2818 = vsel %vm1791, %v2816, %v2817
      %v2819 = vrot.slane %v2801, 1
      %v2820 = vrot.slane %v2529, 1
      %v2821 = vsel %vm1791, %v2819, %v2820
      %v2822 = vrot.slane %v2802, 1
      %v2823 = vrot.slane %v2530, 1
      %v2824 = vsel %vm1791, %v2822, %v2823
      %v2825 = vrot.slane %v2803, 1
      %v2826 = vrot.slane %v2531, 1
      %v2827 = vsel %vm1791, %v2825, %v2826
      %v2828 = vrot.slane %v2804, 1
      %v2829 = vrot.slane %v2532, 1
      %v2830 = vsel %vm1791, %v2828, %v2829
      %v2831 = vrot.slane %v2805, 1
      %v2832 = vrot.slane %v2533, 1
      %v2833 = vsel %vm1791, %v2831, %v2832
      %v2834 = vrot.slane %v2806, 1
      %v2835 = vrot.slane %v2534, 1
      %v2836 = vsel %vm1791, %v2834, %v2835
      %v2837 = vrot.slane %v2807, 1
      %v2838 = vrot.slane %v2535, 1
      %v2839 = vsel %vm1791, %v2837, %v2838
      %v2840 = vrot.slane %v2808, 1
      %v2841 = vrot.slane %v2536, 1
      %v2842 = vsel %vm1791, %v2840, %v2841
      %v2843 = vrot.slane %v2809, 1
      %v2844 = vrot.slane %v2537, 1
      %v2845 = vsel %vm1791, %v2843, %v2844
      %v2846 = vrot.slane %v2810, 1
      %v2847 = vrot.slane %v2538, 1
      %v2848 = vsel %vm1791, %v2846, %v2847
      %v2849 = vrot.slane %v2811, 1
      %v2850 = vrot.slane %v2539, 1
      %v2851 = vsel %vm1791, %v2849, %v2850
      %v2852 = vrot.slane %v2812, 1
      %v2853 = vrot.slane %v2540, 1
      %v2854 = vsel %vm1791, %v2852, %v2853
      %v2855 = vrot.slane %v2813, 1
      %v2856 = vrot.slane %v2541, 1
      %v2857 = vsel %vm1791, %v2855, %v2856
      %v2858 = vrot.slane %v2814, 1
      %v2859 = vrot.slane %v2542, 1
      %v2860 = vsel %vm1791, %v2858, %v2859
      %v2861 = vrot.slane %v2815, 1
      %v2862 = vrot.slane %v2543, 1
      %v2863 = vsel %vm1791, %v2861, %v2862
      %2864 = vrot.lane.b32.xlu0 %v2818, 32
      %v2865 = vpop.permute.xlu0 %2864
      %2866 = vrot.lane.b32.xlu0 %v2821, 32
      %v2867 = vpop.permute.xlu0 %2866
      %2868 = vrot.lane.b32.xlu0 %v2824, 32
      %v2869 = vpop.permute.xlu0 %2868
      %2870 = vrot.lane.b32.xlu0 %v2827, 32
      %v2871 = vpop.permute.xlu0 %2870
      %2872 = vrot.lane.b32.xlu0 %v2830, 32
      %v2873 = vpop.permute.xlu0 %2872
      %2874 = vrot.lane.b32.xlu0 %v2833, 32
      %v2875 = vpop.permute.xlu0 %2874
      %2876 = vrot.lane.b32.xlu0 %v2836, 32
      %v2877 = vpop.permute.xlu0 %2876
      %2878 = vrot.lane.b32.xlu0 %v2839, 32
      %v2879 = vpop.permute.xlu0 %2878
      %2880 = vrot.lane.b32.xlu0 %v2842, 32
      %v2881 = vpop.permute.xlu0 %2880
      %2882 = vrot.lane.b32.xlu0 %v2845, 32
      %v2883 = vpop.permute.xlu0 %2882
      %2884 = vrot.lane.b32.xlu0 %v2848, 32
      %v2885 = vpop.permute.xlu0 %2884
      %2886 = vrot.lane.b32.xlu0 %v2851, 32
      %v2887 = vpop.permute.xlu0 %2886
      %2888 = vrot.lane.b32.xlu0 %v2854, 32
      %v2889 = vpop.permute.xlu0 %2888
      %2890 = vrot.lane.b32.xlu0 %v2857, 32
      %v2891 = vpop.permute.xlu0 %2890
      %2892 = vrot.lane.b32.xlu0 %v2860, 32
      %v2893 = vpop.permute.xlu0 %2892
      %2894 = vrot.lane.b32.xlu0 %v2863, 32
      %v2895 = vpop.permute.xlu0 %2894
      %vm2896 = vcmask 31744
      %v2898 = vsel %vm2896, %v1454, %v1712
      %v2900 = vsel %vm2896, %v1455, %v1714
      %v2902 = vsel %vm2896, %v1456, %v1716
      %v2904 = vsel %vm2896, %v1457, %v1718
      %v2906 = vsel %vm2896, %v1458, %v1720
      %v2908 = vsel %vm2896, %v1459, %v1722
      %v2910 = vsel %vm2896, %v1460, %v1724
      %v2912 = vsel %vm2896, %v1461, %v1726
      %v2914 = vsel %vm2896, %v1462, %v1728
      %v2916 = vsel %vm2896, %v1463, %v1730
      %v2918 = vsel %vm2896, %v1464, %v1732
      %v2920 = vsel %vm2896, %v1465, %v1734
      %v2922 = vsel %vm2896, %v1466, %v1736
      %v2924 = vsel %vm2896, %v1467, %v1738
      %v2926 = vsel %vm2896, %v1468, %v1740
      %v2928 = vsel %vm2896, %v1469, %v1742
      %vm2929 = vcmask 64512
      %v2931 = vsel %vm2929, %v2898, %v1841
      %v2933 = vsel %vm2929, %v2900, %v1843
      %v2935 = vsel %vm2929, %v2902, %v1845
      %v2937 = vsel %vm2929, %v2904, %v1847
      %v2939 = vsel %vm2929, %v2906, %v1849
      %v2941 = vsel %vm2929, %v2908, %v1851
      %v2943 = vsel %vm2929, %v2910, %v1853
      %v2945 = vsel %vm2929, %v2912, %v1855
      %v2947 = vsel %vm2929, %v2914, %v1857
      %v2949 = vsel %vm2929, %v2916, %v1859
      %v2951 = vsel %vm2929, %v2918, %v1861
      %v2953 = vsel %vm2929, %v2920, %v1863
      %v2955 = vsel %vm2929, %v2922, %v1865
      %v2957 = vsel %vm2929, %v2924, %v1867
      %v2959 = vsel %vm2929, %v2926, %v1869
      %v2961 = vsel %vm2929, %v2928, %v1871
      %vm2962 = vcmask 97280
      %v2964 = vsel %vm2962, %v2931, %v1953
      %v2966 = vsel %vm2962, %v2933, %v1955
      %v2968 = vsel %vm2962, %v2935, %v1957
      %v2970 = vsel %vm2962, %v2937, %v1959
      %v2972 = vsel %vm2962, %v2939, %v1961
      %v2974 = vsel %vm2962, %v2941, %v1963
      %v2976 = vsel %vm2962, %v2943, %v1965
      %v2978 = vsel %vm2962, %v2945, %v1967
      %v2980 = vsel %vm2962, %v2947, %v1969
      %v2982 = vsel %vm2962, %v2949, %v1971
      %v2984 = vsel %vm2962, %v2951, %v1973
      %v2986 = vsel %vm2962, %v2953, %v1975
      %v2988 = vsel %vm2962, %v2955, %v1977
      %v2990 = vsel %vm2962, %v2957, %v1979
      %v2992 = vsel %vm2962, %v2959, %v1981
      %v2994 = vsel %vm2962, %v2961, %v1983
      %vm2995 = vcmask 130048
      %v2997 = vsel %vm2995, %v2964, %v2225
      %v2999 = vsel %vm2995, %v2966, %v2227
      %v3001 = vsel %vm2995, %v2968, %v2229
      %v3003 = vsel %vm2995, %v2970, %v2231
      %v3005 = vsel %vm2995, %v2972, %v2233
      %v3007 = vsel %vm2995, %v2974, %v2235
      %v3009 = vsel %vm2995, %v2976, %v2237
      %v3011 = vsel %vm2995, %v2978, %v2239
      %v3013 = vsel %vm2995, %v2980, %v2241
      %v3015 = vsel %vm2995, %v2982, %v2243
      %v3017 = vsel %vm2995, %v2984, %v2245
      %v3019 = vsel %vm2995, %v2986, %v2247
      %v3021 = vsel %vm2995, %v2988, %v2249
      %v3023 = vsel %vm2995, %v2990, %v2251
      %v3025 = vsel %vm2995, %v2992, %v2253
      %v3027 = vsel %vm2995, %v2994, %v2255
      %vm3028 = vcmask 162816
      %v3030 = vsel %vm3028, %v2997, %v2353
      %v3032 = vsel %vm3028, %v2999, %v2355
      %v3034 = vsel %vm3028, %v3001, %v2357
      %v3036 = vsel %vm3028, %v3003, %v2359
      %v3038 = vsel %vm3028, %v3005, %v2361
      %v3040 = vsel %vm3028, %v3007, %v2363
      %v3042 = vsel %vm3028, %v3009, %v2365
      %v3044 = vsel %vm3028, %v3011, %v2367
      %v3046 = vsel %vm3028, %v3013, %v2369
      %v3048 = vsel %vm3028, %v3015, %v2371
      %v3050 = vsel %vm3028, %v3017, %v2373
      %v3052 = vsel %vm3028, %v3019, %v2375
      %v3054 = vsel %vm3028, %v3021, %v2377
      %v3056 = vsel %vm3028, %v3023, %v2379
      %v3058 = vsel %vm3028, %v3025, %v2381
      %v3060 = vsel %vm3028, %v3027, %v2383
      %vm3061 = vcmask 195584
      %v3063 = vsel %vm3061, %v3030, %v2465
      %v3065 = vsel %vm3061, %v3032, %v2467
      %v3067 = vsel %vm3061, %v3034, %v2469
      %v3069 = vsel %vm3061, %v3036, %v2471
      %v3071 = vsel %vm3061, %v3038, %v2473
      %v3073 = vsel %vm3061, %v3040, %v2475
      %v3075 = vsel %vm3061, %v3042, %v2477
      %v3077 = vsel %vm3061, %v3044, %v2479
      %v3079 = vsel %vm3061, %v3046, %v2481
      %v3081 = vsel %vm3061, %v3048, %v2483
      %v3083 = vsel %vm3061, %v3050, %v2485
      %v3085 = vsel %vm3061, %v3052, %v2487
      %v3087 = vsel %vm3061, %v3054, %v2489
      %v3089 = vsel %vm3061, %v3056, %v2491
      %v3091 = vsel %vm3061, %v3058, %v2493
      %v3093 = vsel %vm3061, %v3060, %v2495
      %vm3094 = vcmask 228352
      %v3096 = vsel %vm3094, %v3063, %v2737
      %v3098 = vsel %vm3094, %v3065, %v2739
      %v3100 = vsel %vm3094, %v3067, %v2741
      %v3102 = vsel %vm3094, %v3069, %v2743
      %v3104 = vsel %vm3094, %v3071, %v2745
      %v3106 = vsel %vm3094, %v3073, %v2747
      %v3108 = vsel %vm3094, %v3075, %v2749
      %v3110 = vsel %vm3094, %v3077, %v2751
      %v3112 = vsel %vm3094, %v3079, %v2753
      %v3114 = vsel %vm3094, %v3081, %v2755
      %v3116 = vsel %vm3094, %v3083, %v2757
      %v3118 = vsel %vm3094, %v3085, %v2759
      %v3120 = vsel %vm3094, %v3087, %v2761
      %v3122 = vsel %vm3094, %v3089, %v2763
      %v3124 = vsel %vm3094, %v3091, %v2765
      %v3126 = vsel %vm3094, %v3093, %v2767
      %vm3127 = vcmask 261120
      %v3129 = vsel %vm3127, %v3096, %v2865
      %v3131 = vsel %vm3127, %v3098, %v2867
      %v3133 = vsel %vm3127, %v3100, %v2869
      %v3135 = vsel %vm3127, %v3102, %v2871
      %v3137 = vsel %vm3127, %v3104, %v2873
      %v3139 = vsel %vm3127, %v3106, %v2875
      %v3141 = vsel %vm3127, %v3108, %v2877
      %v3143 = vsel %vm3127, %v3110, %v2879
      %v3145 = vsel %vm3127, %v3112, %v2881
      %v3147 = vsel %vm3127, %v3114, %v2883
      %v3149 = vsel %vm3127, %v3116, %v2885
      %v3151 = vsel %vm3127, %v3118, %v2887
      %v3153 = vsel %vm3127, %v3120, %v2889
      %v3155 = vsel %vm3127, %v3122, %v2891
      %v3157 = vsel %vm3127, %v3124, %v2893
      %v3159 = vsel %vm3127, %v3126, %v2895
      %v3160 = vld [vmem:[%s1] sm:$0xf]
      %v3161 = vld [vmem:[%s1 + $0x4] sm:$0xf]
      %v3162 = vld [vmem:[%s1 + $0x8] sm:$0xf]
      %v3163 = vld [vmem:[%s1 + $0xc] sm:$0xf]
      %v3164 = vld [vmem:[%s1 + $0x10] sm:$0x3]
      %v3165 = vld [vmem:[%s5] sm:$0x1]
      %v3167 = vlaneseq
      %v3168 = vshrl.u32 %v3167, 7
      %v3169 = vsub.s32 0, %v3168
      %v3170 = vrot.slane %v3165, %v3169
      %v3177 = vunpack.c.l.b16 %v3160
      %v3178 = vunpack.c.l.b16 %v3161
      %v3179 = vunpack.c.l.b16 %v3162
      %v3180 = vunpack.c.l.b16 %v3163
      %v3181 = vunpack.c.l.b16 %v3164
      %v3182 = vpack.c.b16 %v3178, %v3177
      %v3183 = vpack.c.b16 %v3180, %v3179
      %v3184 = vpack.c.b16 %v3181, %v3181
      %vm3187 = vcmask 293888
      %v3188 = vsel %vm3187, %v3129, 0
      %v3190 = vsel %vm3187, %v3131, 0
      %v3192 = vsel %vm3187, %v3133, 0
      %v3194 = vsel %vm3187, %v3135, 0
      %v3196 = vsel %vm3187, %v3137, 0
      %v3198 = vsel %vm3187, %v3139, 0
      %v3200 = vsel %vm3187, %v3141, 0
      %v3202 = vsel %vm3187, %v3143, 0
      %v3204 = vsel %vm3187, %v3145, 0
      %v3206 = vsel %vm3187, %v3147, 0
      %v3208 = vsel %vm3187, %v3149, 0
      %v3210 = vsel %vm3187, %v3151, 0
      %v3212 = vsel %vm3187, %v3153, 0
      %v3214 = vsel %vm3187, %v3155, 0
      %v3216 = vsel %vm3187, %v3157, 0
      %v3218 = vsel %vm3187, %v3159, 0
      %vm3220 = vcmask 1041408
      %v3222 = vsel %vm3220, %v3184, 0
      %3224 = vmatprep.subr.bf16.mxu0 0
      %3225 = vmatpush1.bf16.msra.mxu0 %v3182
      %3226 = vmatprep.subr.bf16.mxu0 0
      %3227 = vmatpush1.bf16.msra.mxu0 %v3183
      %3228 = vmatprep.subr.bf16.mxu0 0
      %3229 = vmatpush1.bf16.msra.mxu0 %v3222
      %3230 = vmatprep.subr.bf16.mxu0 0
      %3231 = vmatpush1.bf16.msra.mxu0 0
      %3232 = vmatprep.subr.bf16.mxu0 0
      %3233 = vmatpush1.bf16.msra.mxu0 0
      %3234 = vmatprep.subr.bf16.mxu0 0
      %3235 = vmatpush1.bf16.msra.mxu0 0
      %3236 = vmatprep.subr.bf16.mxu0 0
      %3237 = vmatpush1.bf16.msra.mxu0 0
      %3238 = vmatprep.subr.bf16.mxu0 0
      %3239 = vmatpush1.bf16.msra.mxu0 0
      %3240 = vmatprep.subr.bf16.mxu0 0
      %3241 = vmatpush1.bf16.msra.mxu0 0
      %3242 = vmatprep.subr.bf16.mxu0 0
      %3243 = vmatpush1.bf16.msra.mxu0 0
      %3244 = vmatprep.subr.bf16.mxu0 0
      %3245 = vmatpush1.bf16.msra.mxu0 0
      %3246 = vmatprep.subr.bf16.mxu0 0
      %3247 = vmatpush1.bf16.msra.mxu0 0
      %3248 = vmatprep.subr.bf16.mxu0 0
      %3249 = vmatpush1.bf16.msra.mxu0 0
      %3250 = vmatprep.subr.bf16.mxu0 0
      %3251 = vmatpush1.bf16.msra.mxu0 0
      %3252 = vmatprep.subr.bf16.mxu0 0
      %3253 = vmatpush1.bf16.msra.mxu0 0
      %3254 = vmatprep.subr.bf16.mxu0 0
      %3255 = vmatpush1.bf16.msra.mxu0 0
      %3256 = vmatprep.mubr.bf16.mxu0 0
      %3257 = vmatmul.mubr.bf16.gmra.mrb[0].mxu0 %v3188
      %v3258 = vpop.f32.mrb[0].mxu0
      %v3259 = vadd.f32 %v3170, %v3258
      %v3260 = vpop.f32.mrb[0].mxu0
      %v3261 = vpop.f32.mrb[0].mxu0
      %v3262 = vadd.f32 %v3170, %v3261
      %v3263 = vpop.f32.mrb[0].mxu0
      %3264 = vmatprep.mubr.bf16.mxu0 0
      %3265 = vmatmul.mubr.bf16.gmra.mrb[0].mxu0 %v3190
      %v3266 = vpop.f32.mrb[0].mxu0
      %v3267 = vadd.f32 %v3170, %v3266
      %v3268 = vpop.f32.mrb[0].mxu0
      %v3269 = vpop.f32.mrb[0].mxu0
      %v3270 = vadd.f32 %v3170, %v3269
      %v3271 = vpop.f32.mrb[0].mxu0
      %3272 = vmatprep.mubr.bf16.mxu0 0
      %3273 = vmatmul.mubr.bf16.gmra.mrb[0].mxu0 %v3192
      %v3274 = vpop.f32.mrb[0].mxu0
      %v3275 = vadd.f32 %v3170, %v3274
      %v3276 = vpop.f32.mrb[0].mxu0
      %v3277 = vpop.f32.mrb[0].mxu0
      %v3278 = vadd.f32 %v3170, %v3277
      %v3279 = vpop.f32.mrb[0].mxu0
      %3280 = vmatprep.mubr.bf16.mxu0 0
      %3281 = vmatmul.mubr.bf16.gmra.mrb[0].mxu0 %v3194
      %v3282 = vpop.f32.mrb[0].mxu0
      %v3283 = vadd.f32 %v3170, %v3282
      %v3284 = vpop.f32.mrb[0].mxu0
      %v3285 = vpop.f32.mrb[0].mxu0
      %v3286 = vadd.f32 %v3170, %v3285
      %v3287 = vpop.f32.mrb[0].mxu0
      %3288 = vmatprep.mubr.bf16.mxu0 0
      %3289 = vmatmul.mubr.bf16.gmra.mrb[0].mxu0 %v3196
      %v3290 = vpop.f32.mrb[0].mxu0
      %v3291 = vadd.f32 %v3170, %v3290
      %v3292 = vpop.f32.mrb[0].mxu0
      %v3293 = vpop.f32.mrb[0].mxu0
      %v3294 = vadd.f32 %v3170, %v3293
      %v3295 = vpop.f32.mrb[0].mxu0
      %3296 = vmatprep.mubr.bf16.mxu0 0
      %3297 = vmatmul.mubr.bf16.gmra.mrb[0].mxu0 %v3198
      %v3298 = vpop.f32.mrb[0].mxu0
      %v3299 = vadd.f32 %v3170, %v3298
      %v3300 = vpop.f32.mrb[0].mxu0
      %v3301 = vpop.f32.mrb[0].mxu0
      %v3302 = vadd.f32 %v3170, %v3301
      %v3303 = vpop.f32.mrb[0].mxu0
      %3304 = vmatprep.mubr.bf16.mxu0 0
      %3305 = vmatmul.mubr.bf16.gmra.mrb[0].mxu0 %v3200
      %v3306 = vpop.f32.mrb[0].mxu0
      %v3307 = vadd.f32 %v3170, %v3306
      %v3308 = vpop.f32.mrb[0].mxu0
      %v3309 = vpop.f32.mrb[0].mxu0
      %v3310 = vadd.f32 %v3170, %v3309
      %v3311 = vpop.f32.mrb[0].mxu0
      %3312 = vmatprep.mubr.bf16.mxu0 0
      %3313 = vmatmul.mubr.bf16.gmra.mrb[0].mxu0 %v3202
      %v3314 = vpop.f32.mrb[0].mxu0
      %v3315 = vadd.f32 %v3170, %v3314
      %v3316 = vpop.f32.mrb[0].mxu0
      %v3317 = vpop.f32.mrb[0].mxu0
      %v3318 = vadd.f32 %v3170, %v3317
      %v3319 = vpop.f32.mrb[0].mxu0
      %3320 = vmatprep.mubr.bf16.mxu0 0
      %3321 = vmatmul.mubr.bf16.gmra.mrb[0].mxu0 %v3204
      %v3322 = vpop.f32.mrb[0].mxu0
      %v3323 = vadd.f32 %v3170, %v3322
      %v3324 = vpop.f32.mrb[0].mxu0
      %v3325 = vpop.f32.mrb[0].mxu0
      %v3326 = vadd.f32 %v3170, %v3325
      %v3327 = vpop.f32.mrb[0].mxu0
      %3328 = vmatprep.mubr.bf16.mxu0 0
      %3329 = vmatmul.mubr.bf16.gmra.mrb[0].mxu0 %v3206
      %v3330 = vpop.f32.mrb[0].mxu0
      %v3331 = vadd.f32 %v3170, %v3330
      %v3332 = vpop.f32.mrb[0].mxu0
      %v3333 = vpop.f32.mrb[0].mxu0
      %v3334 = vadd.f32 %v3170, %v3333
      %v3335 = vpop.f32.mrb[0].mxu0
      %3336 = vmatprep.mubr.bf16.mxu0 0
      %3337 = vmatmul.mubr.bf16.gmra.mrb[0].mxu0 %v3208
      %v3338 = vpop.f32.mrb[0].mxu0
      %v3339 = vadd.f32 %v3170, %v3338
      %v3340 = vpop.f32.mrb[0].mxu0
      %v3341 = vpop.f32.mrb[0].mxu0
      %v3342 = vadd.f32 %v3170, %v3341
      %v3343 = vpop.f32.mrb[0].mxu0
      %3344 = vmatprep.mubr.bf16.mxu0 0
      %3345 = vmatmul.mubr.bf16.gmra.mrb[0].mxu0 %v3210
      %v3346 = vpop.f32.mrb[0].mxu0
      %v3347 = vadd.f32 %v3170, %v3346
      %v3348 = vpop.f32.mrb[0].mxu0
      %v3349 = vpop.f32.mrb[0].mxu0
      %v3350 = vadd.f32 %v3170, %v3349
      %v3351 = vpop.f32.mrb[0].mxu0
      %3352 = vmatprep.mubr.bf16.mxu0 0
      %3353 = vmatmul.mubr.bf16.gmra.mrb[0].mxu0 %v3212
      %v3354 = vpop.f32.mrb[0].mxu0
      %v3355 = vadd.f32 %v3170, %v3354
      %v3356 = vpop.f32.mrb[0].mxu0
      %v3357 = vpop.f32.mrb[0].mxu0
      %v3358 = vadd.f32 %v3170, %v3357
      %v3359 = vpop.f32.mrb[0].mxu0
      %3360 = vmatprep.mubr.bf16.mxu0 0
      %3361 = vmatmul.mubr.bf16.gmra.mrb[0].mxu0 %v3214
      %v3362 = vpop.f32.mrb[0].mxu0
      %v3363 = vadd.f32 %v3170, %v3362
      %v3364 = vpop.f32.mrb[0].mxu0
      %v3365 = vpop.f32.mrb[0].mxu0
      %v3366 = vadd.f32 %v3170, %v3365
      %v3367 = vpop.f32.mrb[0].mxu0
      %3368 = vmatprep.mubr.bf16.mxu0 0
      %3369 = vmatmul.mubr.bf16.gmra.mrb[0].mxu0 %v3216
      %v3370 = vpop.f32.mrb[0].mxu0
      %v3371 = vadd.f32 %v3170, %v3370
      %v3372 = vpop.f32.mrb[0].mxu0
      %v3373 = vpop.f32.mrb[0].mxu0
      %v3374 = vadd.f32 %v3170, %v3373
      %v3375 = vpop.f32.mrb[0].mxu0
      %3376 = vmatprep.mubr.bf16.mxu0 0
      %3377 = vmatmul.mubr.bf16.gmra.mrb[0].mxu0 %v3218
      %v3378 = vpop.f32.mrb[0].mxu0
      %v3379 = vadd.f32 %v3170, %v3378
      %v3380 = vpop.f32.mrb[0].mxu0
      %v3381 = vpop.f32.mrb[0].mxu0
      %v3382 = vadd.f32 %v3170, %v3381
      %v3383 = vpop.f32.mrb[0].mxu0
      %3384 = vdwg.mxu0
      %v3385 = vmax.f32 %v3259, 0.0
      %v3386 = vmax.f32 %v3262, 0.0
      %v3387 = vmax.f32 %v3267, 0.0
      %v3388 = vmax.f32 %v3270, 0.0
      %v3389 = vmax.f32 %v3275, 0.0
      %v3390 = vmax.f32 %v3278, 0.0
      %v3391 = vmax.f32 %v3283, 0.0
      %v3392 = vmax.f32 %v3286, 0.0
      %v3393 = vmax.f32 %v3291, 0.0
      %v3394 = vmax.f32 %v3294, 0.0
      %v3395 = vmax.f32 %v3299, 0.0
      %v3396 = vmax.f32 %v3302, 0.0
      %v3397 = vmax.f32 %v3307, 0.0
      %v3398 = vmax.f32 %v3310, 0.0
      %v3399 = vmax.f32 %v3315, 0.0
      %v3400 = vmax.f32 %v3318, 0.0
      %v3401 = vmax.f32 %v3323, 0.0
      %v3402 = vmax.f32 %v3326, 0.0
      %v3403 = vmax.f32 %v3331, 0.0
      %v3404 = vmax.f32 %v3334, 0.0
      %v3405 = vmax.f32 %v3339, 0.0
      %v3406 = vmax.f32 %v3342, 0.0
      %v3407 = vmax.f32 %v3347, 0.0
      %v3408 = vmax.f32 %v3350, 0.0
      %v3409 = vmax.f32 %v3355, 0.0
      %v3410 = vmax.f32 %v3358, 0.0
      %v3411 = vmax.f32 %v3363, 0.0
      %v3412 = vmax.f32 %v3366, 0.0
      %v3413 = vmax.f32 %v3371, 0.0
      %v3414 = vmax.f32 %v3374, 0.0
      %v3415 = vmax.f32 %v3379, 0.0
      %v3416 = vmax.f32 %v3382, 0.0
      %v3417 = vpack.c.bf16 %v3386, %v3385
      %v3418 = vpack.c.bf16 %v3388, %v3387
      %v3419 = vpack.c.bf16 %v3390, %v3389
      %v3420 = vpack.c.bf16 %v3392, %v3391
      %v3421 = vpack.c.bf16 %v3394, %v3393
      %v3422 = vpack.c.bf16 %v3396, %v3395
      %v3423 = vpack.c.bf16 %v3398, %v3397
      %v3424 = vpack.c.bf16 %v3400, %v3399
      %v3425 = vpack.c.bf16 %v3402, %v3401
      %v3426 = vpack.c.bf16 %v3404, %v3403
      %v3427 = vpack.c.bf16 %v3406, %v3405
      %v3428 = vpack.c.bf16 %v3408, %v3407
      %v3429 = vpack.c.bf16 %v3410, %v3409
      %v3430 = vpack.c.bf16 %v3412, %v3411
      %v3431 = vpack.c.bf16 %v3414, %v3413
      %v3432 = vpack.c.bf16 %v3416, %v3415
      %v3449 = vunpack.c.l.b16 %v3417
      %v3450 = vunpack.c.h.b16 %v3417
      %v3451 = vunpack.c.l.b16 %v3418
      %v3452 = vunpack.c.h.b16 %v3418
      %v3453 = vunpack.c.l.b16 %v3419
      %v3454 = vunpack.c.h.b16 %v3419
      %v3455 = vunpack.c.l.b16 %v3420
      %v3456 = vunpack.c.h.b16 %v3420
      %v3457 = vunpack.c.l.b16 %v3421
      %v3458 = vunpack.c.h.b16 %v3421
      %v3459 = vunpack.c.l.b16 %v3422
      %v3460 = vunpack.c.h.b16 %v3422
      %v3461 = vunpack.c.l.b16 %v3423
      %v3462 = vunpack.c.h.b16 %v3423
      %v3463 = vunpack.c.l.b16 %v3424
      %v3464 = vunpack.c.h.b16 %v3424
      %v3465 = vunpack.c.l.b16 %v3425
      %v3466 = vunpack.c.h.b16 %v3425
      %v3467 = vunpack.c.l.b16 %v3426
      %v3468 = vunpack.c.h.b16 %v3426
      %v3469 = vunpack.c.l.b16 %v3427
      %v3470 = vunpack.c.h.b16 %v3427
      %v3471 = vunpack.c.l.b16 %v3428
      %v3472 = vunpack.c.h.b16 %v3428
      %v3473 = vunpack.c.l.b16 %v3429
      %v3474 = vunpack.c.h.b16 %v3429
      %v3475 = vunpack.c.l.b16 %v3430
      %v3476 = vunpack.c.h.b16 %v3430
      %v3477 = vunpack.c.l.b16 %v3431
      %v3478 = vunpack.c.h.b16 %v3431
      %v3479 = vunpack.c.l.b16 %v3432
      %v3480 = vunpack.c.h.b16 %v3432
      %v3481 = vpack.c.b16 %v3449, %v3449
      %v3482 = vpack.c.b16 %v3450, %v3450
      %v3483 = vpack.c.b16 %v3451, %v3451
      %v3484 = vpack.c.b16 %v3452, %v3452
      %v3485 = vpack.c.b16 %v3453, %v3453
      %v3486 = vpack.c.b16 %v3454, %v3454
      %v3487 = vpack.c.b16 %v3455, %v3455
      %v3488 = vpack.c.b16 %v3456, %v3456
      %v3489 = vpack.c.b16 %v3457, %v3457
      %v3490 = vpack.c.b16 %v3458, %v3458
      %v3491 = vpack.c.b16 %v3459, %v3459
      %v3492 = vpack.c.b16 %v3460, %v3460
      %v3493 = vpack.c.b16 %v3461, %v3461
      %v3494 = vpack.c.b16 %v3462, %v3462
      %v3495 = vpack.c.b16 %v3463, %v3463
      %v3496 = vpack.c.b16 %v3464, %v3464
      %v3497 = vpack.c.b16 %v3465, %v3465
      %v3498 = vpack.c.b16 %v3466, %v3466
      %v3499 = vpack.c.b16 %v3467, %v3467
      %v3500 = vpack.c.b16 %v3468, %v3468
      %v3501 = vpack.c.b16 %v3469, %v3469
      %v3502 = vpack.c.b16 %v3470, %v3470
      %v3503 = vpack.c.b16 %v3471, %v3471
      %v3504 = vpack.c.b16 %v3472, %v3472
      %v3505 = vpack.c.b16 %v3473, %v3473
      %v3506 = vpack.c.b16 %v3474, %v3474
      %v3507 = vpack.c.b16 %v3475, %v3475
      %v3508 = vpack.c.b16 %v3476, %v3476
      %v3509 = vpack.c.b16 %v3477, %v3477
      %v3510 = vpack.c.b16 %v3478, %v3478
      %v3511 = vpack.c.b16 %v3479, %v3479
      %v3512 = vpack.c.b16 %v3480, %v3480
      %v3514 = vshrl.u32 %v3481, 16
      %v3516 = vrot.slane %v3514, 7
      %v3517 = vshll.u32 %v3481, 16
      %v3519 = vor.u32 %v3516, %v3517
      %v3520 = vrot.slane %v3516, 4
      %v3522 = vshrl.u32 %v3482, 16
      %v3524 = vrot.slane %v3522, 7
      %v3525 = vshll.u32 %v3482, 16
      %v3527 = vor.u32 %v3524, %v3525
      %v3528 = vsel %vm761, %v3520, %v3527
      %v3529 = vrot.slane %v3524, 4
      %v3531 = vshrl.u32 %v3483, 16
      %v3533 = vrot.slane %v3531, 7
      %v3534 = vshll.u32 %v3483, 16
      %v3536 = vor.u32 %v3533, %v3534
      %v3537 = vrot.slane %v3533, 4
      %v3539 = vshrl.u32 %v3484, 16
      %v3541 = vrot.slane %v3539, 7
      %v3542 = vshll.u32 %v3484, 16
      %v3544 = vor.u32 %v3541, %v3542
      %v3545 = vsel %vm761, %v3537, %v3544
      %v3546 = vrot.slane %v3541, 4
      %v3548 = vshrl.u32 %v3485, 16
      %v3550 = vrot.slane %v3548, 7
      %v3551 = vshll.u32 %v3485, 16
      %v3553 = vor.u32 %v3550, %v3551
      %v3554 = vrot.slane %v3550, 4
      %v3556 = vshrl.u32 %v3486, 16
      %v3558 = vrot.slane %v3556, 7
      %v3559 = vshll.u32 %v3486, 16
      %v3561 = vor.u32 %v3558, %v3559
      %v3562 = vsel %vm761, %v3554, %v3561
      %v3563 = vrot.slane %v3558, 4
      %v3565 = vshrl.u32 %v3487, 16
      %v3567 = vrot.slane %v3565, 7
      %v3568 = vshll.u32 %v3487, 16
      %v3570 = vor.u32 %v3567, %v3568
      %v3571 = vrot.slane %v3567, 4
      %v3573 = vshrl.u32 %v3488, 16
      %v3575 = vrot.slane %v3573, 7
      %v3576 = vshll.u32 %v3488, 16
      %v3578 = vor.u32 %v3575, %v3576
      %v3579 = vsel %vm761, %v3571, %v3578
      %v3580 = vrot.slane %v3575, 4
      %v3582 = vshrl.u32 %v3489, 16
      %v3584 = vrot.slane %v3582, 7
      %v3585 = vshll.u32 %v3489, 16
      %v3587 = vor.u32 %v3584, %v3585
      %v3588 = vrot.slane %v3584, 4
      %v3590 = vshrl.u32 %v3490, 16
      %v3592 = vrot.slane %v3590, 7
      %v3593 = vshll.u32 %v3490, 16
      %v3595 = vor.u32 %v3592, %v3593
      %v3596 = vsel %vm761, %v3588, %v3595
      %v3597 = vrot.slane %v3592, 4
      %v3599 = vshrl.u32 %v3491, 16
      %v3601 = vrot.slane %v3599, 7
      %v3602 = vshll.u32 %v3491, 16
      %v3604 = vor.u32 %v3601, %v3602
      %v3605 = vrot.slane %v3601, 4
      %v3607 = vshrl.u32 %v3492, 16
      %v3609 = vrot.slane %v3607, 7
      %v3610 = vshll.u32 %v3492, 16
      %v3612 = vor.u32 %v3609, %v3610
      %v3613 = vsel %vm761, %v3605, %v3612
      %v3614 = vrot.slane %v3609, 4
      %v3616 = vshrl.u32 %v3493, 16
      %v3618 = vrot.slane %v3616, 7
      %v3619 = vshll.u32 %v3493, 16
      %v3621 = vor.u32 %v3618, %v3619
      %v3622 = vrot.slane %v3618, 4
      %v3624 = vshrl.u32 %v3494, 16
      %v3626 = vrot.slane %v3624, 7
      %v3627 = vshll.u32 %v3494, 16
      %v3629 = vor.u32 %v3626, %v3627
      %v3630 = vsel %vm761, %v3622, %v3629
      %v3631 = vrot.slane %v3626, 4
      %v3633 = vshrl.u32 %v3495, 16
      %v3635 = vrot.slane %v3633, 7
      %v3636 = vshll.u32 %v3495, 16
      %v3638 = vor.u32 %v3635, %v3636
      %v3639 = vrot.slane %v3635, 4
      %v3641 = vshrl.u32 %v3496, 16
      %v3643 = vrot.slane %v3641, 7
      %v3644 = vshll.u32 %v3496, 16
      %v3646 = vor.u32 %v3643, %v3644
      %v3647 = vsel %vm761, %v3639, %v3646
      %v3648 = vrot.slane %v3643, 4
      %v3650 = vshrl.u32 %v3497, 16
      %v3652 = vrot.slane %v3650, 7
      %v3653 = vshll.u32 %v3497, 16
      %v3655 = vor.u32 %v3652, %v3653
      %v3656 = vrot.slane %v3652, 4
      %v3658 = vshrl.u32 %v3498, 16
      %v3660 = vrot.slane %v3658, 7
      %v3661 = vshll.u32 %v3498, 16
      %v3663 = vor.u32 %v3660, %v3661
      %v3664 = vsel %vm761, %v3656, %v3663
      %v3665 = vrot.slane %v3660, 4
      %v3667 = vshrl.u32 %v3499, 16
      %v3669 = vrot.slane %v3667, 7
      %v3670 = vshll.u32 %v3499, 16
      %v3672 = vor.u32 %v3669, %v3670
      %v3673 = vrot.slane %v3669, 4
      %v3675 = vshrl.u32 %v3500, 16
      %v3677 = vrot.slane %v3675, 7
      %v3678 = vshll.u32 %v3500, 16
      %v3680 = vor.u32 %v3677, %v3678
      %v3681 = vsel %vm761, %v3673, %v3680
      %v3682 = vrot.slane %v3677, 4
      %v3684 = vshrl.u32 %v3501, 16
      %v3686 = vrot.slane %v3684, 7
      %v3687 = vshll.u32 %v3501, 16
      %v3689 = vor.u32 %v3686, %v3687
      %v3690 = vrot.slane %v3686, 4
      %v3692 = vshrl.u32 %v3502, 16
      %v3694 = vrot.slane %v3692, 7
      %v3695 = vshll.u32 %v3502, 16
      %v3697 = vor.u32 %v3694, %v3695
      %v3698 = vsel %vm761, %v3690, %v3697
      %v3699 = vrot.slane %v3694, 4
      %v3701 = vshrl.u32 %v3503, 16
      %v3703 = vrot.slane %v3701, 7
      %v3704 = vshll.u32 %v3503, 16
      %v3706 = vor.u32 %v3703, %v3704
      %v3707 = vrot.slane %v3703, 4
      %v3709 = vshrl.u32 %v3504, 16
      %v3711 = vrot.slane %v3709, 7
      %v3712 = vshll.u32 %v3504, 16
      %v3714 = vor.u32 %v3711, %v3712
      %v3715 = vsel %vm761, %v3707, %v3714
      %v3716 = vrot.slane %v3711, 4
      %v3718 = vshrl.u32 %v3505, 16
      %v3720 = vrot.slane %v3718, 7
      %v3721 = vshll.u32 %v3505, 16
      %v3723 = vor.u32 %v3720, %v3721
      %v3724 = vrot.slane %v3720, 4
      %v3726 = vshrl.u32 %v3506, 16
      %v3728 = vrot.slane %v3726, 7
      %v3729 = vshll.u32 %v3506, 16
      %v3731 = vor.u32 %v3728, %v3729
      %v3732 = vsel %vm761, %v3724, %v3731
      %v3733 = vrot.slane %v3728, 4
      %v3735 = vshrl.u32 %v3507, 16
      %v3737 = vrot.slane %v3735, 7
      %v3738 = vshll.u32 %v3507, 16
      %v3740 = vor.u32 %v3737, %v3738
      %v3741 = vrot.slane %v3737, 4
      %v3743 = vshrl.u32 %v3508, 16
      %v3745 = vrot.slane %v3743, 7
      %v3746 = vshll.u32 %v3508, 16
      %v3748 = vor.u32 %v3745, %v3746
      %v3749 = vsel %vm761, %v3741, %v3748
      %v3750 = vrot.slane %v3745, 4
      %v3752 = vshrl.u32 %v3509, 16
      %v3754 = vrot.slane %v3752, 7
      %v3755 = vshll.u32 %v3509, 16
      %v3757 = vor.u32 %v3754, %v3755
      %v3758 = vrot.slane %v3754, 4
      %v3760 = vshrl.u32 %v3510, 16
      %v3762 = vrot.slane %v3760, 7
      %v3763 = vshll.u32 %v3510, 16
      %v3765 = vor.u32 %v3762, %v3763
      %v3766 = vsel %vm761, %v3758, %v3765
      %v3767 = vrot.slane %v3762, 4
      %v3769 = vshrl.u32 %v3511, 16
      %v3771 = vrot.slane %v3769, 7
      %v3772 = vshll.u32 %v3511, 16
      %v3774 = vor.u32 %v3771, %v3772
      %v3775 = vrot.slane %v3771, 4
      %v3777 = vshrl.u32 %v3512, 16
      %v3779 = vrot.slane %v3777, 7
      %v3780 = vshll.u32 %v3512, 16
      %v3782 = vor.u32 %v3779, %v3780
      %v3783 = vsel %vm761, %v3775, %v3782
      %v3784 = vrot.slane %v3779, 4
      %s3833 = scalar_lea.vmem [#allocation3], 12
      %v3834 = vld [vmem:[%s3833] sm:$0xf]
      %v3835 = vsel %vm1084, %v3519, %v3834
      %3836 = vst [vmem:[%s3833] sm:$0xf] %v3835
      %3837 = vst.msk [vmem:[%s3833 + $0x4] sm:$0xf] %vm253, %v3528
      %v3838 = vld [vmem:[%s3833 + $0x8] sm:$0x1]
      %v3839 = vsel %vm264, %v3529, %v3838
      %3840 = vst [vmem:[%s3833 + $0x8] sm:$0x1] %v3839
      %v3841 = vld [vmem:[%s3833 + $0xc] sm:$0xf]
      %v3842 = vsel %vm1084, %v3536, %v3841
      %3843 = vst [vmem:[%s3833 + $0xc] sm:$0xf] %v3842
      %3844 = vst.msk [vmem:[%s3833 + $0x10] sm:$0xf] %vm253, %v3545
      %v3845 = vld [vmem:[%s3833 + $0x14] sm:$0x1]
      %v3846 = vsel %vm264, %v3546, %v3845
      %3847 = vst [vmem:[%s3833 + $0x14] sm:$0x1] %v3846
      %v3848 = vld [vmem:[%s3833 + $0x18] sm:$0xf]
      %v3849 = vsel %vm1084, %v3553, %v3848
      %3850 = vst [vmem:[%s3833 + $0x18] sm:$0xf] %v3849
      %3851 = vst.msk [vmem:[%s3833 + $0x1c] sm:$0xf] %vm253, %v3562
      %v3852 = vld [vmem:[%s3833 + $0x20] sm:$0x1]
      %v3853 = vsel %vm264, %v3563, %v3852
      %3854 = vst [vmem:[%s3833 + $0x20] sm:$0x1] %v3853
      %v3855 = vld [vmem:[%s3833 + $0x24] sm:$0xf]
      %v3856 = vsel %vm1084, %v3570, %v3855
      %3857 = vst [vmem:[%s3833 + $0x24] sm:$0xf] %v3856
      %3858 = vst.msk [vmem:[%s3833 + $0x28] sm:$0xf] %vm253, %v3579
      %v3859 = vld [vmem:[%s3833 + $0x2c] sm:$0x1]
      %v3860 = vsel %vm264, %v3580, %v3859
      %3861 = vst [vmem:[%s3833 + $0x2c] sm:$0x1] %v3860
      %v3862 = vld [vmem:[%s3833 + $0x30] sm:$0xf]
      %v3863 = vsel %vm1084, %v3587, %v3862
      %3864 = vst [vmem:[%s3833 + $0x30] sm:$0xf] %v3863
      %3865 = vst.msk [vmem:[%s3833 + $0x34] sm:$0xf] %vm253, %v3596
      %v3866 = vld [vmem:[%s3833 + $0x38] sm:$0x1]
      %v3867 = vsel %vm264, %v3597, %v3866
      %3868 = vst [vmem:[%s3833 + $0x38] sm:$0x1] %v3867
      %v3869 = vld [vmem:[%s3833 + $0x3c] sm:$0xf]
      %v3870 = vsel %vm1084, %v3604, %v3869
      %3871 = vst [vmem:[%s3833 + $0x3c] sm:$0xf] %v3870
      %3872 = vst.msk [vmem:[%s3833 + $0x40] sm:$0xf] %vm253, %v3613
      %v3873 = vld [vmem:[%s3833 + $0x44] sm:$0x1]
      %v3874 = vsel %vm264, %v3614, %v3873
      %3875 = vst [vmem:[%s3833 + $0x44] sm:$0x1] %v3874
      %v3876 = vld [vmem:[%s3833 + $0x48] sm:$0xf]
      %v3877 = vsel %vm1084, %v3621, %v3876
      %3878 = vst [vmem:[%s3833 + $0x48] sm:$0xf] %v3877
      %3879 = vst.msk [vmem:[%s3833 + $0x4c] sm:$0xf] %vm253, %v3630
      %v3880 = vld [vmem:[%s3833 + $0x50] sm:$0x1]
      %v3881 = vsel %vm264, %v3631, %v3880
      %3882 = vst [vmem:[%s3833 + $0x50] sm:$0x1] %v3881
      %v3883 = vld [vmem:[%s3833 + $0x54] sm:$0xf]
      %v3884 = vsel %vm1084, %v3638, %v3883
      %3885 = vst [vmem:[%s3833 + $0x54] sm:$0xf] %v3884
      %3886 = vst.msk [vmem:[%s3833 + $0x58] sm:$0xf] %vm253, %v3647
      %v3887 = vld [vmem:[%s3833 + $0x5c] sm:$0x1]
      %v3888 = vsel %vm264, %v3648, %v3887
      %3889 = vst [vmem:[%s3833 + $0x5c] sm:$0x1] %v3888
      %v3890 = vld [vmem:[%s3833 + $0x60] sm:$0xf]
      %v3891 = vsel %vm1084, %v3655, %v3890
      %3892 = vst [vmem:[%s3833 + $0x60] sm:$0xf] %v3891
      %3893 = vst.msk [vmem:[%s3833 + $0x64] sm:$0xf] %vm253, %v3664
      %v3894 = vld [vmem:[%s3833 + $0x68] sm:$0x1]
      %v3895 = vsel %vm264, %v3665, %v3894
      %3896 = vst [vmem:[%s3833 + $0x68] sm:$0x1] %v3895
      %v3897 = vld [vmem:[%s3833 + $0x6c] sm:$0xf]
      %v3898 = vsel %vm1084, %v3672, %v3897
      %3899 = vst [vmem:[%s3833 + $0x6c] sm:$0xf] %v3898
      %3900 = vst.msk [vmem:[%s3833 + $0x70] sm:$0xf] %vm253, %v3681
      %v3901 = vld [vmem:[%s3833 + $0x74] sm:$0x1]
      %v3902 = vsel %vm264, %v3682, %v3901
      %3903 = vst [vmem:[%s3833 + $0x74] sm:$0x1] %v3902
      %v3904 = vld [vmem:[%s3833 + $0x78] sm:$0xf]
      %v3905 = vsel %vm1084, %v3689, %v3904
      %3906 = vst [vmem:[%s3833 + $0x78] sm:$0xf] %v3905
      %3907 = vst.msk [vmem:[%s3833 + $0x7c] sm:$0xf] %vm253, %v3698
      %v3908 = vld [vmem:[%s3833 + $0x80] sm:$0x1]
      %v3909 = vsel %vm264, %v3699, %v3908
      %3910 = vst [vmem:[%s3833 + $0x80] sm:$0x1] %v3909
      %v3911 = vld [vmem:[%s3833 + $0x84] sm:$0xf]
      %v3912 = vsel %vm1084, %v3706, %v3911
      %3913 = vst [vmem:[%s3833 + $0x84] sm:$0xf] %v3912
      %3914 = vst.msk [vmem:[%s3833 + $0x88] sm:$0xf] %vm253, %v3715
      %v3915 = vld [vmem:[%s3833 + $0x8c] sm:$0x1]
      %v3916 = vsel %vm264, %v3716, %v3915
      %3917 = vst [vmem:[%s3833 + $0x8c] sm:$0x1] %v3916
      %v3918 = vld [vmem:[%s3833 + $0x90] sm:$0xf]
      %v3919 = vsel %vm1084, %v3723, %v3918
      %3920 = vst [vmem:[%s3833 + $0x90] sm:$0xf] %v3919
      %3921 = vst.msk [vmem:[%s3833 + $0x94] sm:$0xf] %vm253, %v3732
      %v3922 = vld [vmem:[%s3833 + $0x98] sm:$0x1]
      %v3923 = vsel %vm264, %v3733, %v3922
      %3924 = vst [vmem:[%s3833 + $0x98] sm:$0x1] %v3923
      %v3925 = vld [vmem:[%s3833 + $0x9c] sm:$0xf]
      %v3926 = vsel %vm1084, %v3740, %v3925
      %3927 = vst [vmem:[%s3833 + $0x9c] sm:$0xf] %v3926
      %3928 = vst.msk [vmem:[%s3833 + $0xa0] sm:$0xf] %vm253, %v3749
      %v3929 = vld [vmem:[%s3833 + $0xa4] sm:$0x1]
      %v3930 = vsel %vm264, %v3750, %v3929
      %3931 = vst [vmem:[%s3833 + $0xa4] sm:$0x1] %v3930
      %v3932 = vld [vmem:[%s3833 + $0xa8] sm:$0xf]
      %v3933 = vsel %vm1084, %v3757, %v3932
      %3934 = vst [vmem:[%s3833 + $0xa8] sm:$0xf] %v3933
      %3935 = vst.msk [vmem:[%s3833 + $0xac] sm:$0xf] %vm253, %v3766
      %v3936 = vld [vmem:[%s3833 + $0xb0] sm:$0x1]
      %v3937 = vsel %vm264, %v3767, %v3936
      %3938 = vst [vmem:[%s3833 + $0xb0] sm:$0x1] %v3937
      %v3939 = vld [vmem:[%s3833 + $0xb4] sm:$0xf]
      %v3940 = vsel %vm1084, %v3774, %v3939
      %3941 = vst [vmem:[%s3833 + $0xb4] sm:$0xf] %v3940
      %3942 = vst.msk [vmem:[%s3833 + $0xb8] sm:$0xf] %vm253, %v3783
      %v3943 = vld [vmem:[%s3833 + $0xbc] sm:$0x1]
      %v3944 = vsel %vm264, %v3784, %v3943
      %3945 = vst [vmem:[%s3833 + $0xbc] sm:$0x1] %v3944
      %v3946 = vld [vmem:[#allocation3] sm:$0xf]
      %v3947 = vld [vmem:[#allocation3 + $0x4] sm:$0xf]
      %v3948 = vld [vmem:[#allocation3 + $0xc] sm:$0xf]
      %v3949 = vld [vmem:[#allocation3 + $0x10] sm:$0xf]
      %v3950 = vld [vmem:[#allocation3 + $0x18] sm:$0xf]
      %v3951 = vld [vmem:[#allocation3 + $0x1c] sm:$0xf]
      %v3952 = vld [vmem:[#allocation3 + $0x24] sm:$0xf]
      %v3953 = vld [vmem:[#allocation3 + $0x28] sm:$0xf]
      %v3954 = vld [vmem:[#allocation3 + $0x30] sm:$0xf]
      %v3955 = vld [vmem:[#allocation3 + $0x34] sm:$0xf]
      %v3956 = vld [vmem:[#allocation3 + $0x3c] sm:$0xf]
      %v3957 = vld [vmem:[#allocation3 + $0x40] sm:$0xf]
      %v3958 = vld [vmem:[#allocation3 + $0x48] sm:$0xf]
      %v3959 = vld [vmem:[#allocation3 + $0x4c] sm:$0xf]
      %v3960 = vld [vmem:[#allocation3 + $0x54] sm:$0xf]
      %v3961 = vld [vmem:[#allocation3 + $0x58] sm:$0xf]
      %v3962 = vld [vmem:[#allocation3 + $0x60] sm:$0xf]
      %v3963 = vld [vmem:[#allocation3 + $0x64] sm:$0xf]
      %v3964 = vld [vmem:[#allocation3 + $0x6c] sm:$0xf]
      %v3965 = vld [vmem:[#allocation3 + $0x70] sm:$0xf]
      %v3966 = vld [vmem:[#allocation3 + $0x78] sm:$0xf]
      %v3967 = vld [vmem:[#allocation3 + $0x7c] sm:$0xf]
      %v3968 = vld [vmem:[#allocation3 + $0x84] sm:$0xf]
      %v3969 = vld [vmem:[#allocation3 + $0x88] sm:$0xf]
      %v3970 = vld [vmem:[#allocation3 + $0x90] sm:$0xf]
      %v3971 = vld [vmem:[#allocation3 + $0x94] sm:$0xf]
      %v3972 = vld [vmem:[#allocation3 + $0x9c] sm:$0xf]
      %v3973 = vld [vmem:[#allocation3 + $0xa0] sm:$0xf]
      %v3974 = vld [vmem:[#allocation3 + $0xa8] sm:$0xf]
      %v3975 = vld [vmem:[#allocation3 + $0xac] sm:$0xf]
      %v3976 = vld [vmem:[#allocation3 + $0xb4] sm:$0xf]
      %v3977 = vld [vmem:[#allocation3 + $0xb8] sm:$0xf]
      %v3978 = vld [vmem:[#allocation3 + $0x8] sm:$0x1]
      %v3979 = vld [vmem:[#allocation3 + $0x14] sm:$0x1]
      %v3980 = vld [vmem:[#allocation3 + $0x20] sm:$0x1]
      %v3981 = vld [vmem:[#allocation3 + $0x2c] sm:$0x1]
      %v3982 = vld [vmem:[#allocation3 + $0x38] sm:$0x1]
      %v3983 = vld [vmem:[#allocation3 + $0x44] sm:$0x1]
      %v3984 = vld [vmem:[#allocation3 + $0x50] sm:$0x1]
      %v3985 = vld [vmem:[#allocation3 + $0x5c] sm:$0x1]
      %v3986 = vld [vmem:[#allocation3 + $0x68] sm:$0x1]
      %v3987 = vld [vmem:[#allocation3 + $0x74] sm:$0x1]
      %v3988 = vld [vmem:[#allocation3 + $0x80] sm:$0x1]
      %v3989 = vld [vmem:[#allocation3 + $0x8c] sm:$0x1]
      %v3990 = vld [vmem:[#allocation3 + $0x98] sm:$0x1]
      %v3991 = vld [vmem:[#allocation3 + $0xa4] sm:$0x1]
      %v3992 = vld [vmem:[#allocation3 + $0xb0] sm:$0x1]
      %v3993 = vld [vmem:[#allocation3 + $0xbc] sm:$0x1]
      %v3994 = vld [vmem:[#allocation3] sm:$0xe]
      %v3995 = vld [vmem:[#allocation3 + $0xc] sm:$0xe]
      %v3996 = vld [vmem:[#allocation3 + $0x18] sm:$0xe]
      %v3997 = vld [vmem:[#allocation3 + $0x24] sm:$0xe]
      %v3998 = vld [vmem:[#allocation3 + $0x30] sm:$0xe]
      %v3999 = vld [vmem:[#allocation3 + $0x3c] sm:$0xe]
      %v4000 = vld [vmem:[#allocation3 + $0x48] sm:$0xe]
      %v4001 = vld [vmem:[#allocation3 + $0x54] sm:$0xe]
      %v4002 = vld [vmem:[#allocation3 + $0x60] sm:$0xe]
      %v4003 = vld [vmem:[#allocation3 + $0x6c] sm:$0xe]
      %v4004 = vld [vmem:[#allocation3 + $0x78] sm:$0xe]
      %v4005 = vld [vmem:[#allocation3 + $0x84] sm:$0xe]
      %v4006 = vld [vmem:[#allocation3 + $0x90] sm:$0xe]
      %v4007 = vld [vmem:[#allocation3 + $0x9c] sm:$0xe]
      %v4008 = vld [vmem:[#allocation3 + $0xa8] sm:$0xe]
      %v4009 = vld [vmem:[#allocation3 + $0xb4] sm:$0xe]
      %v4010 = vld [vmem:[%s3833] sm:$0xf]
      %v4011 = vld [vmem:[%s3833 + $0x4] sm:$0xf]
      %v4012 = vld [vmem:[%s3833 + $0xc] sm:$0xf]
      %v4013 = vld [vmem:[%s3833 + $0x10] sm:$0xf]
      %v4014 = vld [vmem:[%s3833 + $0x18] sm:$0xf]
      %v4015 = vld [vmem:[%s3833 + $0x1c] sm:$0xf]
      %v4016 = vld [vmem:[%s3833 + $0x24] sm:$0xf]
      %v4017 = vld [vmem:[%s3833 + $0x28] sm:$0xf]
      %v4018 = vld [vmem:[%s3833 + $0x30] sm:$0xf]
      %v4019 = vld [vmem:[%s3833 + $0x34] sm:$0xf]
      %v4020 = vld [vmem:[%s3833 + $0x3c] sm:$0xf]
      %v4021 = vld [vmem:[%s3833 + $0x40] sm:$0xf]
      %v4022 = vld [vmem:[%s3833 + $0x48] sm:$0xf]
      %v4023 = vld [vmem:[%s3833 + $0x4c] sm:$0xf]
      %v4024 = vld [vmem:[%s3833 + $0x54] sm:$0xf]
      %v4025 = vld [vmem:[%s3833 + $0x58] sm:$0xf]
      %v4026 = vld [vmem:[%s3833 + $0x60] sm:$0xf]
      %v4027 = vld [vmem:[%s3833 + $0x64] sm:$0xf]
      %v4028 = vld [vmem:[%s3833 + $0x6c] sm:$0xf]
      %v4029 = vld [vmem:[%s3833 + $0x70] sm:$0xf]
      %v4030 = vld [vmem:[%s3833 + $0x78] sm:$0xf]
      %v4031 = vld [vmem:[%s3833 + $0x7c] sm:$0xf]
      %v4032 = vld [vmem:[%s3833 + $0x84] sm:$0xf]
      %v4033 = vld [vmem:[%s3833 + $0x88] sm:$0xf]
      %v4034 = vld [vmem:[%s3833 + $0x90] sm:$0xf]
      %v4035 = vld [vmem:[%s3833 + $0x94] sm:$0xf]
      %v4036 = vld [vmem:[%s3833 + $0x9c] sm:$0xf]
      %v4037 = vld [vmem:[%s3833 + $0xa0] sm:$0xf]
      %v4038 = vld [vmem:[%s3833 + $0xa8] sm:$0xf]
      %v4039 = vld [vmem:[%s3833 + $0xac] sm:$0xf]
      %v4040 = vld [vmem:[%s3833 + $0xb4] sm:$0xf]
      %v4041 = vld [vmem:[%s3833 + $0xb8] sm:$0xf]
      %v4042 = vld [vmem:[%s3833 + $0x8] sm:$0x1]
      %v4043 = vld [vmem:[%s3833 + $0x14] sm:$0x1]
      %v4044 = vld [vmem:[%s3833 + $0x20] sm:$0x1]
      %v4045 = vld [vmem:[%s3833 + $0x2c] sm:$0x1]
      %v4046 = vld [vmem:[%s3833 + $0x38] sm:$0x1]
      %v4047 = vld [vmem:[%s3833 + $0x44] sm:$0x1]
      %v4048 = vld [vmem:[%s3833 + $0x50] sm:$0x1]
      %v4049 = vld [vmem:[%s3833 + $0x5c] sm:$0x1]
      %v4050 = vld [vmem:[%s3833 + $0x68] sm:$0x1]
      %v4051 = vld [vmem:[%s3833 + $0x74] sm:$0x1]
      %v4052 = vld [vmem:[%s3833 + $0x80] sm:$0x1]
      %v4053 = vld [vmem:[%s3833 + $0x8c] sm:$0x1]
      %v4054 = vld [vmem:[%s3833 + $0x98] sm:$0x1]
      %v4055 = vld [vmem:[%s3833 + $0xa4] sm:$0x1]
      %v4056 = vld [vmem:[%s3833 + $0xb0] sm:$0x1]
      %v4057 = vld [vmem:[%s3833 + $0xbc] sm:$0x1]
      %v4058 = vld [vmem:[%s3833] sm:$0xe]
      %v4059 = vld [vmem:[%s3833 + $0xc] sm:$0xe]
      %v4060 = vld [vmem:[%s3833 + $0x18] sm:$0xe]
      %v4061 = vld [vmem:[%s3833 + $0x24] sm:$0xe]
      %v4062 = vld [vmem:[%s3833 + $0x30] sm:$0xe]
      %v4063 = vld [vmem:[%s3833 + $0x3c] sm:$0xe]
      %v4064 = vld [vmem:[%s3833 + $0x48] sm:$0xe]
      %v4065 = vld [vmem:[%s3833 + $0x54] sm:$0xe]
      %v4066 = vld [vmem:[%s3833 + $0x60] sm:$0xe]
      %v4067 = vld [vmem:[%s3833 + $0x6c] sm:$0xe]
      %v4068 = vld [vmem:[%s3833 + $0x78] sm:$0xe]
      %v4069 = vld [vmem:[%s3833 + $0x84] sm:$0xe]
      %v4070 = vld [vmem:[%s3833 + $0x90] sm:$0xe]
      %v4071 = vld [vmem:[%s3833 + $0x9c] sm:$0xe]
      %v4072 = vld [vmem:[%s3833 + $0xa8] sm:$0xe]
      %v4073 = vld [vmem:[%s3833 + $0xb4] sm:$0xe]
      %s4074 = scalar_lea.vmem [#allocation3], 24
      %v4075 = vld [vmem:[%s4074] sm:$0xf]
      %v4076 = vld [vmem:[%s4074 + $0x4] sm:$0xf]
      %v4077 = vld [vmem:[%s4074 + $0xc] sm:$0xf]
      %v4078 = vld [vmem:[%s4074 + $0x10] sm:$0xf]
      %v4079 = vld [vmem:[%s4074 + $0x18] sm:$0xf]
      %v4080 = vld [vmem:[%s4074 + $0x1c] sm:$0xf]
      %v4081 = vld [vmem:[%s4074 + $0x24] sm:$0xf]
      %v4082 = vld [vmem:[%s4074 + $0x28] sm:$0xf]
      %v4083 = vld [vmem:[%s4074 + $0x30] sm:$0xf]
      %v4084 = vld [vmem:[%s4074 + $0x34] sm:$0xf]
      %v4085 = vld [vmem:[%s4074 + $0x3c] sm:$0xf]
      %v4086 = vld [vmem:[%s4074 + $0x40] sm:$0xf]
      %v4087 = vld [vmem:[%s4074 + $0x48] sm:$0xf]
      %v4088 = vld [vmem:[%s4074 + $0x4c] sm:$0xf]
      %v4089 = vld [vmem:[%s4074 + $0x54] sm:$0xf]
      %v4090 = vld [vmem:[%s4074 + $0x58] sm:$0xf]
      %v4091 = vld [vmem:[%s4074 + $0x60] sm:$0xf]
      %v4092 = vld [vmem:[%s4074 + $0x64] sm:$0xf]
      %v4093 = vld [vmem:[%s4074 + $0x6c] sm:$0xf]
      %v4094 = vld [vmem:[%s4074 + $0x70] sm:$0xf]
      %v4095 = vld [vmem:[%s4074 + $0x78] sm:$0xf]
      %v4096 = vld [vmem:[%s4074 + $0x7c] sm:$0xf]
      %v4097 = vld [vmem:[%s4074 + $0x84] sm:$0xf]
      %v4098 = vld [vmem:[%s4074 + $0x88] sm:$0xf]
      %v4099 = vld [vmem:[%s4074 + $0x90] sm:$0xf]
      %v4100 = vld [vmem:[%s4074 + $0x94] sm:$0xf]
      %v4101 = vld [vmem:[%s4074 + $0x9c] sm:$0xf]
      %v4102 = vld [vmem:[%s4074 + $0xa0] sm:$0xf]
      %v4103 = vld [vmem:[%s4074 + $0xa8] sm:$0xf]
      %v4104 = vld [vmem:[%s4074 + $0xac] sm:$0xf]
      %v4105 = vld [vmem:[%s4074 + $0xb4] sm:$0xf]
      %v4106 = vld [vmem:[%s4074 + $0xb8] sm:$0xf]
      %v4107 = vld [vmem:[%s4074 + $0x8] sm:$0x1]
      %v4108 = vld [vmem:[%s4074 + $0x14] sm:$0x1]
      %v4109 = vld [vmem:[%s4074 + $0x20] sm:$0x1]
      %v4110 = vld [vmem:[%s4074 + $0x2c] sm:$0x1]
      %v4111 = vld [vmem:[%s4074 + $0x38] sm:$0x1]
      %v4112 = vld [vmem:[%s4074 + $0x44] sm:$0x1]
      %v4113 = vld [vmem:[%s4074 + $0x50] sm:$0x1]
      %v4114 = vld [vmem:[%s4074 + $0x5c] sm:$0x1]
      %v4115 = vld [vmem:[%s4074 + $0x68] sm:$0x1]
      %v4116 = vld [vmem:[%s4074 + $0x74] sm:$0x1]
      %v4117 = vld [vmem:[%s4074 + $0x80] sm:$0x1]
      %v4118 = vld [vmem:[%s4074 + $0x8c] sm:$0x1]
      %v4119 = vld [vmem:[%s4074 + $0x98] sm:$0x1]
      %v4120 = vld [vmem:[%s4074 + $0xa4] sm:$0x1]
      %v4121 = vld [vmem:[%s4074 + $0xb0] sm:$0x1]
      %v4122 = vld [vmem:[%s4074 + $0xbc] sm:$0x1]
      %v4123 = vld [vmem:[%s4074] sm:$0xe]
      %v4124 = vld [vmem:[%s4074 + $0xc] sm:$0xe]
      %v4125 = vld [vmem:[%s4074 + $0x18] sm:$0xe]
      %v4126 = vld [vmem:[%s4074 + $0x24] sm:$0xe]
      %v4127 = vld [vmem:[%s4074 + $0x30] sm:$0xe]
      %v4128 = vld [vmem:[%s4074 + $0x3c] sm:$0xe]
      %v4129 = vld [vmem:[%s4074 + $0x48] sm:$0xe]
      %v4130 = vld [vmem:[%s4074 + $0x54] sm:$0xe]
      %v4131 = vld [vmem:[%s4074 + $0x60] sm:$0xe]
      %v4132 = vld [vmem:[%s4074 + $0x6c] sm:$0xe]
      %v4133 = vld [vmem:[%s4074 + $0x78] sm:$0xe]
      %v4134 = vld [vmem:[%s4074 + $0x84] sm:$0xe]
      %v4135 = vld [vmem:[%s4074 + $0x90] sm:$0xe]
      %v4136 = vld [vmem:[%s4074 + $0x9c] sm:$0xe]
      %v4137 = vld [vmem:[%s4074 + $0xa8] sm:$0xe]
      %v4138 = vld [vmem:[%s4074 + $0xb4] sm:$0xe]
      %v4171 = vunpack.c.l.b16 %v3946
      %v4172 = vunpack.c.l.b16 %v3947
      %v4173 = vunpack.c.l.b16 %v3948
      %v4174 = vunpack.c.l.b16 %v3949
      %v4175 = vunpack.c.l.b16 %v3950
      %v4176 = vunpack.c.l.b16 %v3951
      %v4177 = vunpack.c.l.b16 %v3952
      %v4178 = vunpack.c.l.b16 %v3953
      %v4179 = vunpack.c.l.b16 %v3954
      %v4180 = vunpack.c.l.b16 %v3955
      %v4181 = vunpack.c.l.b16 %v3956
      %v4182 = vunpack.c.l.b16 %v3957
      %v4183 = vunpack.c.l.b16 %v3958
      %v4184 = vunpack.c.l.b16 %v3959
      %v4185 = vunpack.c.l.b16 %v3960
      %v4186 = vunpack.c.l.b16 %v3961
      %v4187 = vunpack.c.l.b16 %v3962
      %v4188 = vunpack.c.l.b16 %v3963
      %v4189 = vunpack.c.l.b16 %v3964
      %v4190 = vunpack.c.l.b16 %v3965
      %v4191 = vunpack.c.l.b16 %v3966
      %v4192 = vunpack.c.l.b16 %v3967
      %v4193 = vunpack.c.l.b16 %v3968
      %v4194 = vunpack.c.l.b16 %v3969
      %v4195 = vunpack.c.l.b16 %v3970
      %v4196 = vunpack.c.l.b16 %v3971
      %v4197 = vunpack.c.l.b16 %v3972
      %v4198 = vunpack.c.l.b16 %v3973
      %v4199 = vunpack.c.l.b16 %v3974
      %v4200 = vunpack.c.l.b16 %v3975
      %v4201 = vunpack.c.l.b16 %v3976
      %v4202 = vunpack.c.l.b16 %v3977
      %v4203 = vpack.c.b16 %v4172, %v4171
      %v4204 = vpack.c.b16 %v4174, %v4173
      %v4205 = vpack.c.b16 %v4176, %v4175
      %v4206 = vpack.c.b16 %v4178, %v4177
      %v4207 = vpack.c.b16 %v4180, %v4179
      %v4208 = vpack.c.b16 %v4182, %v4181
      %v4209 = vpack.c.b16 %v4184, %v4183
      %v4210 = vpack.c.b16 %v4186, %v4185
      %v4211 = vpack.c.b16 %v4188, %v4187
      %v4212 = vpack.c.b16 %v4190, %v4189
      %v4213 = vpack.c.b16 %v4192, %v4191
      %v4214 = vpack.c.b16 %v4194, %v4193
      %v4215 = vpack.c.b16 %v4196, %v4195
      %v4216 = vpack.c.b16 %v4198, %v4197
      %v4217 = vpack.c.b16 %v4200, %v4199
      %v4218 = vpack.c.b16 %v4202, %v4201
      %v4235 = vunpack.c.l.b16 %v3978
      %v4236 = vunpack.c.l.b16 %v3979
      %v4237 = vunpack.c.l.b16 %v3980
      %v4238 = vunpack.c.l.b16 %v3981
      %v4239 = vunpack.c.l.b16 %v3982
      %v4240 = vunpack.c.l.b16 %v3983
      %v4241 = vunpack.c.l.b16 %v3984
      %v4242 = vunpack.c.l.b16 %v3985
      %v4243 = vunpack.c.l.b16 %v3986
      %v4244 = vunpack.c.l.b16 %v3987
      %v4245 = vunpack.c.l.b16 %v3988
      %v4246 = vunpack.c.l.b16 %v3989
      %v4247 = vunpack.c.l.b16 %v3990
      %v4248 = vunpack.c.l.b16 %v3991
      %v4249 = vunpack.c.l.b16 %v3992
      %v4250 = vunpack.c.l.b16 %v3993
      %v4251 = vpack.c.b16 %v4235, %v4235
      %v4252 = vpack.c.b16 %v4236, %v4236
      %v4253 = vpack.c.b16 %v4237, %v4237
      %v4254 = vpack.c.b16 %v4238, %v4238
      %v4255 = vpack.c.b16 %v4239, %v4239
      %v4256 = vpack.c.b16 %v4240, %v4240
      %v4257 = vpack.c.b16 %v4241, %v4241
      %v4258 = vpack.c.b16 %v4242, %v4242
      %v4259 = vpack.c.b16 %v4243, %v4243
      %v4260 = vpack.c.b16 %v4244, %v4244
      %v4261 = vpack.c.b16 %v4245, %v4245
      %v4262 = vpack.c.b16 %v4246, %v4246
      %v4263 = vpack.c.b16 %v4247, %v4247
      %v4264 = vpack.c.b16 %v4248, %v4248
      %v4265 = vpack.c.b16 %v4249, %v4249
      %v4266 = vpack.c.b16 %v4250, %v4250
      %v4268 = vshrl.u32 %v4203, 16
      %v4270 = vshll.u32 %v4203, 16
      %v4272 = vrot.slane %v4270, 1
      %v4273 = vor.u32 %v4268, %v4272
      %v4275 = vshll.u32 %v4251, 16
      %v4277 = vrot.slane %v4275, 1
      %v4278 = vsel %vm1518, %v4273, %v4277
      %v4280 = vshrl.u32 %v4204, 16
      %v4282 = vshll.u32 %v4204, 16
      %v4284 = vrot.slane %v4282, 1
      %v4285 = vor.u32 %v4280, %v4284
      %v4287 = vshll.u32 %v4252, 16
      %v4289 = vrot.slane %v4287, 1
      %v4290 = vsel %vm1518, %v4285, %v4289
      %v4292 = vshrl.u32 %v4205, 16
      %v4294 = vshll.u32 %v4205, 16
      %v4296 = vrot.slane %v4294, 1
      %v4297 = vor.u32 %v4292, %v4296
      %v4299 = vshll.u32 %v4253, 16
      %v4301 = vrot.slane %v4299, 1
      %v4302 = vsel %vm1518, %v4297, %v4301
      %v4304 = vshrl.u32 %v4206, 16
      %v4306 = vshll.u32 %v4206, 16
      %v4308 = vrot.slane %v4306, 1
      %v4309 = vor.u32 %v4304, %v4308
      %v4311 = vshll.u32 %v4254, 16
      %v4313 = vrot.slane %v4311, 1
      %v4314 = vsel %vm1518, %v4309, %v4313
      %v4316 = vshrl.u32 %v4207, 16
      %v4318 = vshll.u32 %v4207, 16
      %v4320 = vrot.slane %v4318, 1
      %v4321 = vor.u32 %v4316, %v4320
      %v4323 = vshll.u32 %v4255, 16
      %v4325 = vrot.slane %v4323, 1
      %v4326 = vsel %vm1518, %v4321, %v4325
      %v4328 = vshrl.u32 %v4208, 16
      %v4330 = vshll.u32 %v4208, 16
      %v4332 = vrot.slane %v4330, 1
      %v4333 = vor.u32 %v4328, %v4332
      %v4335 = vshll.u32 %v4256, 16
      %v4337 = vrot.slane %v4335, 1
      %v4338 = vsel %vm1518, %v4333, %v4337
      %v4340 = vshrl.u32 %v4209, 16
      %v4342 = vshll.u32 %v4209, 16
      %v4344 = vrot.slane %v4342, 1
      %v4345 = vor.u32 %v4340, %v4344
      %v4347 = vshll.u32 %v4257, 16
      %v4349 = vrot.slane %v4347, 1
      %v4350 = vsel %vm1518, %v4345, %v4349
      %v4352 = vshrl.u32 %v4210, 16
      %v4354 = vshll.u32 %v4210, 16
      %v4356 = vrot.slane %v4354, 1
      %v4357 = vor.u32 %v4352, %v4356
      %v4359 = vshll.u32 %v4258, 16
      %v4361 = vrot.slane %v4359, 1
      %v4362 = vsel %vm1518, %v4357, %v4361
      %v4364 = vshrl.u32 %v4211, 16
      %v4366 = vshll.u32 %v4211, 16
      %v4368 = vrot.slane %v4366, 1
      %v4369 = vor.u32 %v4364, %v4368
      %v4371 = vshll.u32 %v4259, 16
      %v4373 = vrot.slane %v4371, 1
      %v4374 = vsel %vm1518, %v4369, %v4373
      %v4376 = vshrl.u32 %v4212, 16
      %v4378 = vshll.u32 %v4212, 16
      %v4380 = vrot.slane %v4378, 1
      %v4381 = vor.u32 %v4376, %v4380
      %v4383 = vshll.u32 %v4260, 16
      %v4385 = vrot.slane %v4383, 1
      %v4386 = vsel %vm1518, %v4381, %v4385
      %v4388 = vshrl.u32 %v4213, 16
      %v4390 = vshll.u32 %v4213, 16
      %v4392 = vrot.slane %v4390, 1
      %v4393 = vor.u32 %v4388, %v4392
      %v4395 = vshll.u32 %v4261, 16
      %v4397 = vrot.slane %v4395, 1
      %v4398 = vsel %vm1518, %v4393, %v4397
      %v4400 = vshrl.u32 %v4214, 16
      %v4402 = vshll.u32 %v4214, 16
      %v4404 = vrot.slane %v4402, 1
      %v4405 = vor.u32 %v4400, %v4404
      %v4407 = vshll.u32 %v4262, 16
      %v4409 = vrot.slane %v4407, 1
      %v4410 = vsel %vm1518, %v4405, %v4409
      %v4412 = vshrl.u32 %v4215, 16
      %v4414 = vshll.u32 %v4215, 16
      %v4416 = vrot.slane %v4414, 1
      %v4417 = vor.u32 %v4412, %v4416
      %v4419 = vshll.u32 %v4263, 16
      %v4421 = vrot.slane %v4419, 1
      %v4422 = vsel %vm1518, %v4417, %v4421
      %v4424 = vshrl.u32 %v4216, 16
      %v4426 = vshll.u32 %v4216, 16
      %v4428 = vrot.slane %v4426, 1
      %v4429 = vor.u32 %v4424, %v4428
      %v4431 = vshll.u32 %v4264, 16
      %v4433 = vrot.slane %v4431, 1
      %v4434 = vsel %vm1518, %v4429, %v4433
      %v4436 = vshrl.u32 %v4217, 16
      %v4438 = vshll.u32 %v4217, 16
      %v4440 = vrot.slane %v4438, 1
      %v4441 = vor.u32 %v4436, %v4440
      %v4443 = vshll.u32 %v4265, 16
      %v4445 = vrot.slane %v4443, 1
      %v4446 = vsel %vm1518, %v4441, %v4445
      %v4448 = vshrl.u32 %v4218, 16
      %v4450 = vshll.u32 %v4218, 16
      %v4452 = vrot.slane %v4450, 1
      %v4453 = vor.u32 %v4448, %v4452
      %v4455 = vshll.u32 %v4266, 16
      %v4457 = vrot.slane %v4455, 1
      %v4458 = vsel %vm1518, %v4453, %v4457
      %4459 = vrot.lane.b32.xlu0 %v4278, 4
      %v4460 = vpop.permute.xlu0 %4459
      %4461 = vrot.lane.b32.xlu0 %v4290, 4
      %v4462 = vpop.permute.xlu0 %4461
      %4463 = vrot.lane.b32.xlu0 %v4302, 4
      %v4464 = vpop.permute.xlu0 %4463
      %4465 = vrot.lane.b32.xlu0 %v4314, 4
      %v4466 = vpop.permute.xlu0 %4465
      %4467 = vrot.lane.b32.xlu0 %v4326, 4
      %v4468 = vpop.permute.xlu0 %4467
      %4469 = vrot.lane.b32.xlu0 %v4338, 4
      %v4470 = vpop.permute.xlu0 %4469
      %4471 = vrot.lane.b32.xlu0 %v4350, 4
      %v4472 = vpop.permute.xlu0 %4471
      %4473 = vrot.lane.b32.xlu0 %v4362, 4
      %v4474 = vpop.permute.xlu0 %4473
      %4475 = vrot.lane.b32.xlu0 %v4374, 4
      %v4476 = vpop.permute.xlu0 %4475
      %4477 = vrot.lane.b32.xlu0 %v4386, 4
      %v4478 = vpop.permute.xlu0 %4477
      %4479 = vrot.lane.b32.xlu0 %v4398, 4
      %v4480 = vpop.permute.xlu0 %4479
      %4481 = vrot.lane.b32.xlu0 %v4410, 4
      %v4482 = vpop.permute.xlu0 %4481
      %4483 = vrot.lane.b32.xlu0 %v4422, 4
      %v4484 = vpop.permute.xlu0 %4483
      %4485 = vrot.lane.b32.xlu0 %v4434, 4
      %v4486 = vpop.permute.xlu0 %4485
      %4487 = vrot.lane.b32.xlu0 %v4446, 4
      %v4488 = vpop.permute.xlu0 %4487
      %4489 = vrot.lane.b32.xlu0 %v4458, 4
      %v4490 = vpop.permute.xlu0 %4489
      %v4507 = vunpack.c.l.b16 %v3994
      %v4508 = vunpack.c.l.b16 %v3995
      %v4509 = vunpack.c.l.b16 %v3996
      %v4510 = vunpack.c.l.b16 %v3997
      %v4511 = vunpack.c.l.b16 %v3998
      %v4512 = vunpack.c.l.b16 %v3999
      %v4513 = vunpack.c.l.b16 %v4000
      %v4514 = vunpack.c.l.b16 %v4001
      %v4515 = vunpack.c.l.b16 %v4002
      %v4516 = vunpack.c.l.b16 %v4003
      %v4517 = vunpack.c.l.b16 %v4004
      %v4518 = vunpack.c.l.b16 %v4005
      %v4519 = vunpack.c.l.b16 %v4006
      %v4520 = vunpack.c.l.b16 %v4007
      %v4521 = vunpack.c.l.b16 %v4008
      %v4522 = vunpack.c.l.b16 %v4009
      %v4523 = vpack.c.b16 %v4172, %v4507
      %v4524 = vpack.c.b16 %v4174, %v4508
      %v4525 = vpack.c.b16 %v4176, %v4509
      %v4526 = vpack.c.b16 %v4178, %v4510
      %v4527 = vpack.c.b16 %v4180, %v4511
      %v4528 = vpack.c.b16 %v4182, %v4512
      %v4529 = vpack.c.b16 %v4184, %v4513
      %v4530 = vpack.c.b16 %v4186, %v4514
      %v4531 = vpack.c.b16 %v4188, %v4515
      %v4532 = vpack.c.b16 %v4190, %v4516
      %v4533 = vpack.c.b16 %v4192, %v4517
      %v4534 = vpack.c.b16 %v4194, %v4518
      %v4535 = vpack.c.b16 %v4196, %v4519
      %v4536 = vpack.c.b16 %v4198, %v4520
      %v4537 = vpack.c.b16 %v4200, %v4521
      %v4538 = vpack.c.b16 %v4202, %v4522
      %v4539 = vrot.slane %v4523, 1
      %v4540 = vrot.slane %v4251, 1
      %v4541 = vsel %vm1791, %v4539, %v4540
      %v4542 = vrot.slane %v4524, 1
      %v4543 = vrot.slane %v4252, 1
      %v4544 = vsel %vm1791, %v4542, %v4543
      %v4545 = vrot.slane %v4525, 1
      %v4546 = vrot.slane %v4253, 1
      %v4547 = vsel %vm1791, %v4545, %v4546
      %v4548 = vrot.slane %v4526, 1
      %v4549 = vrot.slane %v4254, 1
      %v4550 = vsel %vm1791, %v4548, %v4549
      %v4551 = vrot.slane %v4527, 1
      %v4552 = vrot.slane %v4255, 1
      %v4553 = vsel %vm1791, %v4551, %v4552
      %v4554 = vrot.slane %v4528, 1
      %v4555 = vrot.slane %v4256, 1
      %v4556 = vsel %vm1791, %v4554, %v4555
      %v4557 = vrot.slane %v4529, 1
      %v4558 = vrot.slane %v4257, 1
      %v4559 = vsel %vm1791, %v4557, %v4558
      %v4560 = vrot.slane %v4530, 1
      %v4561 = vrot.slane %v4258, 1
      %v4562 = vsel %vm1791, %v4560, %v4561
      %v4563 = vrot.slane %v4531, 1
      %v4564 = vrot.slane %v4259, 1
      %v4565 = vsel %vm1791, %v4563, %v4564
      %v4566 = vrot.slane %v4532, 1
      %v4567 = vrot.slane %v4260, 1
      %v4568 = vsel %vm1791, %v4566, %v4567
      %v4569 = vrot.slane %v4533, 1
      %v4570 = vrot.slane %v4261, 1
      %v4571 = vsel %vm1791, %v4569, %v4570
      %v4572 = vrot.slane %v4534, 1
      %v4573 = vrot.slane %v4262, 1
      %v4574 = vsel %vm1791, %v4572, %v4573
      %v4575 = vrot.slane %v4535, 1
      %v4576 = vrot.slane %v4263, 1
      %v4577 = vsel %vm1791, %v4575, %v4576
      %v4578 = vrot.slane %v4536, 1
      %v4579 = vrot.slane %v4264, 1
      %v4580 = vsel %vm1791, %v4578, %v4579
      %v4581 = vrot.slane %v4537, 1
      %v4582 = vrot.slane %v4265, 1
      %v4583 = vsel %vm1791, %v4581, %v4582
      %v4584 = vrot.slane %v4538, 1
      %v4585 = vrot.slane %v4266, 1
      %v4586 = vsel %vm1791, %v4584, %v4585
      %4587 = vrot.lane.b32.xlu0 %v4541, 8
      %v4588 = vpop.permute.xlu0 %4587
      %4589 = vrot.lane.b32.xlu0 %v4544, 8
      %v4590 = vpop.permute.xlu0 %4589
      %4591 = vrot.lane.b32.xlu0 %v4547, 8
      %v4592 = vpop.permute.xlu0 %4591
      %4593 = vrot.lane.b32.xlu0 %v4550, 8
      %v4594 = vpop.permute.xlu0 %4593
      %4595 = vrot.lane.b32.xlu0 %v4553, 8
      %v4596 = vpop.permute.xlu0 %4595
      %4597 = vrot.lane.b32.xlu0 %v4556, 8
      %v4598 = vpop.permute.xlu0 %4597
      %4599 = vrot.lane.b32.xlu0 %v4559, 8
      %v4600 = vpop.permute.xlu0 %4599
      %4601 = vrot.lane.b32.xlu0 %v4562, 8
      %v4602 = vpop.permute.xlu0 %4601
      %4603 = vrot.lane.b32.xlu0 %v4565, 8
      %v4604 = vpop.permute.xlu0 %4603
      %4605 = vrot.lane.b32.xlu0 %v4568, 8
      %v4606 = vpop.permute.xlu0 %4605
      %4607 = vrot.lane.b32.xlu0 %v4571, 8
      %v4608 = vpop.permute.xlu0 %4607
      %4609 = vrot.lane.b32.xlu0 %v4574, 8
      %v4610 = vpop.permute.xlu0 %4609
      %4611 = vrot.lane.b32.xlu0 %v4577, 8
      %v4612 = vpop.permute.xlu0 %4611
      %4613 = vrot.lane.b32.xlu0 %v4580, 8
      %v4614 = vpop.permute.xlu0 %4613
      %4615 = vrot.lane.b32.xlu0 %v4583, 8
      %v4616 = vpop.permute.xlu0 %4615
      %4617 = vrot.lane.b32.xlu0 %v4586, 8
      %v4618 = vpop.permute.xlu0 %4617
      %v4651 = vunpack.c.l.b16 %v4010
      %v4652 = vunpack.c.l.b16 %v4011
      %v4653 = vunpack.c.l.b16 %v4012
      %v4654 = vunpack.c.l.b16 %v4013
      %v4655 = vunpack.c.l.b16 %v4014
      %v4656 = vunpack.c.l.b16 %v4015
      %v4657 = vunpack.c.l.b16 %v4016
      %v4658 = vunpack.c.l.b16 %v4017
      %v4659 = vunpack.c.l.b16 %v4018
      %v4660 = vunpack.c.l.b16 %v4019
      %v4661 = vunpack.c.l.b16 %v4020
      %v4662 = vunpack.c.l.b16 %v4021
      %v4663 = vunpack.c.l.b16 %v4022
      %v4664 = vunpack.c.l.b16 %v4023
      %v4665 = vunpack.c.l.b16 %v4024
      %v4666 = vunpack.c.l.b16 %v4025
      %v4667 = vunpack.c.l.b16 %v4026
      %v4668 = vunpack.c.l.b16 %v4027
      %v4669 = vunpack.c.l.b16 %v4028
      %v4670 = vunpack.c.l.b16 %v4029
      %v4671 = vunpack.c.l.b16 %v4030
      %v4672 = vunpack.c.l.b16 %v4031
      %v4673 = vunpack.c.l.b16 %v4032
      %v4674 = vunpack.c.l.b16 %v4033
      %v4675 = vunpack.c.l.b16 %v4034
      %v4676 = vunpack.c.l.b16 %v4035
      %v4677 = vunpack.c.l.b16 %v4036
      %v4678 = vunpack.c.l.b16 %v4037
      %v4679 = vunpack.c.l.b16 %v4038
      %v4680 = vunpack.c.l.b16 %v4039
      %v4681 = vunpack.c.l.b16 %v4040
      %v4682 = vunpack.c.l.b16 %v4041
      %v4683 = vpack.c.b16 %v4652, %v4651
      %v4684 = vpack.c.b16 %v4654, %v4653
      %v4685 = vpack.c.b16 %v4656, %v4655
      %v4686 = vpack.c.b16 %v4658, %v4657
      %v4687 = vpack.c.b16 %v4660, %v4659
      %v4688 = vpack.c.b16 %v4662, %v4661
      %v4689 = vpack.c.b16 %v4664, %v4663
      %v4690 = vpack.c.b16 %v4666, %v4665
      %v4691 = vpack.c.b16 %v4668, %v4667
      %v4692 = vpack.c.b16 %v4670, %v4669
      %v4693 = vpack.c.b16 %v4672, %v4671
      %v4694 = vpack.c.b16 %v4674, %v4673
      %v4695 = vpack.c.b16 %v4676, %v4675
      %v4696 = vpack.c.b16 %v4678, %v4677
      %v4697 = vpack.c.b16 %v4680, %v4679
      %v4698 = vpack.c.b16 %v4682, %v4681
      %4699 = vrot.lane.b32.xlu0 %v4683, 12
      %v4700 = vpop.permute.xlu0 %4699
      %4701 = vrot.lane.b32.xlu0 %v4684, 12
      %v4702 = vpop.permute.xlu0 %4701
      %4703 = vrot.lane.b32.xlu0 %v4685, 12
      %v4704 = vpop.permute.xlu0 %4703
      %4705 = vrot.lane.b32.xlu0 %v4686, 12
      %v4706 = vpop.permute.xlu0 %4705
      %4707 = vrot.lane.b32.xlu0 %v4687, 12
      %v4708 = vpop.permute.xlu0 %4707
      %4709 = vrot.lane.b32.xlu0 %v4688, 12
      %v4710 = vpop.permute.xlu0 %4709
      %4711 = vrot.lane.b32.xlu0 %v4689, 12
      %v4712 = vpop.permute.xlu0 %4711
      %4713 = vrot.lane.b32.xlu0 %v4690, 12
      %v4714 = vpop.permute.xlu0 %4713
      %4715 = vrot.lane.b32.xlu0 %v4691, 12
      %v4716 = vpop.permute.xlu0 %4715
      %4717 = vrot.lane.b32.xlu0 %v4692, 12
      %v4718 = vpop.permute.xlu0 %4717
      %4719 = vrot.lane.b32.xlu0 %v4693, 12
      %v4720 = vpop.permute.xlu0 %4719
      %4721 = vrot.lane.b32.xlu0 %v4694, 12
      %v4722 = vpop.permute.xlu0 %4721
      %4723 = vrot.lane.b32.xlu0 %v4695, 12
      %v4724 = vpop.permute.xlu0 %4723
      %4725 = vrot.lane.b32.xlu0 %v4696, 12
      %v4726 = vpop.permute.xlu0 %4725
      %4727 = vrot.lane.b32.xlu0 %v4697, 12
      %v4728 = vpop.permute.xlu0 %4727
      %4729 = vrot.lane.b32.xlu0 %v4698, 12
      %v4730 = vpop.permute.xlu0 %4729
      %v4747 = vunpack.c.l.b16 %v4042
      %v4748 = vunpack.c.l.b16 %v4043
      %v4749 = vunpack.c.l.b16 %v4044
      %v4750 = vunpack.c.l.b16 %v4045
      %v4751 = vunpack.c.l.b16 %v4046
      %v4752 = vunpack.c.l.b16 %v4047
      %v4753 = vunpack.c.l.b16 %v4048
      %v4754 = vunpack.c.l.b16 %v4049
      %v4755 = vunpack.c.l.b16 %v4050
      %v4756 = vunpack.c.l.b16 %v4051
      %v4757 = vunpack.c.l.b16 %v4052
      %v4758 = vunpack.c.l.b16 %v4053
      %v4759 = vunpack.c.l.b16 %v4054
      %v4760 = vunpack.c.l.b16 %v4055
      %v4761 = vunpack.c.l.b16 %v4056
      %v4762 = vunpack.c.l.b16 %v4057
      %v4763 = vpack.c.b16 %v4747, %v4747
      %v4764 = vpack.c.b16 %v4748, %v4748
      %v4765 = vpack.c.b16 %v4749, %v4749
      %v4766 = vpack.c.b16 %v4750, %v4750
      %v4767 = vpack.c.b16 %v4751, %v4751
      %v4768 = vpack.c.b16 %v4752, %v4752
      %v4769 = vpack.c.b16 %v4753, %v4753
      %v4770 = vpack.c.b16 %v4754, %v4754
      %v4771 = vpack.c.b16 %v4755, %v4755
      %v4772 = vpack.c.b16 %v4756, %v4756
      %v4773 = vpack.c.b16 %v4757, %v4757
      %v4774 = vpack.c.b16 %v4758, %v4758
      %v4775 = vpack.c.b16 %v4759, %v4759
      %v4776 = vpack.c.b16 %v4760, %v4760
      %v4777 = vpack.c.b16 %v4761, %v4761
      %v4778 = vpack.c.b16 %v4762, %v4762
      %v4780 = vshrl.u32 %v4683, 16
      %v4782 = vshll.u32 %v4683, 16
      %v4784 = vrot.slane %v4782, 1
      %v4785 = vor.u32 %v4780, %v4784
      %v4787 = vshll.u32 %v4763, 16
      %v4789 = vrot.slane %v4787, 1
      %v4790 = vsel %vm1518, %v4785, %v4789
      %v4792 = vshrl.u32 %v4684, 16
      %v4794 = vshll.u32 %v4684, 16
      %v4796 = vrot.slane %v4794, 1
      %v4797 = vor.u32 %v4792, %v4796
      %v4799 = vshll.u32 %v4764, 16
      %v4801 = vrot.slane %v4799, 1
      %v4802 = vsel %vm1518, %v4797, %v4801
      %v4804 = vshrl.u32 %v4685, 16
      %v4806 = vshll.u32 %v4685, 16
      %v4808 = vrot.slane %v4806, 1
      %v4809 = vor.u32 %v4804, %v4808
      %v4811 = vshll.u32 %v4765, 16
      %v4813 = vrot.slane %v4811, 1
      %v4814 = vsel %vm1518, %v4809, %v4813
      %v4816 = vshrl.u32 %v4686, 16
      %v4818 = vshll.u32 %v4686, 16
      %v4820 = vrot.slane %v4818, 1
      %v4821 = vor.u32 %v4816, %v4820
      %v4823 = vshll.u32 %v4766, 16
      %v4825 = vrot.slane %v4823, 1
      %v4826 = vsel %vm1518, %v4821, %v4825
      %v4828 = vshrl.u32 %v4687, 16
      %v4830 = vshll.u32 %v4687, 16
      %v4832 = vrot.slane %v4830, 1
      %v4833 = vor.u32 %v4828, %v4832
      %v4835 = vshll.u32 %v4767, 16
      %v4837 = vrot.slane %v4835, 1
      %v4838 = vsel %vm1518, %v4833, %v4837
      %v4840 = vshrl.u32 %v4688, 16
      %v4842 = vshll.u32 %v4688, 16
      %v4844 = vrot.slane %v4842, 1
      %v4845 = vor.u32 %v4840, %v4844
      %v4847 = vshll.u32 %v4768, 16
      %v4849 = vrot.slane %v4847, 1
      %v4850 = vsel %vm1518, %v4845, %v4849
      %v4852 = vshrl.u32 %v4689, 16
      %v4854 = vshll.u32 %v4689, 16
      %v4856 = vrot.slane %v4854, 1
      %v4857 = vor.u32 %v4852, %v4856
      %v4859 = vshll.u32 %v4769, 16
      %v4861 = vrot.slane %v4859, 1
      %v4862 = vsel %vm1518, %v4857, %v4861
      %v4864 = vshrl.u32 %v4690, 16
      %v4866 = vshll.u32 %v4690, 16
      %v4868 = vrot.slane %v4866, 1
      %v4869 = vor.u32 %v4864, %v4868
      %v4871 = vshll.u32 %v4770, 16
      %v4873 = vrot.slane %v4871, 1
      %v4874 = vsel %vm1518, %v4869, %v4873
      %v4876 = vshrl.u32 %v4691, 16
      %v4878 = vshll.u32 %v4691, 16
      %v4880 = vrot.slane %v4878, 1
      %v4881 = vor.u32 %v4876, %v4880
      %v4883 = vshll.u32 %v4771, 16
      %v4885 = vrot.slane %v4883, 1
      %v4886 = vsel %vm1518, %v4881, %v4885
      %v4888 = vshrl.u32 %v4692, 16
      %v4890 = vshll.u32 %v4692, 16
      %v4892 = vrot.slane %v4890, 1
      %v4893 = vor.u32 %v4888, %v4892
      %v4895 = vshll.u32 %v4772, 16
      %v4897 = vrot.slane %v4895, 1
      %v4898 = vsel %vm1518, %v4893, %v4897
      %v4900 = vshrl.u32 %v4693, 16
      %v4902 = vshll.u32 %v4693, 16
      %v4904 = vrot.slane %v4902, 1
      %v4905 = vor.u32 %v4900, %v4904
      %v4907 = vshll.u32 %v4773, 16
      %v4909 = vrot.slane %v4907, 1
      %v4910 = vsel %vm1518, %v4905, %v4909
      %v4912 = vshrl.u32 %v4694, 16
      %v4914 = vshll.u32 %v4694, 16
      %v4916 = vrot.slane %v4914, 1
      %v4917 = vor.u32 %v4912, %v4916
      %v4919 = vshll.u32 %v4774, 16
      %v4921 = vrot.slane %v4919, 1
      %v4922 = vsel %vm1518, %v4917, %v4921
      %v4924 = vshrl.u32 %v4695, 16
      %v4926 = vshll.u32 %v4695, 16
      %v4928 = vrot.slane %v4926, 1
      %v4929 = vor.u32 %v4924, %v4928
      %v4931 = vshll.u32 %v4775, 16
      %v4933 = vrot.slane %v4931, 1
      %v4934 = vsel %vm1518, %v4929, %v4933
      %v4936 = vshrl.u32 %v4696, 16
      %v4938 = vshll.u32 %v4696, 16
      %v4940 = vrot.slane %v4938, 1
      %v4941 = vor.u32 %v4936, %v4940
      %v4943 = vshll.u32 %v4776, 16
      %v4945 = vrot.slane %v4943, 1
      %v4946 = vsel %vm1518, %v4941, %v4945
      %v4948 = vshrl.u32 %v4697, 16
      %v4950 = vshll.u32 %v4697, 16
      %v4952 = vrot.slane %v4950, 1
      %v4953 = vor.u32 %v4948, %v4952
      %v4955 = vshll.u32 %v4777, 16
      %v4957 = vrot.slane %v4955, 1
      %v4958 = vsel %vm1518, %v4953, %v4957
      %v4960 = vshrl.u32 %v4698, 16
      %v4962 = vshll.u32 %v4698, 16
      %v4964 = vrot.slane %v4962, 1
      %v4965 = vor.u32 %v4960, %v4964
      %v4967 = vshll.u32 %v4778, 16
      %v4969 = vrot.slane %v4967, 1
      %v4970 = vsel %vm1518, %v4965, %v4969
      %4971 = vrot.lane.b32.xlu0 %v4790, 16
      %v4972 = vpop.permute.xlu0 %4971
      %4973 = vrot.lane.b32.xlu0 %v4802, 16
      %v4974 = vpop.permute.xlu0 %4973
      %4975 = vrot.lane.b32.xlu0 %v4814, 16
      %v4976 = vpop.permute.xlu0 %4975
      %4977 = vrot.lane.b32.xlu0 %v4826, 16
      %v4978 = vpop.permute.xlu0 %4977
      %4979 = vrot.lane.b32.xlu0 %v4838, 16
      %v4980 = vpop.permute.xlu0 %4979
      %4981 = vrot.lane.b32.xlu0 %v4850, 16
      %v4982 = vpop.permute.xlu0 %4981
      %4983 = vrot.lane.b32.xlu0 %v4862, 16
      %v4984 = vpop.permute.xlu0 %4983
      %4985 = vrot.lane.b32.xlu0 %v4874, 16
      %v4986 = vpop.permute.xlu0 %4985
      %4987 = vrot.lane.b32.xlu0 %v4886, 16
      %v4988 = vpop.permute.xlu0 %4987
      %4989 = vrot.lane.b32.xlu0 %v4898, 16
      %v4990 = vpop.permute.xlu0 %4989
      %4991 = vrot.lane.b32.xlu0 %v4910, 16
      %v4992 = vpop.permute.xlu0 %4991
      %4993 = vrot.lane.b32.xlu0 %v4922, 16
      %v4994 = vpop.permute.xlu0 %4993
      %4995 = vrot.lane.b32.xlu0 %v4934, 16
      %v4996 = vpop.permute.xlu0 %4995
      %4997 = vrot.lane.b32.xlu0 %v4946, 16
      %v4998 = vpop.permute.xlu0 %4997
      %4999 = vrot.lane.b32.xlu0 %v4958, 16
      %v5000 = vpop.permute.xlu0 %4999
      %5001 = vrot.lane.b32.xlu0 %v4970, 16
      %v5002 = vpop.permute.xlu0 %5001
      %v5019 = vunpack.c.l.b16 %v4058
      %v5020 = vunpack.c.l.b16 %v4059
      %v5021 = vunpack.c.l.b16 %v4060
      %v5022 = vunpack.c.l.b16 %v4061
      %v5023 = vunpack.c.l.b16 %v4062
      %v5024 = vunpack.c.l.b16 %v4063
      %v5025 = vunpack.c.l.b16 %v4064
      %v5026 = vunpack.c.l.b16 %v4065
      %v5027 = vunpack.c.l.b16 %v4066
      %v5028 = vunpack.c.l.b16 %v4067
      %v5029 = vunpack.c.l.b16 %v4068
      %v5030 = vunpack.c.l.b16 %v4069
      %v5031 = vunpack.c.l.b16 %v4070
      %v5032 = vunpack.c.l.b16 %v4071
      %v5033 = vunpack.c.l.b16 %v4072
      %v5034 = vunpack.c.l.b16 %v4073
      %v5035 = vpack.c.b16 %v4652, %v5019
      %v5036 = vpack.c.b16 %v4654, %v5020
      %v5037 = vpack.c.b16 %v4656, %v5021
      %v5038 = vpack.c.b16 %v4658, %v5022
      %v5039 = vpack.c.b16 %v4660, %v5023
      %v5040 = vpack.c.b16 %v4662, %v5024
      %v5041 = vpack.c.b16 %v4664, %v5025
      %v5042 = vpack.c.b16 %v4666, %v5026
      %v5043 = vpack.c.b16 %v4668, %v5027
      %v5044 = vpack.c.b16 %v4670, %v5028
      %v5045 = vpack.c.b16 %v4672, %v5029
      %v5046 = vpack.c.b16 %v4674, %v5030
      %v5047 = vpack.c.b16 %v4676, %v5031
      %v5048 = vpack.c.b16 %v4678, %v5032
      %v5049 = vpack.c.b16 %v4680, %v5033
      %v5050 = vpack.c.b16 %v4682, %v5034
      %v5051 = vrot.slane %v5035, 1
      %v5052 = vrot.slane %v4763, 1
      %v5053 = vsel %vm1791, %v5051, %v5052
      %v5054 = vrot.slane %v5036, 1
      %v5055 = vrot.slane %v4764, 1
      %v5056 = vsel %vm1791, %v5054, %v5055
      %v5057 = vrot.slane %v5037, 1
      %v5058 = vrot.slane %v4765, 1
      %v5059 = vsel %vm1791, %v5057, %v5058
      %v5060 = vrot.slane %v5038, 1
      %v5061 = vrot.slane %v4766, 1
      %v5062 = vsel %vm1791, %v5060, %v5061
      %v5063 = vrot.slane %v5039, 1
      %v5064 = vrot.slane %v4767, 1
      %v5065 = vsel %vm1791, %v5063, %v5064
      %v5066 = vrot.slane %v5040, 1
      %v5067 = vrot.slane %v4768, 1
      %v5068 = vsel %vm1791, %v5066, %v5067
      %v5069 = vrot.slane %v5041, 1
      %v5070 = vrot.slane %v4769, 1
      %v5071 = vsel %vm1791, %v5069, %v5070
      %v5072 = vrot.slane %v5042, 1
      %v5073 = vrot.slane %v4770, 1
      %v5074 = vsel %vm1791, %v5072, %v5073
      %v5075 = vrot.slane %v5043, 1
      %v5076 = vrot.slane %v4771, 1
      %v5077 = vsel %vm1791, %v5075, %v5076
      %v5078 = vrot.slane %v5044, 1
      %v5079 = vrot.slane %v4772, 1
      %v5080 = vsel %vm1791, %v5078, %v5079
      %v5081 = vrot.slane %v5045, 1
      %v5082 = vrot.slane %v4773, 1
      %v5083 = vsel %vm1791, %v5081, %v5082
      %v5084 = vrot.slane %v5046, 1
      %v5085 = vrot.slane %v4774, 1
      %v5086 = vsel %vm1791, %v5084, %v5085
      %v5087 = vrot.slane %v5047, 1
      %v5088 = vrot.slane %v4775, 1
      %v5089 = vsel %vm1791, %v5087, %v5088
      %v5090 = vrot.slane %v5048, 1
      %v5091 = vrot.slane %v4776, 1
      %v5092 = vsel %vm1791, %v5090, %v5091
      %v5093 = vrot.slane %v5049, 1
      %v5094 = vrot.slane %v4777, 1
      %v5095 = vsel %vm1791, %v5093, %v5094
      %v5096 = vrot.slane %v5050, 1
      %v5097 = vrot.slane %v4778, 1
      %v5098 = vsel %vm1791, %v5096, %v5097
      %5099 = vrot.lane.b32.xlu0 %v5053, 20
      %v5100 = vpop.permute.xlu0 %5099
      %5101 = vrot.lane.b32.xlu0 %v5056, 20
      %v5102 = vpop.permute.xlu0 %5101
      %5103 = vrot.lane.b32.xlu0 %v5059, 20
      %v5104 = vpop.permute.xlu0 %5103
      %5105 = vrot.lane.b32.xlu0 %v5062, 20
      %v5106 = vpop.permute.xlu0 %5105
      %5107 = vrot.lane.b32.xlu0 %v5065, 20
      %v5108 = vpop.permute.xlu0 %5107
      %5109 = vrot.lane.b32.xlu0 %v5068, 20
      %v5110 = vpop.permute.xlu0 %5109
      %5111 = vrot.lane.b32.xlu0 %v5071, 20
      %v5112 = vpop.permute.xlu0 %5111
      %5113 = vrot.lane.b32.xlu0 %v5074, 20
      %v5114 = vpop.permute.xlu0 %5113
      %5115 = vrot.lane.b32.xlu0 %v5077, 20
      %v5116 = vpop.permute.xlu0 %5115
      %5117 = vrot.lane.b32.xlu0 %v5080, 20
      %v5118 = vpop.permute.xlu0 %5117
      %5119 = vrot.lane.b32.xlu0 %v5083, 20
      %v5120 = vpop.permute.xlu0 %5119
      %5121 = vrot.lane.b32.xlu0 %v5086, 20
      %v5122 = vpop.permute.xlu0 %5121
      %5123 = vrot.lane.b32.xlu0 %v5089, 20
      %v5124 = vpop.permute.xlu0 %5123
      %5125 = vrot.lane.b32.xlu0 %v5092, 20
      %v5126 = vpop.permute.xlu0 %5125
      %5127 = vrot.lane.b32.xlu0 %v5095, 20
      %v5128 = vpop.permute.xlu0 %5127
      %5129 = vrot.lane.b32.xlu0 %v5098, 20
      %v5130 = vpop.permute.xlu0 %5129
      %v5163 = vunpack.c.l.b16 %v4075
      %v5164 = vunpack.c.l.b16 %v4076
      %v5165 = vunpack.c.l.b16 %v4077
      %v5166 = vunpack.c.l.b16 %v4078
      %v5167 = vunpack.c.l.b16 %v4079
      %v5168 = vunpack.c.l.b16 %v4080
      %v5169 = vunpack.c.l.b16 %v4081
      %v5170 = vunpack.c.l.b16 %v4082
      %v5171 = vunpack.c.l.b16 %v4083
      %v5172 = vunpack.c.l.b16 %v4084
      %v5173 = vunpack.c.l.b16 %v4085
      %v5174 = vunpack.c.l.b16 %v4086
      %v5175 = vunpack.c.l.b16 %v4087
      %v5176 = vunpack.c.l.b16 %v4088
      %v5177 = vunpack.c.l.b16 %v4089
      %v5178 = vunpack.c.l.b16 %v4090
      %v5179 = vunpack.c.l.b16 %v4091
      %v5180 = vunpack.c.l.b16 %v4092
      %v5181 = vunpack.c.l.b16 %v4093
      %v5182 = vunpack.c.l.b16 %v4094
      %v5183 = vunpack.c.l.b16 %v4095
      %v5184 = vunpack.c.l.b16 %v4096
      %v5185 = vunpack.c.l.b16 %v4097
      %v5186 = vunpack.c.l.b16 %v4098
      %v5187 = vunpack.c.l.b16 %v4099
      %v5188 = vunpack.c.l.b16 %v4100
      %v5189 = vunpack.c.l.b16 %v4101
      %v5190 = vunpack.c.l.b16 %v4102
      %v5191 = vunpack.c.l.b16 %v4103
      %v5192 = vunpack.c.l.b16 %v4104
      %v5193 = vunpack.c.l.b16 %v4105
      %v5194 = vunpack.c.l.b16 %v4106
      %v5195 = vpack.c.b16 %v5164, %v5163
      %v5196 = vpack.c.b16 %v5166, %v5165
      %v5197 = vpack.c.b16 %v5168, %v5167
      %v5198 = vpack.c.b16 %v5170, %v5169
      %v5199 = vpack.c.b16 %v5172, %v5171
      %v5200 = vpack.c.b16 %v5174, %v5173
      %v5201 = vpack.c.b16 %v5176, %v5175
      %v5202 = vpack.c.b16 %v5178, %v5177
      %v5203 = vpack.c.b16 %v5180, %v5179
      %v5204 = vpack.c.b16 %v5182, %v5181
      %v5205 = vpack.c.b16 %v5184, %v5183
      %v5206 = vpack.c.b16 %v5186, %v5185
      %v5207 = vpack.c.b16 %v5188, %v5187
      %v5208 = vpack.c.b16 %v5190, %v5189
      %v5209 = vpack.c.b16 %v5192, %v5191
      %v5210 = vpack.c.b16 %v5194, %v5193
      %5211 = vrot.lane.b32.xlu0 %v5195, 24
      %v5212 = vpop.permute.xlu0 %5211
      %5213 = vrot.lane.b32.xlu0 %v5196, 24
      %v5214 = vpop.permute.xlu0 %5213
      %5215 = vrot.lane.b32.xlu0 %v5197, 24
      %v5216 = vpop.permute.xlu0 %5215
      %5217 = vrot.lane.b32.xlu0 %v5198, 24
      %v5218 = vpop.permute.xlu0 %5217
      %5219 = vrot.lane.b32.xlu0 %v5199, 24
      %v5220 = vpop.permute.xlu0 %5219
      %5221 = vrot.lane.b32.xlu0 %v5200, 24
      %v5222 = vpop.permute.xlu0 %5221
      %5223 = vrot.lane.b32.xlu0 %v5201, 24
      %v5224 = vpop.permute.xlu0 %5223
      %5225 = vrot.lane.b32.xlu0 %v5202, 24
      %v5226 = vpop.permute.xlu0 %5225
      %5227 = vrot.lane.b32.xlu0 %v5203, 24
      %v5228 = vpop.permute.xlu0 %5227
      %5229 = vrot.lane.b32.xlu0 %v5204, 24
      %v5230 = vpop.permute.xlu0 %5229
      %5231 = vrot.lane.b32.xlu0 %v5205, 24
      %v5232 = vpop.permute.xlu0 %5231
      %5233 = vrot.lane.b32.xlu0 %v5206, 24
      %v5234 = vpop.permute.xlu0 %5233
      %5235 = vrot.lane.b32.xlu0 %v5207, 24
      %v5236 = vpop.permute.xlu0 %5235
      %5237 = vrot.lane.b32.xlu0 %v5208, 24
      %v5238 = vpop.permute.xlu0 %5237
      %5239 = vrot.lane.b32.xlu0 %v5209, 24
      %v5240 = vpop.permute.xlu0 %5239
      %5241 = vrot.lane.b32.xlu0 %v5210, 24
      %v5242 = vpop.permute.xlu0 %5241
      %v5259 = vunpack.c.l.b16 %v4107
      %v5260 = vunpack.c.l.b16 %v4108
      %v5261 = vunpack.c.l.b16 %v4109
      %v5262 = vunpack.c.l.b16 %v4110
      %v5263 = vunpack.c.l.b16 %v4111
      %v5264 = vunpack.c.l.b16 %v4112
      %v5265 = vunpack.c.l.b16 %v4113
      %v5266 = vunpack.c.l.b16 %v4114
      %v5267 = vunpack.c.l.b16 %v4115
      %v5268 = vunpack.c.l.b16 %v4116
      %v5269 = vunpack.c.l.b16 %v4117
      %v5270 = vunpack.c.l.b16 %v4118
      %v5271 = vunpack.c.l.b16 %v4119
      %v5272 = vunpack.c.l.b16 %v4120
      %v5273 = vunpack.c.l.b16 %v4121
      %v5274 = vunpack.c.l.b16 %v4122
      %v5275 = vpack.c.b16 %v5259, %v5259
      %v5276 = vpack.c.b16 %v5260, %v5260
      %v5277 = vpack.c.b16 %v5261, %v5261
      %v5278 = vpack.c.b16 %v5262, %v5262
      %v5279 = vpack.c.b16 %v5263, %v5263
      %v5280 = vpack.c.b16 %v5264, %v5264
      %v5281 = vpack.c.b16 %v5265, %v5265
      %v5282 = vpack.c.b16 %v5266, %v5266
      %v5283 = vpack.c.b16 %v5267, %v5267
      %v5284 = vpack.c.b16 %v5268, %v5268
      %v5285 = vpack.c.b16 %v5269, %v5269
      %v5286 = vpack.c.b16 %v5270, %v5270
      %v5287 = vpack.c.b16 %v5271, %v5271
      %v5288 = vpack.c.b16 %v5272, %v5272
      %v5289 = vpack.c.b16 %v5273, %v5273
      %v5290 = vpack.c.b16 %v5274, %v5274
      %v5292 = vshrl.u32 %v5195, 16
      %v5294 = vshll.u32 %v5195, 16
      %v5296 = vrot.slane %v5294, 1
      %v5297 = vor.u32 %v5292, %v5296
      %v5299 = vshll.u32 %v5275, 16
      %v5301 = vrot.slane %v5299, 1
      %v5302 = vsel %vm1518, %v5297, %v5301
      %v5304 = vshrl.u32 %v5196, 16
      %v5306 = vshll.u32 %v5196, 16
      %v5308 = vrot.slane %v5306, 1
      %v5309 = vor.u32 %v5304, %v5308
      %v5311 = vshll.u32 %v5276, 16
      %v5313 = vrot.slane %v5311, 1
      %v5314 = vsel %vm1518, %v5309, %v5313
      %v5316 = vshrl.u32 %v5197, 16
      %v5318 = vshll.u32 %v5197, 16
      %v5320 = vrot.slane %v5318, 1
      %v5321 = vor.u32 %v5316, %v5320
      %v5323 = vshll.u32 %v5277, 16
      %v5325 = vrot.slane %v5323, 1
      %v5326 = vsel %vm1518, %v5321, %v5325
      %v5328 = vshrl.u32 %v5198, 16
      %v5330 = vshll.u32 %v5198, 16
      %v5332 = vrot.slane %v5330, 1
      %v5333 = vor.u32 %v5328, %v5332
      %v5335 = vshll.u32 %v5278, 16
      %v5337 = vrot.slane %v5335, 1
      %v5338 = vsel %vm1518, %v5333, %v5337
      %v5340 = vshrl.u32 %v5199, 16
      %v5342 = vshll.u32 %v5199, 16
      %v5344 = vrot.slane %v5342, 1
      %v5345 = vor.u32 %v5340, %v5344
      %v5347 = vshll.u32 %v5279, 16
      %v5349 = vrot.slane %v5347, 1
      %v5350 = vsel %vm1518, %v5345, %v5349
      %v5352 = vshrl.u32 %v5200, 16
      %v5354 = vshll.u32 %v5200, 16
      %v5356 = vrot.slane %v5354, 1
      %v5357 = vor.u32 %v5352, %v5356
      %v5359 = vshll.u32 %v5280, 16
      %v5361 = vrot.slane %v5359, 1
      %v5362 = vsel %vm1518, %v5357, %v5361
      %v5364 = vshrl.u32 %v5201, 16
      %v5366 = vshll.u32 %v5201, 16
      %v5368 = vrot.slane %v5366, 1
      %v5369 = vor.u32 %v5364, %v5368
      %v5371 = vshll.u32 %v5281, 16
      %v5373 = vrot.slane %v5371, 1
      %v5374 = vsel %vm1518, %v5369, %v5373
      %v5376 = vshrl.u32 %v5202, 16
      %v5378 = vshll.u32 %v5202, 16
      %v5380 = vrot.slane %v5378, 1
      %v5381 = vor.u32 %v5376, %v5380
      %v5383 = vshll.u32 %v5282, 16
      %v5385 = vrot.slane %v5383, 1
      %v5386 = vsel %vm1518, %v5381, %v5385
      %v5388 = vshrl.u32 %v5203, 16
      %v5390 = vshll.u32 %v5203, 16
      %v5392 = vrot.slane %v5390, 1
      %v5393 = vor.u32 %v5388, %v5392
      %v5395 = vshll.u32 %v5283, 16
      %v5397 = vrot.slane %v5395, 1
      %v5398 = vsel %vm1518, %v5393, %v5397
      %v5400 = vshrl.u32 %v5204, 16
      %v5402 = vshll.u32 %v5204, 16
      %v5404 = vrot.slane %v5402, 1
      %v5405 = vor.u32 %v5400, %v5404
      %v5407 = vshll.u32 %v5284, 16
      %v5409 = vrot.slane %v5407, 1
      %v5410 = vsel %vm1518, %v5405, %v5409
      %v5412 = vshrl.u32 %v5205, 16
      %v5414 = vshll.u32 %v5205, 16
      %v5416 = vrot.slane %v5414, 1
      %v5417 = vor.u32 %v5412, %v5416
      %v5419 = vshll.u32 %v5285, 16
      %v5421 = vrot.slane %v5419, 1
      %v5422 = vsel %vm1518, %v5417, %v5421
      %v5424 = vshrl.u32 %v5206, 16
      %v5426 = vshll.u32 %v5206, 16
      %v5428 = vrot.slane %v5426, 1
      %v5429 = vor.u32 %v5424, %v5428
      %v5431 = vshll.u32 %v5286, 16
      %v5433 = vrot.slane %v5431, 1
      %v5434 = vsel %vm1518, %v5429, %v5433
      %v5436 = vshrl.u32 %v5207, 16
      %v5438 = vshll.u32 %v5207, 16
      %v5440 = vrot.slane %v5438, 1
      %v5441 = vor.u32 %v5436, %v5440
      %v5443 = vshll.u32 %v5287, 16
      %v5445 = vrot.slane %v5443, 1
      %v5446 = vsel %vm1518, %v5441, %v5445
      %v5448 = vshrl.u32 %v5208, 16
      %v5450 = vshll.u32 %v5208, 16
      %v5452 = vrot.slane %v5450, 1
      %v5453 = vor.u32 %v5448, %v5452
      %v5455 = vshll.u32 %v5288, 16
      %v5457 = vrot.slane %v5455, 1
      %v5458 = vsel %vm1518, %v5453, %v5457
      %v5460 = vshrl.u32 %v5209, 16
      %v5462 = vshll.u32 %v5209, 16
      %v5464 = vrot.slane %v5462, 1
      %v5465 = vor.u32 %v5460, %v5464
      %v5467 = vshll.u32 %v5289, 16
      %v5469 = vrot.slane %v5467, 1
      %v5470 = vsel %vm1518, %v5465, %v5469
      %v5472 = vshrl.u32 %v5210, 16
      %v5474 = vshll.u32 %v5210, 16
      %v5476 = vrot.slane %v5474, 1
      %v5477 = vor.u32 %v5472, %v5476
      %v5479 = vshll.u32 %v5290, 16
      %v5481 = vrot.slane %v5479, 1
      %v5482 = vsel %vm1518, %v5477, %v5481
      %5483 = vrot.lane.b32.xlu0 %v5302, 28
      %v5484 = vpop.permute.xlu0 %5483
      %5485 = vrot.lane.b32.xlu0 %v5314, 28
      %v5486 = vpop.permute.xlu0 %5485
      %5487 = vrot.lane.b32.xlu0 %v5326, 28
      %v5488 = vpop.permute.xlu0 %5487
      %5489 = vrot.lane.b32.xlu0 %v5338, 28
      %v5490 = vpop.permute.xlu0 %5489
      %5491 = vrot.lane.b32.xlu0 %v5350, 28
      %v5492 = vpop.permute.xlu0 %5491
      %5493 = vrot.lane.b32.xlu0 %v5362, 28
      %v5494 = vpop.permute.xlu0 %5493
      %5495 = vrot.lane.b32.xlu0 %v5374, 28
      %v5496 = vpop.permute.xlu0 %5495
      %5497 = vrot.lane.b32.xlu0 %v5386, 28
      %v5498 = vpop.permute.xlu0 %5497
      %5499 = vrot.lane.b32.xlu0 %v5398, 28
      %v5500 = vpop.permute.xlu0 %5499
      %5501 = vrot.lane.b32.xlu0 %v5410, 28
      %v5502 = vpop.permute.xlu0 %5501
      %5503 = vrot.lane.b32.xlu0 %v5422, 28
      %v5504 = vpop.permute.xlu0 %5503
      %5505 = vrot.lane.b32.xlu0 %v5434, 28
      %v5506 = vpop.permute.xlu0 %5505
      %5507 = vrot.lane.b32.xlu0 %v5446, 28
      %v5508 = vpop.permute.xlu0 %5507
      %5509 = vrot.lane.b32.xlu0 %v5458, 28
      %v5510 = vpop.permute.xlu0 %5509
      %5511 = vrot.lane.b32.xlu0 %v5470, 28
      %v5512 = vpop.permute.xlu0 %5511
      %5513 = vrot.lane.b32.xlu0 %v5482, 28
      %v5514 = vpop.permute.xlu0 %5513
      %v5531 = vunpack.c.l.b16 %v4123
      %v5532 = vunpack.c.l.b16 %v4124
      %v5533 = vunpack.c.l.b16 %v4125
      %v5534 = vunpack.c.l.b16 %v4126
      %v5535 = vunpack.c.l.b16 %v4127
      %v5536 = vunpack.c.l.b16 %v4128
      %v5537 = vunpack.c.l.b16 %v4129
      %v5538 = vunpack.c.l.b16 %v4130
      %v5539 = vunpack.c.l.b16 %v4131
      %v5540 = vunpack.c.l.b16 %v4132
      %v5541 = vunpack.c.l.b16 %v4133
      %v5542 = vunpack.c.l.b16 %v4134
      %v5543 = vunpack.c.l.b16 %v4135
      %v5544 = vunpack.c.l.b16 %v4136
      %v5545 = vunpack.c.l.b16 %v4137
      %v5546 = vunpack.c.l.b16 %v4138
      %v5547 = vpack.c.b16 %v5164, %v5531
      %v5548 = vpack.c.b16 %v5166, %v5532
      %v5549 = vpack.c.b16 %v5168, %v5533
      %v5550 = vpack.c.b16 %v5170, %v5534
      %v5551 = vpack.c.b16 %v5172, %v5535
      %v5552 = vpack.c.b16 %v5174, %v5536
      %v5553 = vpack.c.b16 %v5176, %v5537
      %v5554 = vpack.c.b16 %v5178, %v5538
      %v5555 = vpack.c.b16 %v5180, %v5539
      %v5556 = vpack.c.b16 %v5182, %v5540
      %v5557 = vpack.c.b16 %v5184, %v5541
      %v5558 = vpack.c.b16 %v5186, %v5542
      %v5559 = vpack.c.b16 %v5188, %v5543
      %v5560 = vpack.c.b16 %v5190, %v5544
      %v5561 = vpack.c.b16 %v5192, %v5545
      %v5562 = vpack.c.b16 %v5194, %v5546
      %v5563 = vrot.slane %v5547, 1
      %v5564 = vrot.slane %v5275, 1
      %v5565 = vsel %vm1791, %v5563, %v5564
      %v5566 = vrot.slane %v5548, 1
      %v5567 = vrot.slane %v5276, 1
      %v5568 = vsel %vm1791, %v5566, %v5567
      %v5569 = vrot.slane %v5549, 1
      %v5570 = vrot.slane %v5277, 1
      %v5571 = vsel %vm1791, %v5569, %v5570
      %v5572 = vrot.slane %v5550, 1
      %v5573 = vrot.slane %v5278, 1
      %v5574 = vsel %vm1791, %v5572, %v5573
      %v5575 = vrot.slane %v5551, 1
      %v5576 = vrot.slane %v5279, 1
      %v5577 = vsel %vm1791, %v5575, %v5576
      %v5578 = vrot.slane %v5552, 1
      %v5579 = vrot.slane %v5280, 1
      %v5580 = vsel %vm1791, %v5578, %v5579
      %v5581 = vrot.slane %v5553, 1
      %v5582 = vrot.slane %v5281, 1
      %v5583 = vsel %vm1791, %v5581, %v5582
      %v5584 = vrot.slane %v5554, 1
      %v5585 = vrot.slane %v5282, 1
      %v5586 = vsel %vm1791, %v5584, %v5585
      %v5587 = vrot.slane %v5555, 1
      %v5588 = vrot.slane %v5283, 1
      %v5589 = vsel %vm1791, %v5587, %v5588
      %v5590 = vrot.slane %v5556, 1
      %v5591 = vrot.slane %v5284, 1
      %v5592 = vsel %vm1791, %v5590, %v5591
      %v5593 = vrot.slane %v5557, 1
      %v5594 = vrot.slane %v5285, 1
      %v5595 = vsel %vm1791, %v5593, %v5594
      %v5596 = vrot.slane %v5558, 1
      %v5597 = vrot.slane %v5286, 1
      %v5598 = vsel %vm1791, %v5596, %v5597
      %v5599 = vrot.slane %v5559, 1
      %v5600 = vrot.slane %v5287, 1
      %v5601 = vsel %vm1791, %v5599, %v5600
      %v5602 = vrot.slane %v5560, 1
      %v5603 = vrot.slane %v5288, 1
      %v5604 = vsel %vm1791, %v5602, %v5603
      %v5605 = vrot.slane %v5561, 1
      %v5606 = vrot.slane %v5289, 1
      %v5607 = vsel %vm1791, %v5605, %v5606
      %v5608 = vrot.slane %v5562, 1
      %v5609 = vrot.slane %v5290, 1
      %v5610 = vsel %vm1791, %v5608, %v5609
      %5611 = vrot.lane.b32.xlu0 %v5565, 32
      %v5612 = vpop.permute.xlu0 %5611
      %5613 = vrot.lane.b32.xlu0 %v5568, 32
      %v5614 = vpop.permute.xlu0 %5613
      %5615 = vrot.lane.b32.xlu0 %v5571, 32
      %v5616 = vpop.permute.xlu0 %5615
      %5617 = vrot.lane.b32.xlu0 %v5574, 32
      %v5618 = vpop.permute.xlu0 %5617
      %5619 = vrot.lane.b32.xlu0 %v5577, 32
      %v5620 = vpop.permute.xlu0 %5619
      %5621 = vrot.lane.b32.xlu0 %v5580, 32
      %v5622 = vpop.permute.xlu0 %5621
      %5623 = vrot.lane.b32.xlu0 %v5583, 32
      %v5624 = vpop.permute.xlu0 %5623
      %5625 = vrot.lane.b32.xlu0 %v5586, 32
      %v5626 = vpop.permute.xlu0 %5625
      %5627 = vrot.lane.b32.xlu0 %v5589, 32
      %v5628 = vpop.permute.xlu0 %5627
      %5629 = vrot.lane.b32.xlu0 %v5592, 32
      %v5630 = vpop.permute.xlu0 %5629
      %5631 = vrot.lane.b32.xlu0 %v5595, 32
      %v5632 = vpop.permute.xlu0 %5631
      %5633 = vrot.lane.b32.xlu0 %v5598, 32
      %v5634 = vpop.permute.xlu0 %5633
      %5635 = vrot.lane.b32.xlu0 %v5601, 32
      %v5636 = vpop.permute.xlu0 %5635
      %5637 = vrot.lane.b32.xlu0 %v5604, 32
      %v5638 = vpop.permute.xlu0 %5637
      %5639 = vrot.lane.b32.xlu0 %v5607, 32
      %v5640 = vpop.permute.xlu0 %5639
      %5641 = vrot.lane.b32.xlu0 %v5610, 32
      %v5642 = vpop.permute.xlu0 %5641
      %v5644 = vsel %vm2896, %v4203, %v4460
      %v5646 = vsel %vm2896, %v4204, %v4462
      %v5648 = vsel %vm2896, %v4205, %v4464
      %v5650 = vsel %vm2896, %v4206, %v4466
      %v5652 = vsel %vm2896, %v4207, %v4468
      %v5654 = vsel %vm2896, %v4208, %v4470
      %v5656 = vsel %vm2896, %v4209, %v4472
      %v5658 = vsel %vm2896, %v4210, %v4474
      %v5660 = vsel %vm2896, %v4211, %v4476
      %v5662 = vsel %vm2896, %v4212, %v4478
      %v5664 = vsel %vm2896, %v4213, %v4480
      %v5666 = vsel %vm2896, %v4214, %v4482
      %v5668 = vsel %vm2896, %v4215, %v4484
      %v5670 = vsel %vm2896, %v4216, %v4486
      %v5672 = vsel %vm2896, %v4217, %v4488
      %v5674 = vsel %vm2896, %v4218, %v4490
      %v5676 = vsel %vm2929, %v5644, %v4588
      %v5678 = vsel %vm2929, %v5646, %v4590
      %v5680 = vsel %vm2929, %v5648, %v4592
      %v5682 = vsel %vm2929, %v5650, %v4594
      %v5684 = vsel %vm2929, %v5652, %v4596
      %v5686 = vsel %vm2929, %v5654, %v4598
      %v5688 = vsel %vm2929, %v5656, %v4600
      %v5690 = vsel %vm2929, %v5658, %v4602
      %v5692 = vsel %vm2929, %v5660, %v4604
      %v5694 = vsel %vm2929, %v5662, %v4606
      %v5696 = vsel %vm2929, %v5664, %v4608
      %v5698 = vsel %vm2929, %v5666, %v4610
      %v5700 = vsel %vm2929, %v5668, %v4612
      %v5702 = vsel %vm2929, %v5670, %v4614
      %v5704 = vsel %vm2929, %v5672, %v4616
      %v5706 = vsel %vm2929, %v5674, %v4618
      %v5708 = vsel %vm2962, %v5676, %v4700
      %v5710 = vsel %vm2962, %v5678, %v4702
      %v5712 = vsel %vm2962, %v5680, %v4704
      %v5714 = vsel %vm2962, %v5682, %v4706
      %v5716 = vsel %vm2962, %v5684, %v4708
      %v5718 = vsel %vm2962, %v5686, %v4710
      %v5720 = vsel %vm2962, %v5688, %v4712
      %v5722 = vsel %vm2962, %v5690, %v4714
      %v5724 = vsel %vm2962, %v5692, %v4716
      %v5726 = vsel %vm2962, %v5694, %v4718
      %v5728 = vsel %vm2962, %v5696, %v4720
      %v5730 = vsel %vm2962, %v5698, %v4722
      %v5732 = vsel %vm2962, %v5700, %v4724
      %v5734 = vsel %vm2962, %v5702, %v4726
      %v5736 = vsel %vm2962, %v5704, %v4728
      %v5738 = vsel %vm2962, %v5706, %v4730
      %v5740 = vsel %vm2995, %v5708, %v4972
      %v5742 = vsel %vm2995, %v5710, %v4974
      %v5744 = vsel %vm2995, %v5712, %v4976
      %v5746 = vsel %vm2995, %v5714, %v4978
      %v5748 = vsel %vm2995, %v5716, %v4980
      %v5750 = vsel %vm2995, %v5718, %v4982
      %v5752 = vsel %vm2995, %v5720, %v4984
      %v5754 = vsel %vm2995, %v5722, %v4986
      %v5756 = vsel %vm2995, %v5724, %v4988
      %v5758 = vsel %vm2995, %v5726, %v4990
      %v5760 = vsel %vm2995, %v5728, %v4992
      %v5762 = vsel %vm2995, %v5730, %v4994
      %v5764 = vsel %vm2995, %v5732, %v4996
      %v5766 = vsel %vm2995, %v5734, %v4998
      %v5768 = vsel %vm2995, %v5736, %v5000
      %v5770 = vsel %vm2995, %v5738, %v5002
      %v5772 = vsel %vm3028, %v5740, %v5100
      %v5774 = vsel %vm3028, %v5742, %v5102
      %v5776 = vsel %vm3028, %v5744, %v5104
      %v5778 = vsel %vm3028, %v5746, %v5106
      %v5780 = vsel %vm3028, %v5748, %v5108
      %v5782 = vsel %vm3028, %v5750, %v5110
      %v5784 = vsel %vm3028, %v5752, %v5112
      %v5786 = vsel %vm3028, %v5754, %v5114
      %v5788 = vsel %vm3028, %v5756, %v5116
      %v5790 = vsel %vm3028, %v5758, %v5118
      %v5792 = vsel %vm3028, %v5760, %v5120
      %v5794 = vsel %vm3028, %v5762, %v5122
      %v5796 = vsel %vm3028, %v5764, %v5124
      %v5798 = vsel %vm3028, %v5766, %v5126
      %v5800 = vsel %vm3028, %v5768, %v5128
      %v5802 = vsel %vm3028, %v5770, %v5130
      %v5804 = vsel %vm3061, %v5772, %v5212
      %v5806 = vsel %vm3061, %v5774, %v5214
      %v5808 = vsel %vm3061, %v5776, %v5216
      %v5810 = vsel %vm3061, %v5778, %v5218
      %v5812 = vsel %vm3061, %v5780, %v5220
      %v5814 = vsel %vm3061, %v5782, %v5222
      %v5816 = vsel %vm3061, %v5784, %v5224
      %v5818 = vsel %vm3061, %v5786, %v5226
      %v5820 = vsel %vm3061, %v5788, %v5228
      %v5822 = vsel %vm3061, %v5790, %v5230
      %v5824 = vsel %vm3061, %v5792, %v5232
      %v5826 = vsel %vm3061, %v5794, %v5234
      %v5828 = vsel %vm3061, %v5796, %v5236
      %v5830 = vsel %vm3061, %v5798, %v5238
      %v5832 = vsel %vm3061, %v5800, %v5240
      %v5834 = vsel %vm3061, %v5802, %v5242
      %v5836 = vsel %vm3094, %v5804, %v5484
      %v5838 = vsel %vm3094, %v5806, %v5486
      %v5840 = vsel %vm3094, %v5808, %v5488
      %v5842 = vsel %vm3094, %v5810, %v5490
      %v5844 = vsel %vm3094, %v5812, %v5492
      %v5846 = vsel %vm3094, %v5814, %v5494
      %v5848 = vsel %vm3094, %v5816, %v5496
      %v5850 = vsel %vm3094, %v5818, %v5498
      %v5852 = vsel %vm3094, %v5820, %v5500
      %v5854 = vsel %vm3094, %v5822, %v5502
      %v5856 = vsel %vm3094, %v5824, %v5504
      %v5858 = vsel %vm3094, %v5826, %v5506
      %v5860 = vsel %vm3094, %v5828, %v5508
      %v5862 = vsel %vm3094, %v5830, %v5510
      %v5864 = vsel %vm3094, %v5832, %v5512
      %v5866 = vsel %vm3094, %v5834, %v5514
      %v5868 = vsel %vm3127, %v5836, %v5612
      %v5870 = vsel %vm3127, %v5838, %v5614
      %v5872 = vsel %vm3127, %v5840, %v5616
      %v5874 = vsel %vm3127, %v5842, %v5618
      %v5876 = vsel %vm3127, %v5844, %v5620
      %v5878 = vsel %vm3127, %v5846, %v5622
      %v5880 = vsel %vm3127, %v5848, %v5624
      %v5882 = vsel %vm3127, %v5850, %v5626
      %v5884 = vsel %vm3127, %v5852, %v5628
      %v5886 = vsel %vm3127, %v5854, %v5630
      %v5888 = vsel %vm3127, %v5856, %v5632
      %v5890 = vsel %vm3127, %v5858, %v5634
      %v5892 = vsel %vm3127, %v5860, %v5636
      %v5894 = vsel %vm3127, %v5862, %v5638
      %v5896 = vsel %vm3127, %v5864, %v5640
      %v5898 = vsel %vm3127, %v5866, %v5642
      %v5899 = vld [vmem:[%s2] sm:$0xf]
      %v5900 = vld [vmem:[%s2 + $0x4] sm:$0xf]
      %v5901 = vld [vmem:[%s2 + $0x8] sm:$0xf]
      %v5902 = vld [vmem:[%s2 + $0xc] sm:$0xf]
      %v5903 = vld [vmem:[%s2 + $0x10] sm:$0x3]
      %v5904 = vld [vmem:[%s246] sm:$0xf]
      %v5905 = vld [vmem:[%s246 + $0x4] sm:$0xf]
      %v5906 = vld [vmem:[%s246 + $0x8] sm:$0xf]
      %v5907 = vld [vmem:[%s246 + $0xc] sm:$0xf]
      %v5908 = vld [vmem:[%s246 + $0x10] sm:$0xf]
      %v5909 = vld [vmem:[%s246 + $0x14] sm:$0xf]
      %v5910 = vld [vmem:[%s246 + $0x18] sm:$0xf]
      %v5911 = vld [vmem:[%s246 + $0x1c] sm:$0xf]
      %v5912 = vld [vmem:[%s246 + $0x20] sm:$0xf]
      %v5913 = vld [vmem:[%s246 + $0x24] sm:$0xf]
      %v5914 = vld [vmem:[%s246 + $0x28] sm:$0xf]
      %v5915 = vld [vmem:[%s246 + $0x2c] sm:$0xf]
      %v5916 = vld [vmem:[%s246 + $0x30] sm:$0xf]
      %v5917 = vld [vmem:[%s246 + $0x34] sm:$0xf]
      %v5918 = vld [vmem:[%s246 + $0x38] sm:$0xf]
      %v5919 = vld [vmem:[%s246 + $0x3c] sm:$0xf]
      %v5920 = vld [vmem:[%s246 + $0x40] sm:$0xf]
      %v5921 = vld [vmem:[%s246 + $0x44] sm:$0xf]
      %v5922 = vld [vmem:[%s246 + $0x48] sm:$0xf]
      %v5923 = vld [vmem:[%s246 + $0x4c] sm:$0xf]
      %v5924 = vld [vmem:[%s246 + $0x50] sm:$0xf]
      %v5925 = vld [vmem:[%s246 + $0x54] sm:$0xf]
      %v5926 = vld [vmem:[%s246 + $0x58] sm:$0xf]
      %v5927 = vld [vmem:[%s246 + $0x5c] sm:$0xf]
      %v5928 = vld [vmem:[%s246 + $0x60] sm:$0xf]
      %v5929 = vld [vmem:[%s246 + $0x64] sm:$0xf]
      %v5930 = vld [vmem:[%s246 + $0x68] sm:$0xf]
      %v5931 = vld [vmem:[%s246 + $0x6c] sm:$0xf]
      %v5932 = vld [vmem:[%s246 + $0x70] sm:$0xf]
      %v5933 = vld [vmem:[%s246 + $0x74] sm:$0xf]
      %v5934 = vld [vmem:[%s246 + $0x78] sm:$0xf]
      %v5935 = vld [vmem:[%s246 + $0x7c] sm:$0xf]
      %v5936 = vunpack.c.l.bf16 %v5904
      %v5937 = vunpack.c.l.bf16 %v5905
      %v5938 = vunpack.c.l.bf16 %v5906
      %v5939 = vunpack.c.l.bf16 %v5907
      %v5940 = vunpack.c.l.bf16 %v5908
      %v5941 = vunpack.c.l.bf16 %v5909
      %v5942 = vunpack.c.l.bf16 %v5910
      %v5943 = vunpack.c.l.bf16 %v5911
      %v5944 = vunpack.c.l.bf16 %v5912
      %v5945 = vunpack.c.l.bf16 %v5913
      %v5946 = vunpack.c.l.bf16 %v5914
      %v5947 = vunpack.c.l.bf16 %v5915
      %v5948 = vunpack.c.l.bf16 %v5916
      %v5949 = vunpack.c.l.bf16 %v5917
      %v5950 = vunpack.c.l.bf16 %v5918
      %v5951 = vunpack.c.l.bf16 %v5919
      %v5952 = vunpack.c.l.bf16 %v5920
      %v5953 = vunpack.c.l.bf16 %v5921
      %v5954 = vunpack.c.l.bf16 %v5922
      %v5955 = vunpack.c.l.bf16 %v5923
      %v5956 = vunpack.c.l.bf16 %v5924
      %v5957 = vunpack.c.l.bf16 %v5925
      %v5958 = vunpack.c.l.bf16 %v5926
      %v5959 = vunpack.c.l.bf16 %v5927
      %v5960 = vunpack.c.l.bf16 %v5928
      %v5961 = vunpack.c.l.bf16 %v5929
      %v5962 = vunpack.c.l.bf16 %v5930
      %v5963 = vunpack.c.l.bf16 %v5931
      %v5964 = vunpack.c.l.bf16 %v5932
      %v5965 = vunpack.c.l.bf16 %v5933
      %v5966 = vunpack.c.l.bf16 %v5934
      %v5967 = vunpack.c.l.bf16 %v5935
      %v5973 = vunpack.c.l.b16 %v5899
      %v5974 = vunpack.c.l.b16 %v5900
      %v5975 = vunpack.c.l.b16 %v5901
      %v5976 = vunpack.c.l.b16 %v5902
      %v5977 = vunpack.c.l.b16 %v5903
      %v5978 = vpack.c.b16 %v5974, %v5973
      %v5979 = vpack.c.b16 %v5976, %v5975
      %v5980 = vpack.c.b16 %v5977, %v5977
      %v5983 = vsel %vm3187, %v5868, 0
      %v5985 = vsel %vm3187, %v5870, 0
      %v5987 = vsel %vm3187, %v5872, 0
      %v5989 = vsel %vm3187, %v5874, 0
      %v5991 = vsel %vm3187, %v5876, 0
      %v5993 = vsel %vm3187, %v5878, 0
      %v5995 = vsel %vm3187, %v5880, 0
      %v5997 = vsel %vm3187, %v5882, 0
      %v5999 = vsel %vm3187, %v5884, 0
      %v6001 = vsel %vm3187, %v5886, 0
      %v6003 = vsel %vm3187, %v5888, 0
      %v6005 = vsel %vm3187, %v5890, 0
      %v6007 = vsel %vm3187, %v5892, 0
      %v6009 = vsel %vm3187, %v5894, 0
      %v6011 = vsel %vm3187, %v5896, 0
      %v6013 = vsel %vm3187, %v5898, 0
      %v6016 = vsel %vm3220, %v5980, 0
      %6018 = vmatprep.subr.bf16.mxu0 0
      %6019 = vmatpush1.bf16.msra.mxu0 %v5978
      %6020 = vmatprep.subr.bf16.mxu0 0
      %6021 = vmatpush1.bf16.msra.mxu0 %v5979
      %6022 = vmatprep.subr.bf16.mxu0 0
      %6023 = vmatpush1.bf16.msra.mxu0 %v6016
      %6024 = vmatprep.subr.bf16.mxu0 0
      %6025 = vmatpush1.bf16.msra.mxu0 0
      %6026 = vmatprep.subr.bf16.mxu0 0
      %6027 = vmatpush1.bf16.msra.mxu0 0
      %6028 = vmatprep.subr.bf16.mxu0 0
      %6029 = vmatpush1.bf16.msra.mxu0 0
      %6030 = vmatprep.subr.bf16.mxu0 0
      %6031 = vmatpush1.bf16.msra.mxu0 0
      %6032 = vmatprep.subr.bf16.mxu0 0
      %6033 = vmatpush1.bf16.msra.mxu0 0
      %6034 = vmatprep.subr.bf16.mxu0 0
      %6035 = vmatpush1.bf16.msra.mxu0 0
      %6036 = vmatprep.subr.bf16.mxu0 0
      %6037 = vmatpush1.bf16.msra.mxu0 0
      %6038 = vmatprep.subr.bf16.mxu0 0
      %6039 = vmatpush1.bf16.msra.mxu0 0
      %6040 = vmatprep.subr.bf16.mxu0 0
      %6041 = vmatpush1.bf16.msra.mxu0 0
      %6042 = vmatprep.subr.bf16.mxu0 0
      %6043 = vmatpush1.bf16.msra.mxu0 0
      %6044 = vmatprep.subr.bf16.mxu0 0
      %6045 = vmatpush1.bf16.msra.mxu0 0
      %6046 = vmatprep.subr.bf16.mxu0 0
      %6047 = vmatpush1.bf16.msra.mxu0 0
      %6048 = vmatprep.subr.bf16.mxu0 0
      %6049 = vmatpush1.bf16.msra.mxu0 0
      %6050 = vmatprep.mubr.bf16.mxu0 0
      %6051 = vmatmul.mubr.bf16.gmra.mrb[0].mxu0 %v5983
      %v6052 = vpop.f32.mrb[0].mxu0
      %v6053 = vadd.f32 %v5936, %v6052
      %v6054 = vpop.f32.mrb[0].mxu0
      %v6055 = vpop.f32.mrb[0].mxu0
      %v6056 = vadd.f32 %v5937, %v6055
      %v6057 = vpop.f32.mrb[0].mxu0
      %6058 = vmatprep.mubr.bf16.mxu0 0
      %6059 = vmatmul.mubr.bf16.gmra.mrb[0].mxu0 %v5985
      %v6060 = vpop.f32.mrb[0].mxu0
      %v6061 = vadd.f32 %v5938, %v6060
      %v6062 = vpop.f32.mrb[0].mxu0
      %v6063 = vpop.f32.mrb[0].mxu0
      %v6064 = vadd.f32 %v5939, %v6063
      %v6065 = vpop.f32.mrb[0].mxu0
      %6066 = vmatprep.mubr.bf16.mxu0 0
      %6067 = vmatmul.mubr.bf16.gmra.mrb[0].mxu0 %v5987
      %v6068 = vpop.f32.mrb[0].mxu0
      %v6069 = vadd.f32 %v5940, %v6068
      %v6070 = vpop.f32.mrb[0].mxu0
      %v6071 = vpop.f32.mrb[0].mxu0
      %v6072 = vadd.f32 %v5941, %v6071
      %v6073 = vpop.f32.mrb[0].mxu0
      %6074 = vmatprep.mubr.bf16.mxu0 0
      %6075 = vmatmul.mubr.bf16.gmra.mrb[0].mxu0 %v5989
      %v6076 = vpop.f32.mrb[0].mxu0
      %v6077 = vadd.f32 %v5942, %v6076
      %v6078 = vpop.f32.mrb[0].mxu0
      %v6079 = vpop.f32.mrb[0].mxu0
      %v6080 = vadd.f32 %v5943, %v6079
      %v6081 = vpop.f32.mrb[0].mxu0
      %6082 = vmatprep.mubr.bf16.mxu0 0
      %6083 = vmatmul.mubr.bf16.gmra.mrb[0].mxu0 %v5991
      %v6084 = vpop.f32.mrb[0].mxu0
      %v6085 = vadd.f32 %v5944, %v6084
      %v6086 = vpop.f32.mrb[0].mxu0
      %v6087 = vpop.f32.mrb[0].mxu0
      %v6088 = vadd.f32 %v5945, %v6087
      %v6089 = vpop.f32.mrb[0].mxu0
      %6090 = vmatprep.mubr.bf16.mxu0 0
      %6091 = vmatmul.mubr.bf16.gmra.mrb[0].mxu0 %v5993
      %v6092 = vpop.f32.mrb[0].mxu0
      %v6093 = vadd.f32 %v5946, %v6092
      %v6094 = vpop.f32.mrb[0].mxu0
      %v6095 = vpop.f32.mrb[0].mxu0
      %v6096 = vadd.f32 %v5947, %v6095
      %v6097 = vpop.f32.mrb[0].mxu0
      %6098 = vmatprep.mubr.bf16.mxu0 0
      %6099 = vmatmul.mubr.bf16.gmra.mrb[0].mxu0 %v5995
      %v6100 = vpop.f32.mrb[0].mxu0
      %v6101 = vadd.f32 %v5948, %v6100
      %v6102 = vpop.f32.mrb[0].mxu0
      %v6103 = vpop.f32.mrb[0].mxu0
      %v6104 = vadd.f32 %v5949, %v6103
      %v6105 = vpop.f32.mrb[0].mxu0
      %6106 = vmatprep.mubr.bf16.mxu0 0
      %6107 = vmatmul.mubr.bf16.gmra.mrb[0].mxu0 %v5997
      %v6108 = vpop.f32.mrb[0].mxu0
      %v6109 = vadd.f32 %v5950, %v6108
      %v6110 = vpop.f32.mrb[0].mxu0
      %v6111 = vpop.f32.mrb[0].mxu0
      %v6112 = vadd.f32 %v5951, %v6111
      %v6113 = vpop.f32.mrb[0].mxu0
      %6114 = vmatprep.mubr.bf16.mxu0 0
      %6115 = vmatmul.mubr.bf16.gmra.mrb[0].mxu0 %v5999
      %v6116 = vpop.f32.mrb[0].mxu0
      %v6117 = vadd.f32 %v5952, %v6116
      %v6118 = vpop.f32.mrb[0].mxu0
      %v6119 = vpop.f32.mrb[0].mxu0
      %v6120 = vadd.f32 %v5953, %v6119
      %v6121 = vpop.f32.mrb[0].mxu0
      %6122 = vmatprep.mubr.bf16.mxu0 0
      %6123 = vmatmul.mubr.bf16.gmra.mrb[0].mxu0 %v6001
      %v6124 = vpop.f32.mrb[0].mxu0
      %v6125 = vadd.f32 %v5954, %v6124
      %v6126 = vpop.f32.mrb[0].mxu0
      %v6127 = vpop.f32.mrb[0].mxu0
      %v6128 = vadd.f32 %v5955, %v6127
      %v6129 = vpop.f32.mrb[0].mxu0
      %6130 = vmatprep.mubr.bf16.mxu0 0
      %6131 = vmatmul.mubr.bf16.gmra.mrb[0].mxu0 %v6003
      %v6132 = vpop.f32.mrb[0].mxu0
      %v6133 = vadd.f32 %v5956, %v6132
      %v6134 = vpop.f32.mrb[0].mxu0
      %v6135 = vpop.f32.mrb[0].mxu0
      %v6136 = vadd.f32 %v5957, %v6135
      %v6137 = vpop.f32.mrb[0].mxu0
      %6138 = vmatprep.mubr.bf16.mxu0 0
      %6139 = vmatmul.mubr.bf16.gmra.mrb[0].mxu0 %v6005
      %v6140 = vpop.f32.mrb[0].mxu0
      %v6141 = vadd.f32 %v5958, %v6140
      %v6142 = vpop.f32.mrb[0].mxu0
      %v6143 = vpop.f32.mrb[0].mxu0
      %v6144 = vadd.f32 %v5959, %v6143
      %v6145 = vpop.f32.mrb[0].mxu0
      %6146 = vmatprep.mubr.bf16.mxu0 0
      %6147 = vmatmul.mubr.bf16.gmra.mrb[0].mxu0 %v6007
      %v6148 = vpop.f32.mrb[0].mxu0
      %v6149 = vadd.f32 %v5960, %v6148
      %v6150 = vpop.f32.mrb[0].mxu0
      %v6151 = vpop.f32.mrb[0].mxu0
      %v6152 = vadd.f32 %v5961, %v6151
      %v6153 = vpop.f32.mrb[0].mxu0
      %6154 = vmatprep.mubr.bf16.mxu0 0
      %6155 = vmatmul.mubr.bf16.gmra.mrb[0].mxu0 %v6009
      %v6156 = vpop.f32.mrb[0].mxu0
      %v6157 = vadd.f32 %v5962, %v6156
      %v6158 = vpop.f32.mrb[0].mxu0
      %v6159 = vpop.f32.mrb[0].mxu0
      %v6160 = vadd.f32 %v5963, %v6159
      %v6161 = vpop.f32.mrb[0].mxu0
      %6162 = vmatprep.mubr.bf16.mxu0 0
      %6163 = vmatmul.mubr.bf16.gmra.mrb[0].mxu0 %v6011
      %v6164 = vpop.f32.mrb[0].mxu0
      %v6165 = vadd.f32 %v5964, %v6164
      %v6166 = vpop.f32.mrb[0].mxu0
      %v6167 = vpop.f32.mrb[0].mxu0
      %v6168 = vadd.f32 %v5965, %v6167
      %v6169 = vpop.f32.mrb[0].mxu0
      %6170 = vmatprep.mubr.bf16.mxu0 0
      %6171 = vmatmul.mubr.bf16.gmra.mrb[0].mxu0 %v6013
      %v6172 = vpop.f32.mrb[0].mxu0
      %v6173 = vadd.f32 %v5966, %v6172
      %v6174 = vpop.f32.mrb[0].mxu0
      %v6175 = vpop.f32.mrb[0].mxu0
      %v6176 = vadd.f32 %v5967, %v6175
      %v6177 = vpop.f32.mrb[0].mxu0
      %6178 = vdwg.mxu0
      %v6179 = vpack.c.bf16 %v6056, %v6053
      %v6180 = vpack.c.bf16 %v6064, %v6061
      %v6181 = vpack.c.bf16 %v6072, %v6069
      %v6182 = vpack.c.bf16 %v6080, %v6077
      %v6183 = vpack.c.bf16 %v6088, %v6085
      %v6184 = vpack.c.bf16 %v6096, %v6093
      %v6185 = vpack.c.bf16 %v6104, %v6101
      %v6186 = vpack.c.bf16 %v6112, %v6109
      %v6187 = vpack.c.bf16 %v6120, %v6117
      %v6188 = vpack.c.bf16 %v6128, %v6125
      %v6189 = vpack.c.bf16 %v6136, %v6133
      %v6190 = vpack.c.bf16 %v6144, %v6141
      %v6191 = vpack.c.bf16 %v6152, %v6149
      %v6192 = vpack.c.bf16 %v6160, %v6157
      %v6193 = vpack.c.bf16 %v6168, %v6165
      %v6194 = vpack.c.bf16 %v6176, %v6173
      %v6211 = vunpack.c.l.b16 %v6179
      %v6212 = vunpack.c.h.b16 %v6179
      %v6213 = vunpack.c.l.b16 %v6180
      %v6214 = vunpack.c.h.b16 %v6180
      %v6215 = vunpack.c.l.b16 %v6181
      %v6216 = vunpack.c.h.b16 %v6181
      %v6217 = vunpack.c.l.b16 %v6182
      %v6218 = vunpack.c.h.b16 %v6182
      %v6219 = vunpack.c.l.b16 %v6183
      %v6220 = vunpack.c.h.b16 %v6183
      %v6221 = vunpack.c.l.b16 %v6184
      %v6222 = vunpack.c.h.b16 %v6184
      %v6223 = vunpack.c.l.b16 %v6185
      %v6224 = vunpack.c.h.b16 %v6185
      %v6225 = vunpack.c.l.b16 %v6186
      %v6226 = vunpack.c.h.b16 %v6186
      %v6227 = vunpack.c.l.b16 %v6187
      %v6228 = vunpack.c.h.b16 %v6187
      %v6229 = vunpack.c.l.b16 %v6188
      %v6230 = vunpack.c.h.b16 %v6188
      %v6231 = vunpack.c.l.b16 %v6189
      %v6232 = vunpack.c.h.b16 %v6189
      %v6233 = vunpack.c.l.b16 %v6190
      %v6234 = vunpack.c.h.b16 %v6190
      %v6235 = vunpack.c.l.b16 %v6191
      %v6236 = vunpack.c.h.b16 %v6191
      %v6237 = vunpack.c.l.b16 %v6192
      %v6238 = vunpack.c.h.b16 %v6192
      %v6239 = vunpack.c.l.b16 %v6193
      %v6240 = vunpack.c.h.b16 %v6193
      %v6241 = vunpack.c.l.b16 %v6194
      %v6242 = vunpack.c.h.b16 %v6194
      %v6243 = vpack.c.b16 %v6211, %v6211
      %v6244 = vpack.c.b16 %v6212, %v6212
      %v6245 = vpack.c.b16 %v6213, %v6213
      %v6246 = vpack.c.b16 %v6214, %v6214
      %v6247 = vpack.c.b16 %v6215, %v6215
      %v6248 = vpack.c.b16 %v6216, %v6216
      %v6249 = vpack.c.b16 %v6217, %v6217
      %v6250 = vpack.c.b16 %v6218, %v6218
      %v6251 = vpack.c.b16 %v6219, %v6219
      %v6252 = vpack.c.b16 %v6220, %v6220
      %v6253 = vpack.c.b16 %v6221, %v6221
      %v6254 = vpack.c.b16 %v6222, %v6222
      %v6255 = vpack.c.b16 %v6223, %v6223
      %v6256 = vpack.c.b16 %v6224, %v6224
      %v6257 = vpack.c.b16 %v6225, %v6225
      %v6258 = vpack.c.b16 %v6226, %v6226
      %v6259 = vpack.c.b16 %v6227, %v6227
      %v6260 = vpack.c.b16 %v6228, %v6228
      %v6261 = vpack.c.b16 %v6229, %v6229
      %v6262 = vpack.c.b16 %v6230, %v6230
      %v6263 = vpack.c.b16 %v6231, %v6231
      %v6264 = vpack.c.b16 %v6232, %v6232
      %v6265 = vpack.c.b16 %v6233, %v6233
      %v6266 = vpack.c.b16 %v6234, %v6234
      %v6267 = vpack.c.b16 %v6235, %v6235
      %v6268 = vpack.c.b16 %v6236, %v6236
      %v6269 = vpack.c.b16 %v6237, %v6237
      %v6270 = vpack.c.b16 %v6238, %v6238
      %v6271 = vpack.c.b16 %v6239, %v6239
      %v6272 = vpack.c.b16 %v6240, %v6240
      %v6273 = vpack.c.b16 %v6241, %v6241
      %v6274 = vpack.c.b16 %v6242, %v6242
      %6307 = vst.msk [vmem:[%s251] sm:$0xf] %vm253, %v6243
      %6308 = vst.msk [vmem:[%s251 + $0x4] sm:$0xf] %vm253, %v6244
      %6309 = vst.msk [vmem:[%s251 + $0x8] sm:$0xf] %vm253, %v6245
      %6310 = vst.msk [vmem:[%s251 + $0xc] sm:$0xf] %vm253, %v6246
      %6311 = vst.msk [vmem:[%s251 + $0x10] sm:$0xf] %vm253, %v6247
      %6312 = vst.msk [vmem:[%s251 + $0x14] sm:$0xf] %vm253, %v6248
      %6313 = vst.msk [vmem:[%s251 + $0x18] sm:$0xf] %vm253, %v6249
      %6314 = vst.msk [vmem:[%s251 + $0x1c] sm:$0xf] %vm253, %v6250
      %6315 = vst.msk [vmem:[%s251 + $0x20] sm:$0xf] %vm253, %v6251
      %6316 = vst.msk [vmem:[%s251 + $0x24] sm:$0xf] %vm253, %v6252
      %6317 = vst.msk [vmem:[%s251 + $0x28] sm:$0xf] %vm253, %v6253
      %6318 = vst.msk [vmem:[%s251 + $0x2c] sm:$0xf] %vm253, %v6254
      %6319 = vst.msk [vmem:[%s251 + $0x30] sm:$0xf] %vm253, %v6255
      %6320 = vst.msk [vmem:[%s251 + $0x34] sm:$0xf] %vm253, %v6256
      %6321 = vst.msk [vmem:[%s251 + $0x38] sm:$0xf] %vm253, %v6257
      %6322 = vst.msk [vmem:[%s251 + $0x3c] sm:$0xf] %vm253, %v6258
      %6323 = vst.msk [vmem:[%s251 + $0x40] sm:$0xf] %vm253, %v6259
      %6324 = vst.msk [vmem:[%s251 + $0x44] sm:$0xf] %vm253, %v6260
      %6325 = vst.msk [vmem:[%s251 + $0x48] sm:$0xf] %vm253, %v6261
      %6326 = vst.msk [vmem:[%s251 + $0x4c] sm:$0xf] %vm253, %v6262
      %6327 = vst.msk [vmem:[%s251 + $0x50] sm:$0xf] %vm253, %v6263
      %6328 = vst.msk [vmem:[%s251 + $0x54] sm:$0xf] %vm253, %v6264
      %6329 = vst.msk [vmem:[%s251 + $0x58] sm:$0xf] %vm253, %v6265
      %6330 = vst.msk [vmem:[%s251 + $0x5c] sm:$0xf] %vm253, %v6266
      %6331 = vst.msk [vmem:[%s251 + $0x60] sm:$0xf] %vm253, %v6267
      %6332 = vst.msk [vmem:[%s251 + $0x64] sm:$0xf] %vm253, %v6268
      %6333 = vst.msk [vmem:[%s251 + $0x68] sm:$0xf] %vm253, %v6269
      %6334 = vst.msk [vmem:[%s251 + $0x6c] sm:$0xf] %vm253, %v6270
      %6335 = vst.msk [vmem:[%s251 + $0x70] sm:$0xf] %vm253, %v6271
      %6336 = vst.msk [vmem:[%s251 + $0x74] sm:$0xf] %vm253, %v6272
      %6337 = vst.msk [vmem:[%s251 + $0x78] sm:$0xf] %vm253, %v6273
      %6338 = vst.msk [vmem:[%s251 + $0x7c] sm:$0xf] %vm253, %v6274
      %p6339 = scmp.lt.s32.totalorder %s17, 1
      %s6340 = scalar_select %p6339, %s17, 1
      %s6341 = smul.addr %s6340, 32
      %s6342 = smul.addr %s6341, 4
      %s6343 = scalar_lea.vmem %s6, %s6342
      // Predicated region
      $region45: #{preact_basic_block_forward.1} parent=43 // pred_check
        %p6344 = pneg %p166
      $region46: #{preact_basic_block_forward.1} parent=43 // pred_check_branch
        %6346 = sbr.rel (%p6344) target = $region48
      $region47: #{preact_basic_block_forward.1} parent=43 // pred_region
        _
      $region48: #{preact_basic_block_forward.1} parent=43 // pred_fallthru
        _
    $region44: #{preact_basic_block_forward.1} parent=5 // pred_fallthru
      _
    %p6347 = scmp.le.s32.totalorder 2, %s12
    // Predicated region
    $region49: #{preact_basic_block_forward.1} parent=5 // pred_check
      %p6348 = pneg %p6347
    $region50: #{preact_basic_block_forward.1} parent=5 // pred_check_branch
      %6350 = sbr.rel (%p6348) target = $region52
    $region51: #{preact_basic_block_forward.1} parent=5 // pred_region
      %s6351 = ssub.s32 %s12, 2
      // Predicated region
      $region53: #{preact_basic_block_forward.1} parent=51 // pred_check
        %p6352 = pneg %p172
      $region54: #{preact_basic_block_forward.1} parent=51 // pred_check_branch
        %6354 = sbr.rel (%p6352) target = $region56
      $region55: #{preact_basic_block_forward.1} parent=51 // pred_region
        %p6355 = scmp.lt.s32.totalorder %s18, 1
        %s6356 = scalar_select %p6355, %s18, 1
        %s6357 = smul.addr %s6356, 32
        %s6358 = smul.addr %s6357, 4
        %s6359 = scalar_lea.vmem %s6, %s6358
      $region56: #{preact_basic_block_forward.1} parent=51 // pred_fallthru
        _
    $region52: #{preact_basic_block_forward.1} parent=5 // pred_fallthru
      _
  $region6: #{preact_basic_block_forward.1} parent=0 // loop_footer
    %s16 = sadd.s32 1, %s12
  $region7: #{preact_basic_block_forward.1} parent=0 // loop_footer_branch
    %11 = sbr.rel target = $region3
  $region8: #{preact_basic_block_forward.1} parent=0 // loop_exit
    _

</llo_original>
